<compile_context>
chip_gen: v6e
topology: v6e:2x2x1
jax: 0.10.0
libtpu: 0.0.40
codegen_flags: <defaults>
</compile_context>

<pallas_src>
import functools

import numpy as np
import jax
import jax.numpy as jnp
from jax import lax
from jax.experimental import pallas as pl
from jax.experimental.pallas import tpu as pltpu


# ---------------------------------------------------------------------------
# Banded ("Toeplitz") weight construction: folds the kw taps, Cin, and the W
# zero-padding into the matmul contraction.
#   B[kd, kh, wx*Cin + ci, w*Cout + co] = w_torch[co, ci, kd, kh, wx - w + 1]
#   (nonzero only for |wx - w| <= 1 and 0 <= wx < W: band clipped at the edges,
#    so the kernel input needs no width padding.)
# ---------------------------------------------------------------------------
def build_banded_weights(w, W):
    # w: (Cout, Cin, 3, 3, 3) -- PyTorch Conv3d weight layout (bias=False)
    Cout, Cin = int(w.shape[0]), int(w.shape[1])
    wt = jnp.transpose(w, (2, 3, 4, 1, 0)).astype(jnp.float32)   # (kd, kh, kw, Cin, Cout)
    sel = np.zeros((3, W, W), np.float32)                        # sel[kw, wx, w]
    for kw in range(3):
        for wv in range(W):
            wx = wv + kw - 1
            if 0 <= wx < W:
                sel[kw, wx, wv] = 1.0
    b = jnp.einsum("kxw,dhkio->dhxiwo", jnp.asarray(sel), wt)    # (3,3,W,Cin,W,Cout)
    return b.reshape(3, 3, W * Cin, W * Cout)


# ---------------------------------------------------------------------------
# Shared banded-conv inner loop: for each output depth d, 9 MXU matmuls of
# (H, W*Cin) @ (W*Cin, W*Cout) with bf16 operands and f32 accumulation, plus
# fused per-batch BN sum / sum-of-squares accumulation.
# ---------------------------------------------------------------------------
def _banded_conv_loop(load_window, store_plane, bw_ref, s_ref, q_ref, *, D, H, WCo):
    def body(d, carry):
        s, q = carry
        acc = jnp.zeros((H, WCo), jnp.float32)
        for kd in range(3):
            for kh in range(3):
                acc += jnp.dot(load_window(d + kd, kh), bw_ref[kd, kh],
                               preferred_element_type=jnp.float32)
        store_plane(d, acc)
        s = s + jnp.sum(acc, axis=0, keepdims=True)
        q = q + jnp.sum(acc * acc, axis=0, keepdims=True)
        return s, q

    zero = jnp.zeros((1, WCo), jnp.float32)
    s, q = lax.fori_loop(0, D, body, (zero, zero))
    s_ref[0] = s
    q_ref[0] = q


# ---------------------------------------------------------------------------
# Conv1: banded 3x3x3 conv + fused per-batch BN statistics
# ---------------------------------------------------------------------------
def _conv1_kernel(xp_ref, bw_ref, y_ref, s_ref, q_ref, *, D, H):
    # xp_ref: (1, D+2, H+2, W*Cin) bf16 (D/H zero padded, W folded into the band)
    # bw_ref: (3, 3, W*Cin, W*Cout) bf16 banded weights (resident across grid)
    # y_ref : (1, D, H, W*Cout) f32 raw conv output (lane-dense)
    WCo = y_ref.shape[-1]

    def load_window(dz, kh):
        return xp_ref[0, dz, kh:kh + H, :]           # (H, W*Cin) bf16

    def store_plane(d, acc):
        y_ref[0, d] = acc

    _banded_conv_loop(load_window, store_plane, bw_ref, s_ref, q_ref,
                      D=D, H=H, WCo=WCo)


def conv1_call(xp, bw, *, N, D, H, WCin, WCout):
    kern = functools.partial(_conv1_kernel, D=D, H=H)
    return pl.pallas_call(
        kern,
        out_shape=(
            jax.ShapeDtypeStruct((N, D, H, WCout), jnp.float32),
            jax.ShapeDtypeStruct((N, 1, WCout), jnp.float32),
            jax.ShapeDtypeStruct((N, 1, WCout), jnp.float32),
        ),
        grid=(N,),
        in_specs=[
            pl.BlockSpec((1, D + 2, H + 2, WCin), lambda n: (n, 0, 0, 0)),
            pl.BlockSpec((3, 3, WCin, WCout), lambda n: (0, 0, 0, 0)),
        ],
        out_specs=(
            pl.BlockSpec((1, D, H, WCout), lambda n: (n, 0, 0, 0)),
            pl.BlockSpec((1, 1, WCout), lambda n: (n, 0, 0)),
            pl.BlockSpec((1, 1, WCout), lambda n: (n, 0, 0)),
        ),
        compiler_params=pltpu.CompilerParams(dimension_semantics=("parallel",)),
    )(xp, bw)


# ---------------------------------------------------------------------------
# Conv2 with BN1 + PReLU1 fused into the input path (+ fused BN2 statistics).
# ---------------------------------------------------------------------------
def _conv2_kernel(y1_ref, bw_ref, sc_ref, sh_ref, a_ref,
                  y_ref, s_ref, q_ref, act_ref, *, D, H):
    # y1_ref : (1, D, H, W*Cmid) f32 raw conv1 output
    # bw_ref : (3, 3, W*Cmid, W*Cout) bf16 banded weights
    # sc/sh  : (1, W*Cmid) f32 folded BN1 scale / shift (merged (W,C) layout)
    # a_ref  : (1, 1) f32 PReLU1 alpha
    # act_ref: VMEM scratch (D+2, H+2, W*Cmid) f32: BN1+PReLU1 applied, with a
    #          zero D/H padding ring (post-activation zeros).
    WCm = y1_ref.shape[-1]
    WCo = y_ref.shape[-1]
    Dp, Hp = D + 2, H + 2

    sc = sc_ref[...]
    sh = sh_ref[...]
    alpha = a_ref[0, 0]

    # Depth-padding planes (only the border is zeroed; interior written below).
    act_ref[0] = jnp.zeros((Hp, WCm), jnp.float32)
    act_ref[Dp - 1] = jnp.zeros((Hp, WCm), jnp.float32)
    zrow = jnp.zeros((1, WCm), jnp.float32)

    def pre(dz, c):
        v = y1_ref[0, dz] * sc + sh                  # BN1 affine
        v = jnp.where(v >= 0.0, v, alpha * v)        # PReLU1
        act_ref[dz + 1, 0:1, :] = zrow               # H-padding rows
        act_ref[dz + 1, 1:H + 1, :] = v
        act_ref[dz + 1, H + 1:H + 2, :] = zrow
        return c

    lax.fori_loop(0, D, pre, 0)

    def load_window(dz, kh):
        return act_ref[dz, kh:kh + H, :].astype(jnp.bfloat16)    # (H, W*Cmid) bf16

    def store_plane(d, acc):
        y_ref[0, d] = acc

    _banded_conv_loop(load_window, store_plane, bw_ref, s_ref, q_ref,
                      D=D, H=H, WCo=WCo)


def conv2_call(y1, bw, sc, sh, alpha, *, N, D, H, WCm, WCout):
    kern = functools.partial(_conv2_kernel, D=D, H=H)
    return pl.pallas_call(
        kern,
        out_shape=(
            jax.ShapeDtypeStruct((N, D, H, WCout), jnp.float32),
            jax.ShapeDtypeStruct((N, 1, WCout), jnp.float32),
            jax.ShapeDtypeStruct((N, 1, WCout), jnp.float32),
        ),
        grid=(N,),
        in_specs=[
            pl.BlockSpec((1, D, H, WCm), lambda n: (n, 0, 0, 0)),
            pl.BlockSpec((3, 3, WCm, WCout), lambda n: (0, 0, 0, 0)),
            pl.BlockSpec((1, WCm), lambda n: (0, 0)),
            pl.BlockSpec((1, WCm), lambda n: (0, 0)),
            pl.BlockSpec((1, 1), lambda n: (0, 0)),
        ],
        out_specs=(
            pl.BlockSpec((1, D, H, WCout), lambda n: (n, 0, 0, 0)),
            pl.BlockSpec((1, 1, WCout), lambda n: (n, 0, 0)),
            pl.BlockSpec((1, 1, WCout), lambda n: (n, 0, 0)),
        ),
        scratch_shapes=[pltpu.VMEM((D + 2, H + 2, WCm), jnp.float32)],
        compiler_params=pltpu.CompilerParams(dimension_semantics=("parallel",)),
    )(y1, bw, sc, sh, alpha)


# ---------------------------------------------------------------------------
# BN statistics finalization (tiny glue) -> per-channel scale/shift, broadcast
# to the merged (W*C) lane layout.
# ---------------------------------------------------------------------------
def fold_bn(s, q, gamma, beta, count, *, W, C, eps=1e-5):
    s = s.reshape(-1, W, C).sum(axis=(0, 1))
    q = q.reshape(-1, W, C).sum(axis=(0, 1))
    mean = s / count
    var = q / count - mean * mean        # biased variance (PyTorch training-mode BN)
    inv = gamma.astype(jnp.float32) * jax.lax.rsqrt(var + eps)
    scale, shift = inv, beta.astype(jnp.float32) - mean * inv
    scale_m = jnp.tile(scale[None, :], (W, 1)).reshape(1, W * C)
    shift_m = jnp.tile(shift[None, :], (W, 1)).reshape(1, W * C)
    return scale_m, shift_m


# ---------------------------------------------------------------------------
# Final BN2 + PReLU2: one big-block elementwise pass (grid = (N,)).
# ---------------------------------------------------------------------------
def _bn_prelu_kernel(x_ref, sc_ref, sh_ref, a_ref, o_ref, *, D):
    sc = sc_ref[...]
    sh = sh_ref[...]
    alpha = a_ref[0, 0]

    def body(d, c):
        v = x_ref[0, d] * sc + sh
        o_ref[0, d] = jnp.where(v >= 0.0, v, alpha * v)
        return c

    lax.fori_loop(0, D, body, 0)


def bn_prelu_call(y, sc, sh, alpha, *, N, D, H, WC):
    kern = functools.partial(_bn_prelu_kernel, D=D)
    return pl.pallas_call(
        kern,
        out_shape=jax.ShapeDtypeStruct((N, D, H, WC), jnp.float32),
        grid=(N,),
        in_specs=[
            pl.BlockSpec((1, D, H, WC), lambda n: (n, 0, 0, 0)),
            pl.BlockSpec((1, WC), lambda n: (0, 0)),
            pl.BlockSpec((1, WC), lambda n: (0, 0)),
            pl.BlockSpec((1, 1), lambda n: (0, 0)),
        ],
        out_specs=pl.BlockSpec((1, D, H, WC), lambda n: (n, 0, 0, 0)),
        compiler_params=pltpu.CompilerParams(dimension_semantics=("parallel",)),
    )(y, sc, sh, alpha)


# ---------------------------------------------------------------------------
# Full ConvBlock forward (PyTorch NCDHW public I/O)
# ---------------------------------------------------------------------------
def convblock_forward(x_ncdhw, params, eps=1e-5):
    N, Cin, D, H, W = x_ncdhw.shape
    Cmid = params["w1"].shape[0]
    Cout = params["w2"].shape[0]
    count = N * D * H * W

    # Boundary glue: NCDHW -> channels-last, merge (W, C) minor dims,
    # zero-pad D and H only (W padding is folded into the banded weights).
    x = jnp.transpose(x_ncdhw, (0, 2, 3, 4, 1)).astype(jnp.float32)
    x_m = x.reshape(N, D, H, W * Cin)
    xp = jnp.pad(x_m, ((0, 0), (1, 1), (1, 1), (0, 0))).astype(jnp.bfloat16)

    b1 = build_banded_weights(params["w1"], W).astype(jnp.bfloat16)
    b2 = build_banded_weights(params["w2"], W).astype(jnp.bfloat16)
    a1 = jnp.reshape(params["alpha1"].astype(jnp.float32), (1, 1))
    a2 = jnp.reshape(params["alpha2"].astype(jnp.float32), (1, 1))

    # conv1 + fused BN1 batch statistics
    y1, s1, q1 = conv1_call(xp, b1, N=N, D=D, H=H, WCin=W * Cin, WCout=W * Cmid)
    sc1, sh1 = fold_bn(s1, q1, params["gamma1"], params["beta1"], count,
                       W=W, C=Cmid, eps=eps)

    # conv2 with BN1 + PReLU1 fused into its input path, + fused BN2 statistics
    y2, s2, q2 = conv2_call(y1, b2, sc1, sh1, a1,
                            N=N, D=D, H=H, WCm=W * Cmid, WCout=W * Cout)
    sc2, sh2 = fold_bn(s2, q2, params["gamma2"], params["beta2"], count,
                       W=W, C=Cout, eps=eps)

    # final BN2 + PReLU2
    out_m = bn_prelu_call(y2, sc2, sh2, a2, N=N, D=D, H=H, WC=W * Cout)

    # boundary glue: un-merge lanes and return NCDHW
    out = out_m.reshape(N, D, H, W, Cout)
    return jnp.transpose(out, (0, 4, 1, 2, 3))


def init_params(key, in_channels, out_channels, mid_channels=None):
    if not mid_channels:
        mid_channels = out_channels
    k1, k2 = jax.random.split(key)
    b1 = 1.0 / float((in_channels * 27) ** 0.5)
    b2 = 1.0 / float((mid_channels * 27) ** 0.5)
    return {
        "w1": jax.random.uniform(k1, (mid_channels, in_channels, 3, 3, 3), jnp.float32, -b1, b1),
        "gamma1": jnp.ones((mid_channels,), jnp.float32),
        "beta1": jnp.zeros((mid_channels,), jnp.float32),
        "alpha1": jnp.float32(0.25),          # nn.PReLU() default (single shared param)
        "w2": jax.random.uniform(k2, (out_channels, mid_channels, 3, 3, 3), jnp.float32, -b2, b2),
        "gamma2": jnp.ones((out_channels,), jnp.float32),
        "beta2": jnp.zeros((out_channels,), jnp.float32),
        "alpha2": jnp.float32(0.25),
    }


if __name__ == "__main__":
    key = jax.random.PRNGKey(0)
    kx, kp = jax.random.split(key)
    in_channels, out_channels = 4, 8
    D = H = W = 16
    # NCDHW input (PyTorch convention): batch=2, channels=4, 16x16x16 volume
    x = jax.random.normal(kx, (2, in_channels, D, H, W), jnp.float32)
    params = init_params(kp, in_channels, out_channels)

    fwd = jax.jit(convblock_forward)
    y = fwd(x, params)
    jax.block_until_ready(y)
    assert y.shape == (2, out_channels, D, H, W), y.shape
    print("KERNEL_OK")
</pallas_src>

<mosaic_0001>
module attributes {stable_mosaic.version = 11 : i64} {
  func.func @_conv1_kernel(%arg0: i32, %arg1: memref<1x18x18x64xbf16, #tpu.memory_space<vmem>>, %arg2: memref<3x3x64x128xbf16, #tpu.memory_space<vmem>>, %arg3: memref<1x16x16x128xf32, #tpu.memory_space<vmem>>, %arg4: memref<1x1x128xf32, #tpu.memory_space<vmem>>, %arg5: memref<1x1x128xf32, #tpu.memory_space<vmem>>) attributes {dimension_semantics = [#tpu.dimension_semantics<parallel>], iteration_bounds = array<i64: 2>, scalar_prefetch = 0 : i64, scratch_operands = 0 : i64, tpu.core_type = #tpu.core_type<tc>, window_params = [{transform_indices = @transform_0, window_bounds = array<i64: 1, 18, 18, 64>}, {pipeline_mode = #tpu.pipeline_mode<synchronous>, transform_indices = @transform_1, window_bounds = array<i64: 3, 3, 64, 128>}, {transform_indices = @transform_2, window_bounds = array<i64: 1, 16, 16, 128>}, {transform_indices = @transform_3, window_bounds = array<i64: 1, 1, 128>}, {transform_indices = @transform_4, window_bounds = array<i64: 1, 1, 128>}]} {
    %cst = arith.constant 0.000000e+00 : f32
    %0 = vector.broadcast %cst : f32 to vector<1x128xf32>
    %c0_i32 = arith.constant 0 : i32
    %c16_i32 = arith.constant 16 : i32
    %1 = arith.addi %c0_i32, %c16_i32 : i32
    %c1_i32 = arith.constant 1 : i32
    %2:2 = scf.for %arg6 = %c0_i32 to %1 step %c1_i32 iter_args(%arg7 = %0, %arg8 = %0) -> (vector<1x128xf32>, vector<1x128xf32>)  : i32 {
      %cst_6 = arith.constant 0.000000e+00 : f32
      %9 = vector.broadcast %cst_6 : f32 to vector<16x128xf32>
      %c0_i32_7 = arith.constant 0 : i32
      %10 = arith.addi %arg6, %c0_i32_7 : i32
      %c0_8 = arith.constant 0 : index
      %11 = arith.index_cast %10 : i32 to index
      %c0_9 = arith.constant 0 : index
      %c0_10 = arith.constant 0 : index
      %12 = vector.load %arg1[%c0_8, %11, %c0_9, %c0_10] : memref<1x18x18x64xbf16, #tpu.memory_space<vmem>>, vector<1x1x16x64xbf16>
      %13 = vector.shape_cast %12 : vector<1x1x16x64xbf16> to vector<16x64xbf16>
      %c0_11 = arith.constant 0 : index
      %c0_12 = arith.constant 0 : index
      %c0_13 = arith.constant 0 : index
      %c0_14 = arith.constant 0 : index
      %14 = vector.load %arg2[%c0_11, %c0_12, %c0_13, %c0_14] : memref<3x3x64x128xbf16, #tpu.memory_space<vmem>>, vector<1x1x64x128xbf16>
      %15 = vector.shape_cast %14 : vector<1x1x64x128xbf16> to vector<64x128xbf16>
      %cst_15 = arith.constant dense<0.000000e+00> : vector<16x128xf32>
      %16 = tpu.matmul %13, %15, %cst_15 {dimension_numbers = #tpu.dot_dimension_numbers<[1], [0], [0], [1], [0, 0, 1, 1], [], []>} : vector<16x64xbf16>, vector<64x128xbf16>, vector<16x128xf32> -> vector<16x128xf32>
      %17 = arith.addf %9, %16 : vector<16x128xf32>
      %c0_i32_16 = arith.constant 0 : i32
      %18 = arith.addi %arg6, %c0_i32_16 : i32
      %c0_17 = arith.constant 0 : index
      %19 = arith.index_cast %18 : i32 to index
      %c1 = arith.constant 1 : index
      %c0_18 = arith.constant 0 : index
      %20 = vector.load %arg1[%c0_17, %19, %c1, %c0_18] : memref<1x18x18x64xbf16, #tpu.memory_space<vmem>>, vector<1x1x16x64xbf16>
      %21 = vector.shape_cast %20 : vector<1x1x16x64xbf16> to vector<16x64xbf16>
      %c0_19 = arith.constant 0 : index
      %c1_20 = arith.constant 1 : index
      %c0_21 = arith.constant 0 : index
      %c0_22 = arith.constant 0 : index
      %22 = vector.load %arg2[%c0_19, %c1_20, %c0_21, %c0_22] : memref<3x3x64x128xbf16, #tpu.memory_space<vmem>>, vector<1x1x64x128xbf16>
      %23 = vector.shape_cast %22 : vector<1x1x64x128xbf16> to vector<64x128xbf16>
      %cst_23 = arith.constant dense<0.000000e+00> : vector<16x128xf32>
      %24 = tpu.matmul %21, %23, %cst_23 {dimension_numbers = #tpu.dot_dimension_numbers<[1], [0], [0], [1], [0, 0, 1, 1], [], []>} : vector<16x64xbf16>, vector<64x128xbf16>, vector<16x128xf32> -> vector<16x128xf32>
      %25 = arith.addf %17, %24 : vector<16x128xf32>
      %c0_i32_24 = arith.constant 0 : i32
      %26 = arith.addi %arg6, %c0_i32_24 : i32
      %c0_25 = arith.constant 0 : index
      %27 = arith.index_cast %26 : i32 to index
      %c2 = arith.constant 2 : index
      %c0_26 = arith.constant 0 : index
      %28 = vector.load %arg1[%c0_25, %27, %c2, %c0_26] : memref<1x18x18x64xbf16, #tpu.memory_space<vmem>>, vector<1x1x16x64xbf16>
      %29 = vector.shape_cast %28 : vector<1x1x16x64xbf16> to vector<16x64xbf16>
      %c0_27 = arith.constant 0 : index
      %c2_28 = arith.constant 2 : index
      %c0_29 = arith.constant 0 : index
      %c0_30 = arith.constant 0 : index
      %30 = vector.load %arg2[%c0_27, %c2_28, %c0_29, %c0_30] : memref<3x3x64x128xbf16, #tpu.memory_space<vmem>>, vector<1x1x64x128xbf16>
      %31 = vector.shape_cast %30 : vector<1x1x64x128xbf16> to vector<64x128xbf16>
      %cst_31 = arith.constant dense<0.000000e+00> : vector<16x128xf32>
      %32 = tpu.matmul %29, %31, %cst_31 {dimension_numbers = #tpu.dot_dimension_numbers<[1], [0], [0], [1], [0, 0, 1, 1], [], []>} : vector<16x64xbf16>, vector<64x128xbf16>, vector<16x128xf32> -> vector<16x128xf32>
      %33 = arith.addf %25, %32 : vector<16x128xf32>
      %c1_i32_32 = arith.constant 1 : i32
      %34 = arith.addi %arg6, %c1_i32_32 : i32
      %c0_33 = arith.constant 0 : index
      %35 = arith.index_cast %34 : i32 to index
      %c0_34 = arith.constant 0 : index
      %c0_35 = arith.constant 0 : index
      %36 = vector.load %arg1[%c0_33, %35, %c0_34, %c0_35] : memref<1x18x18x64xbf16, #tpu.memory_space<vmem>>, vector<1x1x16x64xbf16>
      %37 = vector.shape_cast %36 : vector<1x1x16x64xbf16> to vector<16x64xbf16>
      %c1_36 = arith.constant 1 : index
      %c0_37 = arith.constant 0 : index
      %c0_38 = arith.constant 0 : index
      %c0_39 = arith.constant 0 : index
      %38 = vector.load %arg2[%c1_36, %c0_37, %c0_38, %c0_39] : memref<3x3x64x128xbf16, #tpu.memory_space<vmem>>, vector<1x1x64x128xbf16>
      %39 = vector.shape_cast %38 : vector<1x1x64x128xbf16> to vector<64x128xbf16>
      %cst_40 = arith.constant dense<0.000000e+00> : vector<16x128xf32>
      %40 = tpu.matmul %37, %39, %cst_40 {dimension_numbers = #tpu.dot_dimension_numbers<[1], [0], [0], [1], [0, 0, 1, 1], [], []>} : vector<16x64xbf16>, vector<64x128xbf16>, vector<16x128xf32> -> vector<16x128xf32>
      %41 = arith.addf %33, %40 : vector<16x128xf32>
      %c1_i32_41 = arith.constant 1 : i32
      %42 = arith.addi %arg6, %c1_i32_41 : i32
      %c0_42 = arith.constant 0 : index
      %43 = arith.index_cast %42 : i32 to index
      %c1_43 = arith.constant 1 : index
      %c0_44 = arith.constant 0 : index
      %44 = vector.load %arg1[%c0_42, %43, %c1_43, %c0_44] : memref<1x18x18x64xbf16, #tpu.memory_space<vmem>>, vector<1x1x16x64xbf16>
      %45 = vector.shape_cast %44 : vector<1x1x16x64xbf16> to vector<16x64xbf16>
      %c1_45 = arith.constant 1 : index
      %c1_46 = arith.constant 1 : index
      %c0_47 = arith.constant 0 : index
      %c0_48 = arith.constant 0 : index
      %46 = vector.load %arg2[%c1_45, %c1_46, %c0_47, %c0_48] : memref<3x3x64x128xbf16, #tpu.memory_space<vmem>>, vector<1x1x64x128xbf16>
      %47 = vector.shape_cast %46 : vector<1x1x64x128xbf16> to vector<64x128xbf16>
      %cst_49 = arith.constant dense<0.000000e+00> : vector<16x128xf32>
      %48 = tpu.matmul %45, %47, %cst_49 {dimension_numbers = #tpu.dot_dimension_numbers<[1], [0], [0], [1], [0, 0, 1, 1], [], []>} : vector<16x64xbf16>, vector<64x128xbf16>, vector<16x128xf32> -> vector<16x128xf32>
      %49 = arith.addf %41, %48 : vector<16x128xf32>
      %c1_i32_50 = arith.constant 1 : i32
      %50 = arith.addi %arg6, %c1_i32_50 : i32
      %c0_51 = arith.constant 0 : index
      %51 = arith.index_cast %50 : i32 to index
      %c2_52 = arith.constant 2 : index
      %c0_53 = arith.constant 0 : index
      %52 = vector.load %arg1[%c0_51, %51, %c2_52, %c0_53] : memref<1x18x18x64xbf16, #tpu.memory_space<vmem>>, vector<1x1x16x64xbf16>
      %53 = vector.shape_cast %52 : vector<1x1x16x64xbf16> to vector<16x64xbf16>
      %c1_54 = arith.constant 1 : index
      %c2_55 = arith.constant 2 : index
      %c0_56 = arith.constant 0 : index
      %c0_57 = arith.constant 0 : index
      %54 = vector.load %arg2[%c1_54, %c2_55, %c0_56, %c0_57] : memref<3x3x64x128xbf16, #tpu.memory_space<vmem>>, vector<1x1x64x128xbf16>
      %55 = vector.shape_cast %54 : vector<1x1x64x128xbf16> to vector<64x128xbf16>
      %cst_58 = arith.constant dense<0.000000e+00> : vector<16x128xf32>
      %56 = tpu.matmul %53, %55, %cst_58 {dimension_numbers = #tpu.dot_dimension_numbers<[1], [0], [0], [1], [0, 0, 1, 1], [], []>} : vector<16x64xbf16>, vector<64x128xbf16>, vector<16x128xf32> -> vector<16x128xf32>
      %57 = arith.addf %49, %56 : vector<16x128xf32>
      %c2_i32 = arith.constant 2 : i32
      %58 = arith.addi %arg6, %c2_i32 : i32
      %c0_59 = arith.constant 0 : index
      %59 = arith.index_cast %58 : i32 to index
      %c0_60 = arith.constant 0 : index
      %c0_61 = arith.constant 0 : index
      %60 = vector.load %arg1[%c0_59, %59, %c0_60, %c0_61] : memref<1x18x18x64xbf16, #tpu.memory_space<vmem>>, vector<1x1x16x64xbf16>
      %61 = vector.shape_cast %60 : vector<1x1x16x64xbf16> to vector<16x64xbf16>
      %c2_62 = arith.constant 2 : index
      %c0_63 = arith.constant 0 : index
      %c0_64 = arith.constant 0 : index
      %c0_65 = arith.constant 0 : index
      %62 = vector.load %arg2[%c2_62, %c0_63, %c0_64, %c0_65] : memref<3x3x64x128xbf16, #tpu.memory_space<vmem>>, vector<1x1x64x128xbf16>
      %63 = vector.shape_cast %62 : vector<1x1x64x128xbf16> to vector<64x128xbf16>
      %cst_66 = arith.constant dense<0.000000e+00> : vector<16x128xf32>
      %64 = tpu.matmul %61, %63, %cst_66 {dimension_numbers = #tpu.dot_dimension_numbers<[1], [0], [0], [1], [0, 0, 1, 1], [], []>} : vector<16x64xbf16>, vector<64x128xbf16>, vector<16x128xf32> -> vector<16x128xf32>
      %65 = arith.addf %57, %64 : vector<16x128xf32>
      %c2_i32_67 = arith.constant 2 : i32
      %66 = arith.addi %arg6, %c2_i32_67 : i32
      %c0_68 = arith.constant 0 : index
      %67 = arith.index_cast %66 : i32 to index
      %c1_69 = arith.constant 1 : index
      %c0_70 = arith.constant 0 : index
      %68 = vector.load %arg1[%c0_68, %67, %c1_69, %c0_70] : memref<1x18x18x64xbf16, #tpu.memory_space<vmem>>, vector<1x1x16x64xbf16>
      %69 = vector.shape_cast %68 : vector<1x1x16x64xbf16> to vector<16x64xbf16>
      %c2_71 = arith.constant 2 : index
      %c1_72 = arith.constant 1 : index
      %c0_73 = arith.constant 0 : index
      %c0_74 = arith.constant 0 : index
      %70 = vector.load %arg2[%c2_71, %c1_72, %c0_73, %c0_74] : memref<3x3x64x128xbf16, #tpu.memory_space<vmem>>, vector<1x1x64x128xbf16>
      %71 = vector.shape_cast %70 : vector<1x1x64x128xbf16> to vector<64x128xbf16>
      %cst_75 = arith.constant dense<0.000000e+00> : vector<16x128xf32>
      %72 = tpu.matmul %69, %71, %cst_75 {dimension_numbers = #tpu.dot_dimension_numbers<[1], [0], [0], [1], [0, 0, 1, 1], [], []>} : vector<16x64xbf16>, vector<64x128xbf16>, vector<16x128xf32> -> vector<16x128xf32>
      %73 = arith.addf %65, %72 : vector<16x128xf32>
      %c2_i32_76 = arith.constant 2 : i32
      %74 = arith.addi %arg6, %c2_i32_76 : i32
      %c0_77 = arith.constant 0 : index
      %75 = arith.index_cast %74 : i32 to index
      %c2_78 = arith.constant 2 : index
      %c0_79 = arith.constant 0 : index
      %76 = vector.load %arg1[%c0_77, %75, %c2_78, %c0_79] : memref<1x18x18x64xbf16, #tpu.memory_space<vmem>>, vector<1x1x16x64xbf16>
      %77 = vector.shape_cast %76 : vector<1x1x16x64xbf16> to vector<16x64xbf16>
      %c2_80 = arith.constant 2 : index
      %c2_81 = arith.constant 2 : index
      %c0_82 = arith.constant 0 : index
      %c0_83 = arith.constant 0 : index
      %78 = vector.load %arg2[%c2_80, %c2_81, %c0_82, %c0_83] : memref<3x3x64x128xbf16, #tpu.memory_space<vmem>>, vector<1x1x64x128xbf16>
      %79 = vector.shape_cast %78 : vector<1x1x64x128xbf16> to vector<64x128xbf16>
      %cst_84 = arith.constant dense<0.000000e+00> : vector<16x128xf32>
      %80 = tpu.matmul %77, %79, %cst_84 {dimension_numbers = #tpu.dot_dimension_numbers<[1], [0], [0], [1], [0, 0, 1, 1], [], []>} : vector<16x64xbf16>, vector<64x128xbf16>, vector<16x128xf32> -> vector<16x128xf32>
      %81 = arith.addf %73, %80 : vector<16x128xf32>
      %c0_85 = arith.constant 0 : index
      %82 = arith.index_cast %arg6 : i32 to index
      %c0_86 = arith.constant 0 : index
      %c0_87 = arith.constant 0 : index
      %83 = vector.load %arg3[%c0_85, %82, %c0_86, %c0_87] : memref<1x16x16x128xf32, #tpu.memory_space<vmem>>, vector<1x1x16x128xf32>
      %84 = vector.shape_cast %83 : vector<1x1x16x128xf32> to vector<16x128xf32>
      %85 = vector.shape_cast %81 : vector<16x128xf32> to vector<1x1x16x128xf32>
      tpu.vector_store %arg3[%c0_85, %82, %c0_86, %c0_87], %85 {strides = array<i32>} : memref<1x16x16x128xf32, #tpu.memory_space<vmem>>, vector<1x1x16x128xf32>,
      %cst_88 = arith.constant dense<0.000000e+00> : vector<128xf32>
      %86 = vector.multi_reduction <add>, %81, %cst_88 [0] : vector<16x128xf32> to vector<128xf32>
      %87 = vector.shape_cast %86 : vector<128xf32> to vector<1x128xf32>
      %88 = arith.addf %arg7, %87 : vector<1x128xf32>
      %89 = arith.mulf %81, %81 : vector<16x128xf32>
      %cst_89 = arith.constant dense<0.000000e+00> : vector<128xf32>
      %90 = vector.multi_reduction <add>, %89, %cst_89 [0] : vector<16x128xf32> to vector<128xf32>
      %91 = vector.shape_cast %90 : vector<128xf32> to vector<1x128xf32>
      %92 = arith.addf %arg8, %91 : vector<1x128xf32>
      scf.yield %88, %92 : vector<1x128xf32>, vector<1x128xf32>
    }
    %c16_i32_0 = arith.constant 16 : i32
    %c0 = arith.constant 0 : index
    %c0_1 = arith.constant 0 : index
    %c0_2 = arith.constant 0 : index
    %3 = vector.load %arg4[%c0, %c0_1, %c0_2] : memref<1x1x128xf32, #tpu.memory_space<vmem>>, vector<1x1x128xf32>
    %4 = vector.shape_cast %3 : vector<1x1x128xf32> to vector<1x128xf32>
    %5 = vector.shape_cast %2#0 : vector<1x128xf32> to vector<1x1x128xf32>
    tpu.vector_store %arg4[%c0, %c0_1, %c0_2], %5 {strides = array<i32>} : memref<1x1x128xf32, #tpu.memory_space<vmem>>, vector<1x1x128xf32>,
    %c0_3 = arith.constant 0 : index
    %c0_4 = arith.constant 0 : index
    %c0_5 = arith.constant 0 : index
    %6 = vector.load %arg5[%c0_3, %c0_4, %c0_5] : memref<1x1x128xf32, #tpu.memory_space<vmem>>, vector<1x1x128xf32>
    %7 = vector.shape_cast %6 : vector<1x1x128xf32> to vector<1x128xf32>
    %8 = vector.shape_cast %2#1 : vector<1x128xf32> to vector<1x1x128xf32>
    tpu.vector_store %arg5[%c0_3, %c0_4, %c0_5], %8 {strides = array<i32>} : memref<1x1x128xf32, #tpu.memory_space<vmem>>, vector<1x1x128xf32>,
    return
  }
  func.func @transform_0(%arg0: i32) -> (i32, i32, i32, i32) {
    %c0_i32 = arith.constant 0 : i32
    %c0_i32_0 = arith.constant 0 : i32
    %c0_i32_1 = arith.constant 0 : i32
    %c0_i32_2 = arith.constant 0 : i32
    return %arg0, %c0_i32, %c0_i32_0, %c0_i32_1 : i32, i32, i32, i32
  }
  func.func @transform_1(%arg0: i32) -> (i32, i32, i32, i32) {
    %c0_i32 = arith.constant 0 : i32
    %c0_i32_0 = arith.constant 0 : i32
    %c0_i32_1 = arith.constant 0 : i32
    %c0_i32_2 = arith.constant 0 : i32
    %c0_i32_3 = arith.constant 0 : i32
    return %c0_i32, %c0_i32_0, %c0_i32_1, %c0_i32_2 : i32, i32, i32, i32
  }
  func.func @transform_2(%arg0: i32) -> (i32, i32, i32, i32) {
    %c0_i32 = arith.constant 0 : i32
    %c0_i32_0 = arith.constant 0 : i32
    %c0_i32_1 = arith.constant 0 : i32
    %c0_i32_2 = arith.constant 0 : i32
    return %arg0, %c0_i32, %c0_i32_0, %c0_i32_1 : i32, i32, i32, i32
  }
  func.func @transform_3(%arg0: i32) -> (i32, i32, i32) {
    %c0_i32 = arith.constant 0 : i32
    %c0_i32_0 = arith.constant 0 : i32
    %c0_i32_1 = arith.constant 0 : i32
    return %arg0, %c0_i32, %c0_i32_0 : i32, i32, i32
  }
  func.func @transform_4(%arg0: i32) -> (i32, i32, i32) {
    %c0_i32 = arith.constant 0 : i32
    %c0_i32_0 = arith.constant 0 : i32
    %c0_i32_1 = arith.constant 0 : i32
    return %arg0, %c0_i32, %c0_i32_0 : i32, i32, i32
  }
}

module attributes {stable_mosaic.version = 11 : i64} {
  func.func @_conv2_kernel(%arg0: i32, %arg1: memref<1x16x16x128xf32, #tpu.memory_space<vmem>>, %arg2: memref<3x3x128x128xbf16, #tpu.memory_space<vmem>>, %arg3: memref<1x128xf32, #tpu.memory_space<vmem>>, %arg4: memref<1x128xf32, #tpu.memory_space<vmem>>, %arg5: memref<1x1xf32, #tpu.memory_space<vmem>>, %arg6: memref<1x16x16x128xf32, #tpu.memory_space<vmem>>, %arg7: memref<1x1x128xf32, #tpu.memory_space<vmem>>, %arg8: memref<1x1x128xf32, #tpu.memory_space<vmem>>, %arg9: memref<18x18x128xf32, #tpu.memory_space<vmem>>) attributes {dimension_semantics = [#tpu.dimension_semantics<parallel>], iteration_bounds = array<i64: 2>, scalar_prefetch = 0 : i64, scratch_operands = 1 : i64, tpu.core_type = #tpu.core_type<tc>, window_params = [{transform_indices = @transform_0, window_bounds = array<i64: 1, 16, 16, 128>}, {pipeline_mode = #tpu.pipeline_mode<synchronous>, transform_indices = @transform_1, window_bounds = array<i64: 3, 3, 128, 128>}, {pipeline_mode = #tpu.pipeline_mode<synchronous>, transform_indices = @transform_2, window_bounds = array<i64: 1, 128>}, {pipeline_mode = #tpu.pipeline_mode<synchronous>, transform_indices = @transform_3, window_bounds = array<i64: 1, 128>}, {pipeline_mode = #tpu.pipeline_mode<synchronous>, transform_indices = @transform_4, window_bounds = array<i64: 1, 1>}, {transform_indices = @transform_5, window_bounds = array<i64: 1, 16, 16, 128>}, {transform_indices = @transform_6, window_bounds = array<i64: 1, 1, 128>}, {transform_indices = @transform_7, window_bounds = array<i64: 1, 1, 128>}]} {
    %c0 = arith.constant 0 : index
    %c0_0 = arith.constant 0 : index
    %0 = vector.load %arg3[%c0, %c0_0] : memref<1x128xf32, #tpu.memory_space<vmem>>, vector<1x128xf32>
    %c0_1 = arith.constant 0 : index
    %c0_2 = arith.constant 0 : index
    %1 = vector.load %arg4[%c0_1, %c0_2] : memref<1x128xf32, #tpu.memory_space<vmem>>, vector<1x128xf32>
    %c0_3 = arith.constant 0 : index
    %c0_4 = arith.constant 0 : index
    %2 = vector.load %arg5[%c0_3, %c0_4] : memref<1x1xf32, #tpu.memory_space<vmem>>, vector<1x1xf32>
    %3 = vector.extract %2[0, 0] : f32 from vector<1x1xf32>
    %cst = arith.constant 0.000000e+00 : f32
    %4 = vector.broadcast %cst : f32 to vector<18x128xf32>
    %c0_5 = arith.constant 0 : index
    %c0_6 = arith.constant 0 : index
    %c0_7 = arith.constant 0 : index
    %5 = vector.load %arg9[%c0_5, %c0_6, %c0_7] : memref<18x18x128xf32, #tpu.memory_space<vmem>>, vector<1x18x128xf32>
    %6 = vector.shape_cast %5 : vector<1x18x128xf32> to vector<18x128xf32>
    %7 = vector.shape_cast %4 : vector<18x128xf32> to vector<1x18x128xf32>
    tpu.vector_store %arg9[%c0_5, %c0_6, %c0_7], %7 {strides = array<i32>} : memref<18x18x128xf32, #tpu.memory_space<vmem>>, vector<1x18x128xf32>,
    %cst_8 = arith.constant 0.000000e+00 : f32
    %8 = vector.broadcast %cst_8 : f32 to vector<18x128xf32>
    %c17 = arith.constant 17 : index
    %c0_9 = arith.constant 0 : index
    %c0_10 = arith.constant 0 : index
    %9 = vector.load %arg9[%c17, %c0_9, %c0_10] : memref<18x18x128xf32, #tpu.memory_space<vmem>>, vector<1x18x128xf32>
    %10 = vector.shape_cast %9 : vector<1x18x128xf32> to vector<18x128xf32>
    %11 = vector.shape_cast %8 : vector<18x128xf32> to vector<1x18x128xf32>
    tpu.vector_store %arg9[%c17, %c0_9, %c0_10], %11 {strides = array<i32>} : memref<18x18x128xf32, #tpu.memory_space<vmem>>, vector<1x18x128xf32>,
    %cst_11 = arith.constant 0.000000e+00 : f32
    %12 = vector.broadcast %cst_11 : f32 to vector<1x128xf32>
    %c0_i32 = arith.constant 0 : i32
    %c16_i32 = arith.constant 16 : i32
    %13 = arith.addi %c0_i32, %c16_i32 : i32
    %c1_i32 = arith.constant 1 : i32
    scf.for %arg10 = %c0_i32 to %13 step %c1_i32  : i32 {
      %c0_24 = arith.constant 0 : index
      %23 = arith.index_cast %arg10 : i32 to index
      %c0_25 = arith.constant 0 : index
      %c0_26 = arith.constant 0 : index
      %24 = vector.load %arg1[%c0_24, %23, %c0_25, %c0_26] : memref<1x16x16x128xf32, #tpu.memory_space<vmem>>, vector<1x1x16x128xf32>
      %25 = vector.shape_cast %24 : vector<1x1x16x128xf32> to vector<16x128xf32>
      %26 = vector.broadcast %0 : vector<1x128xf32> to vector<16x128xf32>
      %27 = arith.mulf %25, %26 : vector<16x128xf32>
      %28 = vector.broadcast %1 : vector<1x128xf32> to vector<16x128xf32>
      %29 = arith.addf %27, %28 : vector<16x128xf32>
      %cst_27 = arith.constant 0.000000e+00 : f32
      %30 = vector.broadcast %cst_27 : f32 to vector<16x128xf32>
      %31 = arith.cmpf oge, %29, %30 : vector<16x128xf32>
      %32 = vector.broadcast %3 : f32 to vector<16x128xf32>
      %33 = arith.mulf %32, %29 : vector<16x128xf32>
      %34 = arith.select %31, %29, %33 : vector<16x128xi1>, vector<16x128xf32>
      %c1_i32_28 = arith.constant 1 : i32
      %35 = arith.addi %arg10, %c1_i32_28 : i32
      %36 = arith.index_cast %35 : i32 to index
      %c0_29 = arith.constant 0 : index
      %c0_30 = arith.constant 0 : index
      %37 = vector.load %arg9[%36, %c0_29, %c0_30] : memref<18x18x128xf32, #tpu.memory_space<vmem>>, vector<1x1x128xf32>
      %38 = vector.shape_cast %37 : vector<1x1x128xf32> to vector<1x128xf32>
      %39 = vector.shape_cast %12 : vector<1x128xf32> to vector<1x1x128xf32>
      tpu.vector_store %arg9[%36, %c0_29, %c0_30], %39 {strides = array<i32>} : memref<18x18x128xf32, #tpu.memory_space<vmem>>, vector<1x1x128xf32>,
      %c1_i32_31 = arith.constant 1 : i32
      %40 = arith.addi %arg10, %c1_i32_31 : i32
      %41 = arith.index_cast %40 : i32 to index
      %c1 = arith.constant 1 : index
      %c0_32 = arith.constant 0 : index
      %42 = vector.load %arg9[%41, %c1, %c0_32] : memref<18x18x128xf32, #tpu.memory_space<vmem>>, vector<1x16x128xf32>
      %43 = vector.shape_cast %42 : vector<1x16x128xf32> to vector<16x128xf32>
      %44 = vector.shape_cast %34 : vector<16x128xf32> to vector<1x16x128xf32>
      tpu.vector_store %arg9[%41, %c1, %c0_32], %44 {strides = array<i32>} : memref<18x18x128xf32, #tpu.memory_space<vmem>>, vector<1x16x128xf32>,
      %c1_i32_33 = arith.constant 1 : i32
      %45 = arith.addi %arg10, %c1_i32_33 : i32
      %46 = arith.index_cast %45 : i32 to index
      %c17_34 = arith.constant 17 : index
      %c0_35 = arith.constant 0 : index
      %47 = vector.load %arg9[%46, %c17_34, %c0_35] : memref<18x18x128xf32, #tpu.memory_space<vmem>>, vector<1x1x128xf32>
      %48 = vector.shape_cast %47 : vector<1x1x128xf32> to vector<1x128xf32>
      %49 = vector.shape_cast %12 : vector<1x128xf32> to vector<1x1x128xf32>
      tpu.vector_store %arg9[%46, %c17_34, %c0_35], %49 {strides = array<i32>} : memref<18x18x128xf32, #tpu.memory_space<vmem>>, vector<1x1x128xf32>,
    }
    %c16_i32_12 = arith.constant 16 : i32
    %cst_13 = arith.constant 0.000000e+00 : f32
    %14 = vector.broadcast %cst_13 : f32 to vector<1x128xf32>
    %c0_i32_14 = arith.constant 0 : i32
    %c16_i32_15 = arith.constant 16 : i32
    %15 = arith.addi %c0_i32_14, %c16_i32_15 : i32
    %c1_i32_16 = arith.constant 1 : i32
    %16:2 = scf.for %arg10 = %c0_i32_14 to %15 step %c1_i32_16 iter_args(%arg11 = %14, %arg12 = %14) -> (vector<1x128xf32>, vector<1x128xf32>)  : i32 {
      %cst_24 = arith.constant 0.000000e+00 : f32
      %23 = vector.broadcast %cst_24 : f32 to vector<16x128xf32>
      %c0_i32_25 = arith.constant 0 : i32
      %24 = arith.addi %arg10, %c0_i32_25 : i32
      %25 = arith.index_cast %24 : i32 to index
      %c0_26 = arith.constant 0 : index
      %c0_27 = arith.constant 0 : index
      %26 = vector.load %arg9[%25, %c0_26, %c0_27] : memref<18x18x128xf32, #tpu.memory_space<vmem>>, vector<1x16x128xf32>
      %27 = vector.shape_cast %26 : vector<1x16x128xf32> to vector<16x128xf32>
      %28 = arith.truncf %27 : vector<16x128xf32> to vector<16x128xbf16>
      %c0_28 = arith.constant 0 : index
      %c0_29 = arith.constant 0 : index
      %c0_30 = arith.constant 0 : index
      %c0_31 = arith.constant 0 : index
      %29 = vector.load %arg2[%c0_28, %c0_29, %c0_30, %c0_31] : memref<3x3x128x128xbf16, #tpu.memory_space<vmem>>, vector<1x1x128x128xbf16>
      %30 = vector.shape_cast %29 : vector<1x1x128x128xbf16> to vector<128x128xbf16>
      %cst_32 = arith.constant dense<0.000000e+00> : vector<16x128xf32>
      %31 = tpu.matmul %28, %30, %cst_32 {dimension_numbers = #tpu.dot_dimension_numbers<[1], [0], [0], [1], [0, 0, 1, 1], [], []>} : vector<16x128xbf16>, vector<128x128xbf16>, vector<16x128xf32> -> vector<16x128xf32>
      %32 = arith.addf %23, %31 : vector<16x128xf32>
      %c0_i32_33 = arith.constant 0 : i32
      %33 = arith.addi %arg10, %c0_i32_33 : i32
      %34 = arith.index_cast %33 : i32 to index
      %c1 = arith.constant 1 : index
      %c0_34 = arith.constant 0 : index
      %35 = vector.load %arg9[%34, %c1, %c0_34] : memref<18x18x128xf32, #tpu.memory_space<vmem>>, vector<1x16x128xf32>
      %36 = vector.shape_cast %35 : vector<1x16x128xf32> to vector<16x128xf32>
      %37 = arith.truncf %36 : vector<16x128xf32> to vector<16x128xbf16>
      %c0_35 = arith.constant 0 : index
      %c1_36 = arith.constant 1 : index
      %c0_37 = arith.constant 0 : index
      %c0_38 = arith.constant 0 : index
      %38 = vector.load %arg2[%c0_35, %c1_36, %c0_37, %c0_38] : memref<3x3x128x128xbf16, #tpu.memory_space<vmem>>, vector<1x1x128x128xbf16>
      %39 = vector.shape_cast %38 : vector<1x1x128x128xbf16> to vector<128x128xbf16>
      %cst_39 = arith.constant dense<0.000000e+00> : vector<16x128xf32>
      %40 = tpu.matmul %37, %39, %cst_39 {dimension_numbers = #tpu.dot_dimension_numbers<[1], [0], [0], [1], [0, 0, 1, 1], [], []>} : vector<16x128xbf16>, vector<128x128xbf16>, vector<16x128xf32> -> vector<16x128xf32>
      %41 = arith.addf %32, %40 : vector<16x128xf32>
      %c0_i32_40 = arith.constant 0 : i32
      %42 = arith.addi %arg10, %c0_i32_40 : i32
      %43 = arith.index_cast %42 : i32 to index
      %c2 = arith.constant 2 : index
      %c0_41 = arith.constant 0 : index
      %44 = vector.load %arg9[%43, %c2, %c0_41] : memref<18x18x128xf32, #tpu.memory_space<vmem>>, vector<1x16x128xf32>
      %45 = vector.shape_cast %44 : vector<1x16x128xf32> to vector<16x128xf32>
      %46 = arith.truncf %45 : vector<16x128xf32> to vector<16x128xbf16>
      %c0_42 = arith.constant 0 : index
      %c2_43 = arith.constant 2 : index
      %c0_44 = arith.constant 0 : index
      %c0_45 = arith.constant 0 : index
      %47 = vector.load %arg2[%c0_42, %c2_43, %c0_44, %c0_45] : memref<3x3x128x128xbf16, #tpu.memory_space<vmem>>, vector<1x1x128x128xbf16>
      %48 = vector.shape_cast %47 : vector<1x1x128x128xbf16> to vector<128x128xbf16>
      %cst_46 = arith.constant dense<0.000000e+00> : vector<16x128xf32>
      %49 = tpu.matmul %46, %48, %cst_46 {dimension_numbers = #tpu.dot_dimension_numbers<[1], [0], [0], [1], [0, 0, 1, 1], [], []>} : vector<16x128xbf16>, vector<128x128xbf16>, vector<16x128xf32> -> vector<16x128xf32>
      %50 = arith.addf %41, %49 : vector<16x128xf32>
      %c1_i32_47 = arith.constant 1 : i32
      %51 = arith.addi %arg10, %c1_i32_47 : i32
      %52 = arith.index_cast %51 : i32 to index
      %c0_48 = arith.constant 0 : index
      %c0_49 = arith.constant 0 : index
      %53 = vector.load %arg9[%52, %c0_48, %c0_49] : memref<18x18x128xf32, #tpu.memory_space<vmem>>, vector<1x16x128xf32>
      %54 = vector.shape_cast %53 : vector<1x16x128xf32> to vector<16x128xf32>
      %55 = arith.truncf %54 : vector<16x128xf32> to vector<16x128xbf16>
      %c1_50 = arith.constant 1 : index
      %c0_51 = arith.constant 0 : index
      %c0_52 = arith.constant 0 : index
      %c0_53 = arith.constant 0 : index
      %56 = vector.load %arg2[%c1_50, %c0_51, %c0_52, %c0_53] : memref<3x3x128x128xbf16, #tpu.memory_space<vmem>>, vector<1x1x128x128xbf16>
      %57 = vector.shape_cast %56 : vector<1x1x128x128xbf16> to vector<128x128xbf16>
      %cst_54 = arith.constant dense<0.000000e+00> : vector<16x128xf32>
      %58 = tpu.matmul %55, %57, %cst_54 {dimension_numbers = #tpu.dot_dimension_numbers<[1], [0], [0], [1], [0, 0, 1, 1], [], []>} : vector<16x128xbf16>, vector<128x128xbf16>, vector<16x128xf32> -> vector<16x128xf32>
      %59 = arith.addf %50, %58 : vector<16x128xf32>
      %c1_i32_55 = arith.constant 1 : i32
      %60 = arith.addi %arg10, %c1_i32_55 : i32
      %61 = arith.index_cast %60 : i32 to index
      %c1_56 = arith.constant 1 : index
      %c0_57 = arith.constant 0 : index
      %62 = vector.load %arg9[%61, %c1_56, %c0_57] : memref<18x18x128xf32, #tpu.memory_space<vmem>>, vector<1x16x128xf32>
      %63 = vector.shape_cast %62 : vector<1x16x128xf32> to vector<16x128xf32>
      %64 = arith.truncf %63 : vector<16x128xf32> to vector<16x128xbf16>
      %c1_58 = arith.constant 1 : index
      %c1_59 = arith.constant 1 : index
      %c0_60 = arith.constant 0 : index
      %c0_61 = arith.constant 0 : index
      %65 = vector.load %arg2[%c1_58, %c1_59, %c0_60, %c0_61] : memref<3x3x128x128xbf16, #tpu.memory_space<vmem>>, vector<1x1x128x128xbf16>
      %66 = vector.shape_cast %65 : vector<1x1x128x128xbf16> to vector<128x128xbf16>
      %cst_62 = arith.constant dense<0.000000e+00> : vector<16x128xf32>
      %67 = tpu.matmul %64, %66, %cst_62 {dimension_numbers = #tpu.dot_dimension_numbers<[1], [0], [0], [1], [0, 0, 1, 1], [], []>} : vector<16x128xbf16>, vector<128x128xbf16>, vector<16x128xf32> -> vector<16x128xf32>
      %68 = arith.addf %59, %67 : vector<16x128xf32>
      %c1_i32_63 = arith.constant 1 : i32
      %69 = arith.addi %arg10, %c1_i32_63 : i32
      %70 = arith.index_cast %69 : i32 to index
      %c2_64 = arith.constant 2 : index
      %c0_65 = arith.constant 0 : index
      %71 = vector.load %arg9[%70, %c2_64, %c0_65] : memref<18x18x128xf32, #tpu.memory_space<vmem>>, vector<1x16x128xf32>
      %72 = vector.shape_cast %71 : vector<1x16x128xf32> to vector<16x128xf32>
      %73 = arith.truncf %72 : vector<16x128xf32> to vector<16x128xbf16>
      %c1_66 = arith.constant 1 : index
      %c2_67 = arith.constant 2 : index
      %c0_68 = arith.constant 0 : index
      %c0_69 = arith.constant 0 : index
      %74 = vector.load %arg2[%c1_66, %c2_67, %c0_68, %c0_69] : memref<3x3x128x128xbf16, #tpu.memory_space<vmem>>, vector<1x1x128x128xbf16>
      %75 = vector.shape_cast %74 : vector<1x1x128x128xbf16> to vector<128x128xbf16>
      %cst_70 = arith.constant dense<0.000000e+00> : vector<16x128xf32>
      %76 = tpu.matmul %73, %75, %cst_70 {dimension_numbers = #tpu.dot_dimension_numbers<[1], [0], [0], [1], [0, 0, 1, 1], [], []>} : vector<16x128xbf16>, vector<128x128xbf16>, vector<16x128xf32> -> vector<16x128xf32>
      %77 = arith.addf %68, %76 : vector<16x128xf32>
      %c2_i32 = arith.constant 2 : i32
      %78 = arith.addi %arg10, %c2_i32 : i32
      %79 = arith.index_cast %78 : i32 to index
      %c0_71 = arith.constant 0 : index
      %c0_72 = arith.constant 0 : index
      %80 = vector.load %arg9[%79, %c0_71, %c0_72] : memref<18x18x128xf32, #tpu.memory_space<vmem>>, vector<1x16x128xf32>
      %81 = vector.shape_cast %80 : vector<1x16x128xf32> to vector<16x128xf32>
      %82 = arith.truncf %81 : vector<16x128xf32> to vector<16x128xbf16>
      %c2_73 = arith.constant 2 : index
      %c0_74 = arith.constant 0 : index
      %c0_75 = arith.constant 0 : index
      %c0_76 = arith.constant 0 : index
      %83 = vector.load %arg2[%c2_73, %c0_74, %c0_75, %c0_76] : memref<3x3x128x128xbf16, #tpu.memory_space<vmem>>, vector<1x1x128x128xbf16>
      %84 = vector.shape_cast %83 : vector<1x1x128x128xbf16> to vector<128x128xbf16>
      %cst_77 = arith.constant dense<0.000000e+00> : vector<16x128xf32>
      %85 = tpu.matmul %82, %84, %cst_77 {dimension_numbers = #tpu.dot_dimension_numbers<[1], [0], [0], [1], [0, 0, 1, 1], [], []>} : vector<16x128xbf16>, vector<128x128xbf16>, vector<16x128xf32> -> vector<16x128xf32>
      %86 = arith.addf %77, %85 : vector<16x128xf32>
      %c2_i32_78 = arith.constant 2 : i32
      %87 = arith.addi %arg10, %c2_i32_78 : i32
      %88 = arith.index_cast %87 : i32 to index
      %c1_79 = arith.constant 1 : index
      %c0_80 = arith.constant 0 : index
      %89 = vector.load %arg9[%88, %c1_79, %c0_80] : memref<18x18x128xf32, #tpu.memory_space<vmem>>, vector<1x16x128xf32>
      %90 = vector.shape_cast %89 : vector<1x16x128xf32> to vector<16x128xf32>
      %91 = arith.truncf %90 : vector<16x128xf32> to vector<16x128xbf16>
      %c2_81 = arith.constant 2 : index
      %c1_82 = arith.constant 1 : index
      %c0_83 = arith.constant 0 : index
      %c0_84 = arith.constant 0 : index
      %92 = vector.load %arg2[%c2_81, %c1_82, %c0_83, %c0_84] : memref<3x3x128x128xbf16, #tpu.memory_space<vmem>>, vector<1x1x128x128xbf16>
      %93 = vector.shape_cast %92 : vector<1x1x128x128xbf16> to vector<128x128xbf16>
      %cst_85 = arith.constant dense<0.000000e+00> : vector<16x128xf32>
      %94 = tpu.matmul %91, %93, %cst_85 {dimension_numbers = #tpu.dot_dimension_numbers<[1], [0], [0], [1], [0, 0, 1, 1], [], []>} : vector<16x128xbf16>, vector<128x128xbf16>, vector<16x128xf32> -> vector<16x128xf32>
      %95 = arith.addf %86, %94 : vector<16x128xf32>
      %c2_i32_86 = arith.constant 2 : i32
      %96 = arith.addi %arg10, %c2_i32_86 : i32
      %97 = arith.index_cast %96 : i32 to index
      %c2_87 = arith.constant 2 : index
      %c0_88 = arith.constant 0 : index
      %98 = vector.load %arg9[%97, %c2_87, %c0_88] : memref<18x18x128xf32, #tpu.memory_space<vmem>>, vector<1x16x128xf32>
      %99 = vector.shape_cast %98 : vector<1x16x128xf32> to vector<16x128xf32>
      %100 = arith.truncf %99 : vector<16x128xf32> to vector<16x128xbf16>
      %c2_89 = arith.constant 2 : index
      %c2_90 = arith.constant 2 : index
      %c0_91 = arith.constant 0 : index
      %c0_92 = arith.constant 0 : index
      %101 = vector.load %arg2[%c2_89, %c2_90, %c0_91, %c0_92] : memref<3x3x128x128xbf16, #tpu.memory_space<vmem>>, vector<1x1x128x128xbf16>
      %102 = vector.shape_cast %101 : vector<1x1x128x128xbf16> to vector<128x128xbf16>
      %cst_93 = arith.constant dense<0.000000e+00> : vector<16x128xf32>
      %103 = tpu.matmul %100, %102, %cst_93 {dimension_numbers = #tpu.dot_dimension_numbers<[1], [0], [0], [1], [0, 0, 1, 1], [], []>} : vector<16x128xbf16>, vector<128x128xbf16>, vector<16x128xf32> -> vector<16x128xf32>
      %104 = arith.addf %95, %103 : vector<16x128xf32>
      %c0_94 = arith.constant 0 : index
      %105 = arith.index_cast %arg10 : i32 to index
      %c0_95 = arith.constant 0 : index
      %c0_96 = arith.constant 0 : index
      %106 = vector.load %arg6[%c0_94, %105, %c0_95, %c0_96] : memref<1x16x16x128xf32, #tpu.memory_space<vmem>>, vector<1x1x16x128xf32>
      %107 = vector.shape_cast %106 : vector<1x1x16x128xf32> to vector<16x128xf32>
      %108 = vector.shape_cast %104 : vector<16x128xf32> to vector<1x1x16x128xf32>
      tpu.vector_store %arg6[%c0_94, %105, %c0_95, %c0_96], %108 {strides = array<i32>} : memref<1x16x16x128xf32, #tpu.memory_space<vmem>>, vector<1x1x16x128xf32>,
      %cst_97 = arith.constant dense<0.000000e+00> : vector<128xf32>
      %109 = vector.multi_reduction <add>, %104, %cst_97 [0] : vector<16x128xf32> to vector<128xf32>
      %110 = vector.shape_cast %109 : vector<128xf32> to vector<1x128xf32>
      %111 = arith.addf %arg11, %110 : vector<1x128xf32>
      %112 = arith.mulf %104, %104 : vector<16x128xf32>
      %cst_98 = arith.constant dense<0.000000e+00> : vector<128xf32>
      %113 = vector.multi_reduction <add>, %112, %cst_98 [0] : vector<16x128xf32> to vector<128xf32>
      %114 = vector.shape_cast %113 : vector<128xf32> to vector<1x128xf32>
      %115 = arith.addf %arg12, %114 : vector<1x128xf32>
      scf.yield %111, %115 : vector<1x128xf32>, vector<1x128xf32>
    }
    %c16_i32_17 = arith.constant 16 : i32
    %c0_18 = arith.constant 0 : index
    %c0_19 = arith.constant 0 : index
    %c0_20 = arith.constant 0 : index
    %17 = vector.load %arg7[%c0_18, %c0_19, %c0_20] : memref<1x1x128xf32, #tpu.memory_space<vmem>>, vector<1x1x128xf32>
    %18 = vector.shape_cast %17 : vector<1x1x128xf32> to vector<1x128xf32>
    %19 = vector.shape_cast %16#0 : vector<1x128xf32> to vector<1x1x128xf32>
    tpu.vector_store %arg7[%c0_18, %c0_19, %c0_20], %19 {strides = array<i32>} : memref<1x1x128xf32, #tpu.memory_space<vmem>>, vector<1x1x128xf32>,
    %c0_21 = arith.constant 0 : index
    %c0_22 = arith.constant 0 : index
    %c0_23 = arith.constant 0 : index
    %20 = vector.load %arg8[%c0_21, %c0_22, %c0_23] : memref<1x1x128xf32, #tpu.memory_space<vmem>>, vector<1x1x128xf32>
    %21 = vector.shape_cast %20 : vector<1x1x128xf32> to vector<1x128xf32>
    %22 = vector.shape_cast %16#1 : vector<1x128xf32> to vector<1x1x128xf32>
    tpu.vector_store %arg8[%c0_21, %c0_22, %c0_23], %22 {strides = array<i32>} : memref<1x1x128xf32, #tpu.memory_space<vmem>>, vector<1x1x128xf32>,
    return
  }
  func.func @transform_0(%arg0: i32) -> (i32, i32, i32, i32) {
    %c0_i32 = arith.constant 0 : i32
    %c0_i32_0 = arith.constant 0 : i32
    %c0_i32_1 = arith.constant 0 : i32
    %c0_i32_2 = arith.constant 0 : i32
    return %arg0, %c0_i32, %c0_i32_0, %c0_i32_1 : i32, i32, i32, i32
  }
  func.func @transform_1(%arg0: i32) -> (i32, i32, i32, i32) {
    %c0_i32 = arith.constant 0 : i32
    %c0_i32_0 = arith.constant 0 : i32
    %c0_i32_1 = arith.constant 0 : i32
    %c0_i32_2 = arith.constant 0 : i32
    %c0_i32_3 = arith.constant 0 : i32
    return %c0_i32, %c0_i32_0, %c0_i32_1, %c0_i32_2 : i32, i32, i32, i32
  }
  func.func @transform_2(%arg0: i32) -> (i32, i32) {
    %c0_i32 = arith.constant 0 : i32
    %c0_i32_0 = arith.constant 0 : i32
    %c0_i32_1 = arith.constant 0 : i32
    return %c0_i32, %c0_i32_0 : i32, i32
  }
  func.func @transform_3(%arg0: i32) -> (i32, i32) {
    %c0_i32 = arith.constant 0 : i32
    %c0_i32_0 = arith.constant 0 : i32
    %c0_i32_1 = arith.constant 0 : i32
    return %c0_i32, %c0_i32_0 : i32, i32
  }
  func.func @transform_4(%arg0: i32) -> (i32, i32) {
    %c0_i32 = arith.constant 0 : i32
    %c0_i32_0 = arith.constant 0 : i32
    %c0_i32_1 = arith.constant 0 : i32
    return %c0_i32, %c0_i32_0 : i32, i32
  }
  func.func @transform_5(%arg0: i32) -> (i32, i32, i32, i32) {
    %c0_i32 = arith.constant 0 : i32
    %c0_i32_0 = arith.constant 0 : i32
    %c0_i32_1 = arith.constant 0 : i32
    %c0_i32_2 = arith.constant 0 : i32
    return %arg0, %c0_i32, %c0_i32_0, %c0_i32_1 : i32, i32, i32, i32
  }
  func.func @transform_6(%arg0: i32) -> (i32, i32, i32) {
    %c0_i32 = arith.constant 0 : i32
    %c0_i32_0 = arith.constant 0 : i32
    %c0_i32_1 = arith.constant 0 : i32
    return %arg0, %c0_i32, %c0_i32_0 : i32, i32, i32
  }
  func.func @transform_7(%arg0: i32) -> (i32, i32, i32) {
    %c0_i32 = arith.constant 0 : i32
    %c0_i32_0 = arith.constant 0 : i32
    %c0_i32_1 = arith.constant 0 : i32
    return %arg0, %c0_i32, %c0_i32_0 : i32, i32, i32
  }
}

module attributes {stable_mosaic.version = 11 : i64} {
  func.func @_bn_prelu_kernel(%arg0: i32, %arg1: memref<1x16x16x128xf32, #tpu.memory_space<vmem>>, %arg2: memref<1x128xf32, #tpu.memory_space<vmem>>, %arg3: memref<1x128xf32, #tpu.memory_space<vmem>>, %arg4: memref<1x1xf32, #tpu.memory_space<vmem>>, %arg5: memref<1x16x16x128xf32, #tpu.memory_space<vmem>>) attributes {dimension_semantics = [#tpu.dimension_semantics<parallel>], iteration_bounds = array<i64: 2>, scalar_prefetch = 0 : i64, scratch_operands = 0 : i64, tpu.core_type = #tpu.core_type<tc>, window_params = [{transform_indices = @transform_0, window_bounds = array<i64: 1, 16, 16, 128>}, {pipeline_mode = #tpu.pipeline_mode<synchronous>, transform_indices = @transform_1, window_bounds = array<i64: 1, 128>}, {pipeline_mode = #tpu.pipeline_mode<synchronous>, transform_indices = @transform_2, window_bounds = array<i64: 1, 128>}, {pipeline_mode = #tpu.pipeline_mode<synchronous>, transform_indices = @transform_3, window_bounds = array<i64: 1, 1>}, {transform_indices = @transform_4, window_bounds = array<i64: 1, 16, 16, 128>}]} {
    %c0 = arith.constant 0 : index
    %c0_0 = arith.constant 0 : index
    %0 = vector.load %arg2[%c0, %c0_0] : memref<1x128xf32, #tpu.memory_space<vmem>>, vector<1x128xf32>
    %c0_1 = arith.constant 0 : index
    %c0_2 = arith.constant 0 : index
    %1 = vector.load %arg3[%c0_1, %c0_2] : memref<1x128xf32, #tpu.memory_space<vmem>>, vector<1x128xf32>
    %c0_3 = arith.constant 0 : index
    %c0_4 = arith.constant 0 : index
    %2 = vector.load %arg4[%c0_3, %c0_4] : memref<1x1xf32, #tpu.memory_space<vmem>>, vector<1x1xf32>
    %3 = vector.extract %2[0, 0] : f32 from vector<1x1xf32>
    %c0_i32 = arith.constant 0 : i32
    %c16_i32 = arith.constant 16 : i32
    %4 = arith.addi %c0_i32, %c16_i32 : i32
    %c1_i32 = arith.constant 1 : i32
    scf.for %arg6 = %c0_i32 to %4 step %c1_i32  : i32 {
      %c0_6 = arith.constant 0 : index
      %5 = arith.index_cast %arg6 : i32 to index
      %c0_7 = arith.constant 0 : index
      %c0_8 = arith.constant 0 : index
      %6 = vector.load %arg1[%c0_6, %5, %c0_7, %c0_8] : memref<1x16x16x128xf32, #tpu.memory_space<vmem>>, vector<1x1x16x128xf32>
      %7 = vector.shape_cast %6 : vector<1x1x16x128xf32> to vector<16x128xf32>
      %8 = vector.broadcast %0 : vector<1x128xf32> to vector<16x128xf32>
      %9 = arith.mulf %7, %8 : vector<16x128xf32>
      %10 = vector.broadcast %1 : vector<1x128xf32> to vector<16x128xf32>
      %11 = arith.addf %9, %10 : vector<16x128xf32>
      %cst = arith.constant 0.000000e+00 : f32
      %12 = vector.broadcast %cst : f32 to vector<16x128xf32>
      %13 = arith.cmpf oge, %11, %12 : vector<16x128xf32>
      %14 = vector.broadcast %3 : f32 to vector<16x128xf32>
      %15 = arith.mulf %14, %11 : vector<16x128xf32>
      %16 = arith.select %13, %11, %15 : vector<16x128xi1>, vector<16x128xf32>
      %c0_9 = arith.constant 0 : index
      %17 = arith.index_cast %arg6 : i32 to index
      %c0_10 = arith.constant 0 : index
      %c0_11 = arith.constant 0 : index
      %18 = vector.load %arg5[%c0_9, %17, %c0_10, %c0_11] : memref<1x16x16x128xf32, #tpu.memory_space<vmem>>, vector<1x1x16x128xf32>
      %19 = vector.shape_cast %18 : vector<1x1x16x128xf32> to vector<16x128xf32>
      %20 = vector.shape_cast %16 : vector<16x128xf32> to vector<1x1x16x128xf32>
      tpu.vector_store %arg5[%c0_9, %17, %c0_10, %c0_11], %20 {strides = array<i32>} : memref<1x16x16x128xf32, #tpu.memory_space<vmem>>, vector<1x1x16x128xf32>,
    }
    %c16_i32_5 = arith.constant 16 : i32
    return
  }
  func.func @transform_0(%arg0: i32) -> (i32, i32, i32, i32) {
    %c0_i32 = arith.constant 0 : i32
    %c0_i32_0 = arith.constant 0 : i32
    %c0_i32_1 = arith.constant 0 : i32
    %c0_i32_2 = arith.constant 0 : i32
    return %arg0, %c0_i32, %c0_i32_0, %c0_i32_1 : i32, i32, i32, i32
  }
  func.func @transform_1(%arg0: i32) -> (i32, i32) {
    %c0_i32 = arith.constant 0 : i32
    %c0_i32_0 = arith.constant 0 : i32
    %c0_i32_1 = arith.constant 0 : i32
    return %c0_i32, %c0_i32_0 : i32, i32
  }
  func.func @transform_2(%arg0: i32) -> (i32, i32) {
    %c0_i32 = arith.constant 0 : i32
    %c0_i32_0 = arith.constant 0 : i32
    %c0_i32_1 = arith.constant 0 : i32
    return %c0_i32, %c0_i32_0 : i32, i32
  }
  func.func @transform_3(%arg0: i32) -> (i32, i32) {
    %c0_i32 = arith.constant 0 : i32
    %c0_i32_0 = arith.constant 0 : i32
    %c0_i32_1 = arith.constant 0 : i32
    return %c0_i32, %c0_i32_0 : i32, i32
  }
  func.func @transform_4(%arg0: i32) -> (i32, i32, i32, i32) {
    %c0_i32 = arith.constant 0 : i32
    %c0_i32_0 = arith.constant 0 : i32
    %c0_i32_1 = arith.constant 0 : i32
    %c0_i32_2 = arith.constant 0 : i32
    return %arg0, %c0_i32, %c0_i32_0, %c0_i32_1 : i32, i32, i32, i32
  }
}

</mosaic_0001>

<llo_original>
// kernel: convblock_forward.3
$region0: #{convblock_forward.3}
  #allocation0 [shape = 'u32[]', space=smem, size = 0x4, offset = 0x4, fixed_abs, tag = 'smem constant byte address 0x4 - core index']
  #allocation1 [shape = 'u32[144,128]{1,0:T(1,128)}', space=vmem, size = 0x12000, scoped, tag = 'internal scratch']
  %s0 = inlined_call_operand.vmem [shape: bf16[2,18,18,64], index: 0, kind: input, shape index: {}]
  %s1 = inlined_call_operand.vmem [shape: bf16[3,3,64,128], index: 1, kind: input, shape index: {}]
  %s2 = inlined_call_operand.vmem [shape: f32[2,16,16,128], index: 2, kind: output, shape index: {0}]
  %s3 = inlined_call_operand.vmem [shape: f32[2,1,128], index: 3, kind: output, shape index: {1}]
  %s4 = inlined_call_operand.vmem [shape: f32[2,1,128], index: 4, kind: output, shape index: {2}]
  %5 = xla_tuple %s2, %s3, %s4
  %s6 = sld [smem:[#allocation0]]
  $region64: #{convblock_forward.3} parent=0
    _
  %s8 = ssub.s32 1, %s6
  %s9 = scalar_select 0, %s8, %s6
  loop: start=0, step=1, limit=4
  $region2: #{convblock_forward.3} parent=0 // loop_pre_header
    _
  $region3: #{convblock_forward.3} parent=0 // loop_header
    %s11 = sphi 0, %s15
    %p12 = scmp.ge.s32.totalorder %s11, 4
    %s21 = sphi 0, %s23
    %s24 = sphi 0, %s21
    %s25 = sphi 0, %s24
    %s41 = sphi 0, %s25
    %s45 = sphi 0, %s45
    %s47 = sphi 0, %s45
    %s48 = sphi 0, %s47
    %s62 = sphi 0, %s48
    %s68 = sphi 0, %s70
    %s71 = sphi 0, %s68
    %s72 = sphi 0, %s71
    %s88 = sphi 0, %s72
    %s94 = sphi 0, %s96
    %s97 = sphi 0, %s94
    %s98 = sphi 0, %s97
    %s114 = sphi 0, %s98
    %s120 = sphi 0, %s122
    %s123 = sphi 0, %s120
    %s124 = sphi 0, %s123
    %s140 = sphi 0, %s124
  $region4: #{convblock_forward.3} parent=0 // loop_header_branch
    %14 = sbr.rel (%p12) target = $region8
  $region5: #{convblock_forward.3} parent=0 // loop_body
    %s16 = ssub.s32 %s11, 1
    %s17 = ssub.s32 %s11, 2
    %s18 = sadd.s32 %s11, 1
    %s19 = ssub.s32 %s11, %s18
    %p20 = scmp.eq.s32.totalorder %s19, 0
    %s22 = sadd.s32 %s21, 1
    %s23 = scalar_select %p20, %s21, %s22
    %p26 = pneg %p20
    %p27 = scmp.eq.s32.totalorder %s11, 1
    %p28 = por %p26, %p27
    %p29 = scmp.ne.s32.totalorder %s21, %s24
    %p30 = scmp.eq.s32.totalorder %s11, 0
    %p31 = por %p29, %p30
    %p32 = scmp.ne.s32.totalorder %s21, %s24
    %p33 = scmp.eq.s32.totalorder %s16, 1
    %p34 = por %p32, %p33
    %p35 = scmp.ne.s32.totalorder %s24, %s25
    %p36 = scmp.eq.s32.totalorder %s16, 0
    %p37 = por %p35, %p36
    %p38 = scmp.ne.s32.totalorder %s24, %s25
    %p39 = scmp.eq.s32.totalorder %s17, 1
    %p40 = por %p38, %p39
    %p42 = scmp.ne.s32.totalorder %s25, %s41
    %p43 = scmp.eq.s32.totalorder %s17, 0
    %p44 = por %p42, %p43
    %s46 = sadd.s32 %s45, 1
    %p49 = scmp.eq.s32.totalorder %s11, 1
    %p50 = scmp.ne.s32.totalorder %s45, %s47
    %p51 = scmp.eq.s32.totalorder %s11, 0
    %p52 = por %p50, %p51
    %p53 = scmp.ne.s32.totalorder %s45, %s47
    %p54 = scmp.eq.s32.totalorder %s16, 1
    %p55 = por %p53, %p54
    %p56 = scmp.ne.s32.totalorder %s47, %s48
    %p57 = scmp.eq.s32.totalorder %s16, 0
    %p58 = por %p56, %p57
    %p59 = scmp.ne.s32.totalorder %s47, %s48
    %p60 = scmp.eq.s32.totalorder %s17, 1
    %p61 = por %p59, %p60
    %p63 = scmp.ne.s32.totalorder %s48, %s62
    %p64 = scmp.eq.s32.totalorder %s17, 0
    %p65 = por %p63, %p64
    %s66 = ssub.s32 %s11, %s18
    %p67 = scmp.eq.s32.totalorder %s66, 0
    %s69 = sadd.s32 %s68, 1
    %s70 = scalar_select %p67, %s68, %s69
    %p73 = pneg %p67
    %p74 = scmp.eq.s32.totalorder %s11, 1
    %p75 = por %p73, %p74
    %p76 = scmp.ne.s32.totalorder %s68, %s71
    %p77 = scmp.eq.s32.totalorder %s11, 0
    %p78 = por %p76, %p77
    %p79 = scmp.ne.s32.totalorder %s68, %s71
    %p80 = scmp.eq.s32.totalorder %s16, 1
    %p81 = por %p79, %p80
    %p82 = scmp.ne.s32.totalorder %s71, %s72
    %p83 = scmp.eq.s32.totalorder %s16, 0
    %p84 = por %p82, %p83
    %p85 = scmp.ne.s32.totalorder %s71, %s72
    %p86 = scmp.eq.s32.totalorder %s17, 1
    %p87 = por %p85, %p86
    %p89 = scmp.ne.s32.totalorder %s72, %s88
    %p90 = scmp.eq.s32.totalorder %s17, 0
    %p91 = por %p89, %p90
    %s92 = ssub.s32 %s11, %s18
    %p93 = scmp.eq.s32.totalorder %s92, 0
    %s95 = sadd.s32 %s94, 1
    %s96 = scalar_select %p93, %s94, %s95
    %p99 = pneg %p93
    %p100 = scmp.eq.s32.totalorder %s11, 1
    %p101 = por %p99, %p100
    %p102 = scmp.ne.s32.totalorder %s94, %s97
    %p103 = scmp.eq.s32.totalorder %s11, 0
    %p104 = por %p102, %p103
    %p105 = scmp.ne.s32.totalorder %s94, %s97
    %p106 = scmp.eq.s32.totalorder %s16, 1
    %p107 = por %p105, %p106
    %p108 = scmp.ne.s32.totalorder %s97, %s98
    %p109 = scmp.eq.s32.totalorder %s16, 0
    %p110 = por %p108, %p109
    %p111 = scmp.ne.s32.totalorder %s97, %s98
    %p112 = scmp.eq.s32.totalorder %s17, 1
    %p113 = por %p111, %p112
    %p115 = scmp.ne.s32.totalorder %s98, %s114
    %p116 = scmp.eq.s32.totalorder %s17, 0
    %p117 = por %p115, %p116
    %s118 = ssub.s32 %s11, %s18
    %p119 = scmp.eq.s32.totalorder %s118, 0
    %s121 = sadd.s32 %s120, 1
    %s122 = scalar_select %p119, %s120, %s121
    %p125 = pneg %p119
    %p126 = scmp.eq.s32.totalorder %s11, 1
    %p127 = por %p125, %p126
    %p128 = scmp.ne.s32.totalorder %s120, %s123
    %p129 = scmp.eq.s32.totalorder %s11, 0
    %p130 = por %p128, %p129
    %p131 = scmp.ne.s32.totalorder %s120, %s123
    %p132 = scmp.eq.s32.totalorder %s16, 1
    %p133 = por %p131, %p132
    %p134 = scmp.ne.s32.totalorder %s123, %s124
    %p135 = scmp.eq.s32.totalorder %s16, 0
    %p136 = por %p134, %p135
    %p137 = scmp.ne.s32.totalorder %s123, %s124
    %p138 = scmp.eq.s32.totalorder %s17, 1
    %p139 = por %p137, %p138
    %p141 = scmp.ne.s32.totalorder %s124, %s140
    %p142 = scmp.eq.s32.totalorder %s17, 0
    %p143 = por %p141, %p142
    %p144 = scmp.le.s32.totalorder 1, %s11
    %p145 = scmp.lt.s32.totalorder %s11, 3
    %p146 = pnand %p144, %p145
    %p147 = pneg %p146
    // Predicated region
    $region9: #{convblock_forward.3} parent=5 // pred_check
      _
    $region10: #{convblock_forward.3} parent=5 // pred_check_branch
      %149 = sbr.rel (%p146) target = $region12
    $region11: #{convblock_forward.3} parent=5 // pred_region
      %s150 = ssub.s32 %s11, 1
      // Predicated region
      $region13: #{convblock_forward.3} parent=11 // pred_check
        %p151 = pneg %p58
      $region14: #{convblock_forward.3} parent=11 // pred_check_branch
        %153 = sbr.rel (%p151) target = $region16
      $region15: #{convblock_forward.3} parent=11 // pred_region
        _
      $region16: #{convblock_forward.3} parent=11 // pred_fallthru
        _
    $region12: #{convblock_forward.3} parent=5 // pred_fallthru
      _
    %p154 = scmp.lt.s32.totalorder %s11, 2
    // Predicated region
    $region17: #{convblock_forward.3} parent=5 // pred_check
      %p155 = pneg %p154
    $region18: #{convblock_forward.3} parent=5 // pred_check_branch
      %157 = sbr.rel (%p155) target = $region20
    $region19: #{convblock_forward.3} parent=5 // pred_region
      // Predicated region
      $region21: #{convblock_forward.3} parent=19 // pred_check
        %p158 = pneg %p31
      $region22: #{convblock_forward.3} parent=19 // pred_check_branch
        %160 = sbr.rel (%p158) target = $region24
      $region23: #{convblock_forward.3} parent=19 // pred_region
        %p161 = scmp.lt.s32.totalorder %s11, 1
        %s162 = scalar_select %p161, %s11, 1
        %s163 = smul.addr %s162, 54
        %s164 = smul.addr %s163, 4
        %s165 = scalar_lea.vmem %s0, %s164
      $region24: #{convblock_forward.3} parent=19 // pred_fallthru
        _
    $region20: #{convblock_forward.3} parent=5 // pred_fallthru
      _
    %p166 = scmp.le.s32.totalorder 1, %s11
    %p167 = scmp.lt.s32.totalorder %s11, 3
    %p168 = pnand %p166, %p167
    %p169 = pneg %p168
    // Predicated region
    $region25: #{convblock_forward.3} parent=5 // pred_check
      _
    $region26: #{convblock_forward.3} parent=5 // pred_check_branch
      %171 = sbr.rel (%p168) target = $region28
    $region27: #{convblock_forward.3} parent=5 // pred_region
      %s172 = ssub.s32 %s11, 1
      %p173 = scmp.lt.s32.totalorder %s16, 1
      %s174 = scalar_select %p173, %s16, 1
      %s175 = smul.addr %s174, 54
      %s176 = smul.addr %s175, 4
      %s177 = scalar_lea.vmem %s0, %s176
      %p178 = pneg %p37
      %p179 = pneg %p34
      %p180 = pneg %p58
      %p181 = pneg %p55
      %p182 = pneg %p84
      %p183 = pneg %p81
      %p184 = scmp.lt.s32.totalorder %s16, 1
      %s185 = scalar_select %p184, %s16, 1
      %s186 = smul.addr %s185, 32
      %s187 = smul.addr %s186, 8
      %s188 = scalar_lea.vmem %s2, %s187
      %p189 = pneg %p110
      %p190 = pneg %p107
      %p191 = scmp.lt.s32.totalorder %s16, 1
      %s192 = scalar_select %p191, %s16, 1
      %s193 = scalar_lea.vmem %s3, %s192
      %p194 = pneg %p136
      %p195 = pneg %p133
      %p196 = scmp.lt.s32.totalorder %s16, 1
      %s197 = scalar_select %p196, %s16, 1
      %s198 = scalar_lea.vmem %s4, %s197
      %p199 = scmp.lt.s32.totalorder %s16, 1
      %s200 = scalar_select %p199, %s16, 1
      %s201 = smul.addr %s200, 54
      %s202 = smul.addr %s201, 4
      %s203 = scalar_lea.vmem %s0, %s202
      %p204 = scmp.lt.s32.totalorder %s16, 1
      %s205 = scalar_select %p204, %s16, 1
      %s206 = smul.addr %s205, 32
      %s207 = smul.addr %s206, 8
      %s208 = scalar_lea.vmem %s2, %s207
      %p209 = scmp.lt.s32.totalorder %s16, 1
      %s210 = scalar_select %p209, %s16, 1
      %s211 = scalar_lea.vmem %s3, %s210
      %p212 = scmp.lt.s32.totalorder %s16, 1
      %s213 = scalar_select %p212, %s16, 1
      %s214 = scalar_lea.vmem %s4, %s213
      loop: start=0, step=1, limit=16
      $region29: #{convblock_forward.3} parent=27 // loop_pre_header
        _
      $region30: #{convblock_forward.3} parent=27 // loop_header
        %s217 = sphi 0, %s221
        %p218 = scmp.ge.s32.totalorder %s217, 16
        %v222 = vphi 0.0, %v1058
        %v223 = vphi 0.0, %v1068
      $region31: #{convblock_forward.3} parent=27 // loop_header_branch
        %220 = sbr.rel (%p218) target = $region35
      $region32: #{convblock_forward.3} parent=27 // loop_body
        %s224 = smul.u32 %s217, 3
        %s225 = smul.addr %s224, 4
        %s226 = scalar_lea.vmem %s203, %s225
        %v227 = vld [vmem:[%s226] sm:$0xf]
        %v228 = vld [vmem:[%s226 + $0x4] sm:$0xf]
        %v229 = vld [vmem:[%s1] sm:$0xf]
        %v230 = vld [vmem:[%s1 + $0x4] sm:$0xf]
        %v231 = vld [vmem:[%s1 + $0x8] sm:$0xf]
        %v232 = vld [vmem:[%s1 + $0xc] sm:$0xf]
        %v233 = vld [vmem:[%s1 + $0x10] sm:$0xf]
        %v234 = vld [vmem:[%s1 + $0x14] sm:$0xf]
        %v235 = vld [vmem:[%s1 + $0x18] sm:$0xf]
        %v236 = vld [vmem:[%s1 + $0x1c] sm:$0xf]
        %v237 = vld [vmem:[%s226 + $0x8] sm:$0x1]
        %s238 = scalar_lea.vmem %s1, 32
        %v239 = vld [vmem:[%s238] sm:$0xf]
        %v240 = vld [vmem:[%s238 + $0x4] sm:$0xf]
        %v241 = vld [vmem:[%s238 + $0x8] sm:$0xf]
        %v242 = vld [vmem:[%s238 + $0xc] sm:$0xf]
        %v243 = vld [vmem:[%s238 + $0x10] sm:$0xf]
        %v244 = vld [vmem:[%s238 + $0x14] sm:$0xf]
        %v245 = vld [vmem:[%s238 + $0x18] sm:$0xf]
        %v246 = vld [vmem:[%s238 + $0x1c] sm:$0xf]
        %v250 = vunpack.c.l.b16 %v227
        %v251 = vunpack.c.l.b16 %v228
        %v252 = vunpack.c.l.b16 %v237
        %v253 = vpack.c.b16 %v251, %v250
        %v254 = vpack.c.b16 %v252, %v252
        %vm255 = vsmask.f32 7424
        %v257 = vshrl.u32 %v253, 16
        %v259 = vshll.u32 %v253, 16
        %v261 = vrot.slane %v259, 1
        %v262 = vor.u32 %v257, %v261
        %v264 = vshll.u32 %v254, 16
        %v266 = vrot.slane %v264, 1
        %v267 = vsel %vm255, %v262, %v266
        %v276 = vunpack.c.l.b16 %v239
        %v277 = vunpack.c.l.b16 %v240
        %v278 = vunpack.c.l.b16 %v241
        %v279 = vunpack.c.l.b16 %v242
        %v280 = vunpack.c.l.b16 %v243
        %v281 = vunpack.c.l.b16 %v244
        %v282 = vunpack.c.l.b16 %v245
        %v283 = vunpack.c.l.b16 %v246
        %v284 = vpack.c.b16 %v277, %v276
        %v285 = vpack.c.b16 %v279, %v278
        %v286 = vpack.c.b16 %v281, %v280
        %v287 = vpack.c.b16 %v283, %v282
        %vm292 = vcmask 523264
        %v294 = vsel %vm292, %v267, 0
        %296 = vmatprep.subr.bf16.mxu0 0
        %297 = vmatpush1.bf16.msra.mxu0 0
        %298 = vmatprep.subr.bf16.mxu0 0
        %299 = vmatpush1.bf16.msra.mxu0 0
        %300 = vmatprep.subr.bf16.mxu0 0
        %301 = vmatpush1.bf16.msra.mxu0 0
        %302 = vmatprep.subr.bf16.mxu0 0
        %303 = vmatpush1.bf16.msra.mxu0 0
        %304 = vmatprep.subr.bf16.mxu0 0
        %305 = vmatpush1.bf16.msra.mxu0 %v287
        %306 = vmatprep.subr.bf16.mxu0 0
        %307 = vmatpush1.bf16.msra.mxu0 %v286
        %308 = vmatprep.subr.bf16.mxu0 0
        %309 = vmatpush1.bf16.msra.mxu0 %v285
        %310 = vmatprep.subr.bf16.mxu0 0
        %311 = vmatpush1.bf16.msra.mxu0 %v284
        %312 = vmatprep.subr.bf16.mxu0 0
        %313 = vmatpush2.bf16.msra.mxu0 0
        %314 = vmatprep.subr.bf16.mxu0 0
        %315 = vmatpush2.bf16.msra.mxu0 0
        %316 = vmatprep.subr.bf16.mxu0 0
        %317 = vmatpush2.bf16.msra.mxu0 0
        %318 = vmatprep.subr.bf16.mxu0 0
        %319 = vmatpush2.bf16.msra.mxu0 0
        %320 = vmatprep.subr.bf16.mxu0 0
        %321 = vmatpush2.bf16.msra.mxu0 0
        %322 = vmatprep.subr.bf16.mxu0 0
        %323 = vmatpush2.bf16.msra.mxu0 0
        %324 = vmatprep.subr.bf16.mxu0 0
        %325 = vmatpush2.bf16.msra.mxu0 0
        %326 = vmatprep.subr.bf16.mxu0 0
        %327 = vmatpush2.bf16.msra.mxu0 0
        %328 = vmatprep.mubr.bf16.mxu0 0
        %329 = vmatmul.mubr.bf16.gmra.mxu0 %v294
        %v330 = vpop.f32.mrf.mxu0
        %v331 = vadd.f32 0.0, %v330
        %v332 = vpop.f32.mrf.mxu0
        %v333 = vpop.f32.mrf.mxu0
        %v334 = vadd.f32 0.0, %v333
        %v335 = vpop.f32.mrf.mxu0
        %336 = vdwg.mxu0
        %v345 = vunpack.c.l.b16 %v229
        %v346 = vunpack.c.l.b16 %v230
        %v347 = vunpack.c.l.b16 %v231
        %v348 = vunpack.c.l.b16 %v232
        %v349 = vunpack.c.l.b16 %v233
        %v350 = vunpack.c.l.b16 %v234
        %v351 = vunpack.c.l.b16 %v235
        %v352 = vunpack.c.l.b16 %v236
        %v353 = vpack.c.b16 %v346, %v345
        %v354 = vpack.c.b16 %v348, %v347
        %v355 = vpack.c.b16 %v350, %v349
        %v356 = vpack.c.b16 %v352, %v351
        %v361 = vsel %vm292, %v253, 0
        %363 = vmatprep.subr.bf16.mxu0 0
        %364 = vmatpush1.bf16.msra.mxu0 0
        %365 = vmatprep.subr.bf16.mxu0 0
        %366 = vmatpush1.bf16.msra.mxu0 0
        %367 = vmatprep.subr.bf16.mxu0 0
        %368 = vmatpush1.bf16.msra.mxu0 0
        %369 = vmatprep.subr.bf16.mxu0 0
        %370 = vmatpush1.bf16.msra.mxu0 0
        %371 = vmatprep.subr.bf16.mxu0 0
        %372 = vmatpush1.bf16.msra.mxu0 %v356
        %373 = vmatprep.subr.bf16.mxu0 0
        %374 = vmatpush1.bf16.msra.mxu0 %v355
        %375 = vmatprep.subr.bf16.mxu0 0
        %376 = vmatpush1.bf16.msra.mxu0 %v354
        %377 = vmatprep.subr.bf16.mxu0 0
        %378 = vmatpush1.bf16.msra.mxu0 %v353
        %379 = vmatprep.subr.bf16.mxu0 0
        %380 = vmatpush2.bf16.msra.mxu0 0
        %381 = vmatprep.subr.bf16.mxu0 0
        %382 = vmatpush2.bf16.msra.mxu0 0
        %383 = vmatprep.subr.bf16.mxu0 0
        %384 = vmatpush2.bf16.msra.mxu0 0
        %385 = vmatprep.subr.bf16.mxu0 0
        %386 = vmatpush2.bf16.msra.mxu0 0
        %387 = vmatprep.subr.bf16.mxu0 0
        %388 = vmatpush2.bf16.msra.mxu0 0
        %389 = vmatprep.subr.bf16.mxu0 0
        %390 = vmatpush2.bf16.msra.mxu0 0
        %391 = vmatprep.subr.bf16.mxu0 0
        %392 = vmatpush2.bf16.msra.mxu0 0
        %393 = vmatprep.subr.bf16.mxu0 0
        %394 = vmatpush2.bf16.msra.mxu0 0
        %395 = vmatprep.mubr.bf16.mxu0 0
        %396 = vmatmul.mubr.bf16.gmra.mxu0 %v361
        %v397 = vpop.f32.mrf.mxu0
        %v398 = vadd.f32 %v331, %v397
        %v399 = vpop.f32.mrf.mxu0
        %v400 = vpop.f32.mrf.mxu0
        %v401 = vadd.f32 %v334, %v400
        %v402 = vpop.f32.mrf.mxu0
        %403 = vdwg.mxu0
        %v404 = vld [vmem:[%s226] sm:$0xe]
        %s405 = scalar_lea.vmem %s1, 64
        %v406 = vld [vmem:[%s405] sm:$0xf]
        %v407 = vld [vmem:[%s405 + $0x4] sm:$0xf]
        %v408 = vld [vmem:[%s405 + $0x8] sm:$0xf]
        %v409 = vld [vmem:[%s405 + $0xc] sm:$0xf]
        %v410 = vld [vmem:[%s405 + $0x10] sm:$0xf]
        %v411 = vld [vmem:[%s405 + $0x14] sm:$0xf]
        %v412 = vld [vmem:[%s405 + $0x18] sm:$0xf]
        %v413 = vld [vmem:[%s405 + $0x1c] sm:$0xf]
        %v415 = vunpack.c.l.b16 %v404
        %v416 = vpack.c.b16 %v251, %v415
        %vm417 = vcmask 1046528
        %v418 = vrot.slane %v416, 1
        %v419 = vrot.slane %v254, 1
        %v420 = vsel %vm417, %v418, %v419
        %v429 = vunpack.c.l.b16 %v406
        %v430 = vunpack.c.l.b16 %v407
        %v431 = vunpack.c.l.b16 %v408
        %v432 = vunpack.c.l.b16 %v409
        %v433 = vunpack.c.l.b16 %v410
        %v434 = vunpack.c.l.b16 %v411
        %v435 = vunpack.c.l.b16 %v412
        %v436 = vunpack.c.l.b16 %v413
        %v437 = vpack.c.b16 %v430, %v429
        %v438 = vpack.c.b16 %v432, %v431
        %v439 = vpack.c.b16 %v434, %v433
        %v440 = vpack.c.b16 %v436, %v435
        %v446 = vsel %vm292, %v420, 0
        %448 = vmatprep.subr.bf16.mxu0 0
        %449 = vmatpush1.bf16.msra.mxu0 0
        %450 = vmatprep.subr.bf16.mxu0 0
        %451 = vmatpush1.bf16.msra.mxu0 0
        %452 = vmatprep.subr.bf16.mxu0 0
        %453 = vmatpush1.bf16.msra.mxu0 0
        %454 = vmatprep.subr.bf16.mxu0 0
        %455 = vmatpush1.bf16.msra.mxu0 0
        %456 = vmatprep.subr.bf16.mxu0 0
        %457 = vmatpush1.bf16.msra.mxu0 %v440
        %458 = vmatprep.subr.bf16.mxu0 0
        %459 = vmatpush1.bf16.msra.mxu0 %v439
        %460 = vmatprep.subr.bf16.mxu0 0
        %461 = vmatpush1.bf16.msra.mxu0 %v438
        %462 = vmatprep.subr.bf16.mxu0 0
        %463 = vmatpush1.bf16.msra.mxu0 %v437
        %464 = vmatprep.subr.bf16.mxu0 0
        %465 = vmatpush2.bf16.msra.mxu0 0
        %466 = vmatprep.subr.bf16.mxu0 0
        %467 = vmatpush2.bf16.msra.mxu0 0
        %468 = vmatprep.subr.bf16.mxu0 0
        %469 = vmatpush2.bf16.msra.mxu0 0
        %470 = vmatprep.subr.bf16.mxu0 0
        %471 = vmatpush2.bf16.msra.mxu0 0
        %472 = vmatprep.subr.bf16.mxu0 0
        %473 = vmatpush2.bf16.msra.mxu0 0
        %474 = vmatprep.subr.bf16.mxu0 0
        %475 = vmatpush2.bf16.msra.mxu0 0
        %476 = vmatprep.subr.bf16.mxu0 0
        %477 = vmatpush2.bf16.msra.mxu0 0
        %478 = vmatprep.subr.bf16.mxu0 0
        %479 = vmatpush2.bf16.msra.mxu0 0
        %480 = vmatprep.mubr.bf16.mxu0 0
        %481 = vmatmul.mubr.bf16.gmra.mxu0 %v446
        %v482 = vpop.f32.mrf.mxu0
        %v483 = vadd.f32 0.0, %v482
        %v484 = vpop.f32.mrf.mxu0
        %v485 = vpop.f32.mrf.mxu0
        %v486 = vadd.f32 0.0, %v485
        %v487 = vpop.f32.mrf.mxu0
        %488 = vdwg.mxu0
        %v489 = vadd.f32 %v398, %v483
        %v490 = vadd.f32 %v401, %v486
        %s491 = sadd.s32 %s217, 1
        %s492 = smul.u32 %s491, 3
        %s493 = smul.addr %s492, 4
        %s494 = scalar_lea.vmem %s203, %s493
        %v495 = vld [vmem:[%s494] sm:$0xf]
        %v496 = vld [vmem:[%s494 + $0x4] sm:$0xf]
        %s497 = scalar_lea.vmem %s1, 96
        %v498 = vld [vmem:[%s497] sm:$0xf]
        %v499 = vld [vmem:[%s497 + $0x4] sm:$0xf]
        %v500 = vld [vmem:[%s497 + $0x8] sm:$0xf]
        %v501 = vld [vmem:[%s497 + $0xc] sm:$0xf]
        %v502 = vld [vmem:[%s497 + $0x10] sm:$0xf]
        %v503 = vld [vmem:[%s497 + $0x14] sm:$0xf]
        %v504 = vld [vmem:[%s497 + $0x18] sm:$0xf]
        %v505 = vld [vmem:[%s497 + $0x1c] sm:$0xf]
        %v508 = vunpack.c.l.b16 %v495
        %v509 = vunpack.c.l.b16 %v496
        %v510 = vpack.c.b16 %v509, %v508
        %v519 = vunpack.c.l.b16 %v498
        %v520 = vunpack.c.l.b16 %v499
        %v521 = vunpack.c.l.b16 %v500
        %v522 = vunpack.c.l.b16 %v501
        %v523 = vunpack.c.l.b16 %v502
        %v524 = vunpack.c.l.b16 %v503
        %v525 = vunpack.c.l.b16 %v504
        %v526 = vunpack.c.l.b16 %v505
        %v527 = vpack.c.b16 %v520, %v519
        %v528 = vpack.c.b16 %v522, %v521
        %v529 = vpack.c.b16 %v524, %v523
        %v530 = vpack.c.b16 %v526, %v525
        %v536 = vsel %vm292, %v510, 0
        %538 = vmatprep.subr.bf16.mxu0 0
        %539 = vmatpush1.bf16.msra.mxu0 0
        %540 = vmatprep.subr.bf16.mxu0 0
        %541 = vmatpush1.bf16.msra.mxu0 0
        %542 = vmatprep.subr.bf16.mxu0 0
        %543 = vmatpush1.bf16.msra.mxu0 0
        %544 = vmatprep.subr.bf16.mxu0 0
        %545 = vmatpush1.bf16.msra.mxu0 0
        %546 = vmatprep.subr.bf16.mxu0 0
        %547 = vmatpush1.bf16.msra.mxu0 %v530
        %548 = vmatprep.subr.bf16.mxu0 0
        %549 = vmatpush1.bf16.msra.mxu0 %v529
        %550 = vmatprep.subr.bf16.mxu0 0
        %551 = vmatpush1.bf16.msra.mxu0 %v528
        %552 = vmatprep.subr.bf16.mxu0 0
        %553 = vmatpush1.bf16.msra.mxu0 %v527
        %554 = vmatprep.subr.bf16.mxu0 0
        %555 = vmatpush2.bf16.msra.mxu0 0
        %556 = vmatprep.subr.bf16.mxu0 0
        %557 = vmatpush2.bf16.msra.mxu0 0
        %558 = vmatprep.subr.bf16.mxu0 0
        %559 = vmatpush2.bf16.msra.mxu0 0
        %560 = vmatprep.subr.bf16.mxu0 0
        %561 = vmatpush2.bf16.msra.mxu0 0
        %562 = vmatprep.subr.bf16.mxu0 0
        %563 = vmatpush2.bf16.msra.mxu0 0
        %564 = vmatprep.subr.bf16.mxu0 0
        %565 = vmatpush2.bf16.msra.mxu0 0
        %566 = vmatprep.subr.bf16.mxu0 0
        %567 = vmatpush2.bf16.msra.mxu0 0
        %568 = vmatprep.subr.bf16.mxu0 0
        %569 = vmatpush2.bf16.msra.mxu0 0
        %570 = vmatprep.mubr.bf16.mxu0 0
        %571 = vmatmul.mubr.bf16.gmra.mxu0 %v536
        %v572 = vpop.f32.mrf.mxu0
        %v573 = vadd.f32 0.0, %v572
        %v574 = vpop.f32.mrf.mxu0
        %v575 = vpop.f32.mrf.mxu0
        %v576 = vadd.f32 0.0, %v575
        %v577 = vpop.f32.mrf.mxu0
        %578 = vdwg.mxu0
        %v579 = vadd.f32 %v489, %v573
        %v580 = vadd.f32 %v490, %v576
        %v581 = vld [vmem:[%s494] sm:$0xf]
        %v582 = vld [vmem:[%s494 + $0x4] sm:$0xf]
        %v583 = vld [vmem:[%s494 + $0x8] sm:$0x1]
        %s584 = scalar_lea.vmem %s1, 128
        %v585 = vld [vmem:[%s584] sm:$0xf]
        %v586 = vld [vmem:[%s584 + $0x4] sm:$0xf]
        %v587 = vld [vmem:[%s584 + $0x8] sm:$0xf]
        %v588 = vld [vmem:[%s584 + $0xc] sm:$0xf]
        %v589 = vld [vmem:[%s584 + $0x10] sm:$0xf]
        %v590 = vld [vmem:[%s584 + $0x14] sm:$0xf]
        %v591 = vld [vmem:[%s584 + $0x18] sm:$0xf]
        %v592 = vld [vmem:[%s584 + $0x1c] sm:$0xf]
        %v596 = vunpack.c.l.b16 %v581
        %v597 = vunpack.c.l.b16 %v582
        %v598 = vunpack.c.l.b16 %v583
        %v599 = vpack.c.b16 %v597, %v596
        %v600 = vpack.c.b16 %v598, %v598
        %v602 = vshrl.u32 %v599, 16
        %v604 = vshll.u32 %v599, 16
        %v606 = vrot.slane %v604, 1
        %v607 = vor.u32 %v602, %v606
        %v609 = vshll.u32 %v600, 16
        %v611 = vrot.slane %v609, 1
        %v612 = vsel %vm255, %v607, %v611
        %v621 = vunpack.c.l.b16 %v585
        %v622 = vunpack.c.l.b16 %v586
        %v623 = vunpack.c.l.b16 %v587
        %v624 = vunpack.c.l.b16 %v588
        %v625 = vunpack.c.l.b16 %v589
        %v626 = vunpack.c.l.b16 %v590
        %v627 = vunpack.c.l.b16 %v591
        %v628 = vunpack.c.l.b16 %v592
        %v629 = vpack.c.b16 %v622, %v621
        %v630 = vpack.c.b16 %v624, %v623
        %v631 = vpack.c.b16 %v626, %v625
        %v632 = vpack.c.b16 %v628, %v627
        %v638 = vsel %vm292, %v612, 0
        %640 = vmatprep.subr.bf16.mxu0 0
        %641 = vmatpush1.bf16.msra.mxu0 0
        %642 = vmatprep.subr.bf16.mxu0 0
        %643 = vmatpush1.bf16.msra.mxu0 0
        %644 = vmatprep.subr.bf16.mxu0 0
        %645 = vmatpush1.bf16.msra.mxu0 0
        %646 = vmatprep.subr.bf16.mxu0 0
        %647 = vmatpush1.bf16.msra.mxu0 0
        %648 = vmatprep.subr.bf16.mxu0 0
        %649 = vmatpush1.bf16.msra.mxu0 %v632
        %650 = vmatprep.subr.bf16.mxu0 0
        %651 = vmatpush1.bf16.msra.mxu0 %v631
        %652 = vmatprep.subr.bf16.mxu0 0
        %653 = vmatpush1.bf16.msra.mxu0 %v630
        %654 = vmatprep.subr.bf16.mxu0 0
        %655 = vmatpush1.bf16.msra.mxu0 %v629
        %656 = vmatprep.subr.bf16.mxu0 0
        %657 = vmatpush2.bf16.msra.mxu0 0
        %658 = vmatprep.subr.bf16.mxu0 0
        %659 = vmatpush2.bf16.msra.mxu0 0
        %660 = vmatprep.subr.bf16.mxu0 0
        %661 = vmatpush2.bf16.msra.mxu0 0
        %662 = vmatprep.subr.bf16.mxu0 0
        %663 = vmatpush2.bf16.msra.mxu0 0
        %664 = vmatprep.subr.bf16.mxu0 0
        %665 = vmatpush2.bf16.msra.mxu0 0
        %666 = vmatprep.subr.bf16.mxu0 0
        %667 = vmatpush2.bf16.msra.mxu0 0
        %668 = vmatprep.subr.bf16.mxu0 0
        %669 = vmatpush2.bf16.msra.mxu0 0
        %670 = vmatprep.subr.bf16.mxu0 0
        %671 = vmatpush2.bf16.msra.mxu0 0
        %672 = vmatprep.mubr.bf16.mxu0 0
        %673 = vmatmul.mubr.bf16.gmra.mxu0 %v638
        %v674 = vpop.f32.mrf.mxu0
        %v675 = vadd.f32 0.0, %v674
        %v676 = vpop.f32.mrf.mxu0
        %v677 = vpop.f32.mrf.mxu0
        %v678 = vadd.f32 0.0, %v677
        %v679 = vpop.f32.mrf.mxu0
        %680 = vdwg.mxu0
        %v681 = vadd.f32 %v579, %v675
        %v682 = vadd.f32 %v580, %v678
        %v683 = vld [vmem:[%s494] sm:$0xe]
        %s684 = scalar_lea.vmem %s1, 160
        %v685 = vld [vmem:[%s684] sm:$0xf]
        %v686 = vld [vmem:[%s684 + $0x4] sm:$0xf]
        %v687 = vld [vmem:[%s684 + $0x8] sm:$0xf]
        %v688 = vld [vmem:[%s684 + $0xc] sm:$0xf]
        %v689 = vld [vmem:[%s684 + $0x10] sm:$0xf]
        %v690 = vld [vmem:[%s684 + $0x14] sm:$0xf]
        %v691 = vld [vmem:[%s684 + $0x18] sm:$0xf]
        %v692 = vld [vmem:[%s684 + $0x1c] sm:$0xf]
        %v694 = vunpack.c.l.b16 %v683
        %v695 = vpack.c.b16 %v597, %v694
        %v696 = vrot.slane %v695, 1
        %v697 = vrot.slane %v600, 1
        %v698 = vsel %vm417, %v696, %v697
        %v707 = vunpack.c.l.b16 %v685
        %v708 = vunpack.c.l.b16 %v686
        %v709 = vunpack.c.l.b16 %v687
        %v710 = vunpack.c.l.b16 %v688
        %v711 = vunpack.c.l.b16 %v689
        %v712 = vunpack.c.l.b16 %v690
        %v713 = vunpack.c.l.b16 %v691
        %v714 = vunpack.c.l.b16 %v692
        %v715 = vpack.c.b16 %v708, %v707
        %v716 = vpack.c.b16 %v710, %v709
        %v717 = vpack.c.b16 %v712, %v711
        %v718 = vpack.c.b16 %v714, %v713
        %v724 = vsel %vm292, %v698, 0
        %726 = vmatprep.subr.bf16.mxu0 0
        %727 = vmatpush1.bf16.msra.mxu0 0
        %728 = vmatprep.subr.bf16.mxu0 0
        %729 = vmatpush1.bf16.msra.mxu0 0
        %730 = vmatprep.subr.bf16.mxu0 0
        %731 = vmatpush1.bf16.msra.mxu0 0
        %732 = vmatprep.subr.bf16.mxu0 0
        %733 = vmatpush1.bf16.msra.mxu0 0
        %734 = vmatprep.subr.bf16.mxu0 0
        %735 = vmatpush1.bf16.msra.mxu0 %v718
        %736 = vmatprep.subr.bf16.mxu0 0
        %737 = vmatpush1.bf16.msra.mxu0 %v717
        %738 = vmatprep.subr.bf16.mxu0 0
        %739 = vmatpush1.bf16.msra.mxu0 %v716
        %740 = vmatprep.subr.bf16.mxu0 0
        %741 = vmatpush1.bf16.msra.mxu0 %v715
        %742 = vmatprep.subr.bf16.mxu0 0
        %743 = vmatpush2.bf16.msra.mxu0 0
        %744 = vmatprep.subr.bf16.mxu0 0
        %745 = vmatpush2.bf16.msra.mxu0 0
        %746 = vmatprep.subr.bf16.mxu0 0
        %747 = vmatpush2.bf16.msra.mxu0 0
        %748 = vmatprep.subr.bf16.mxu0 0
        %749 = vmatpush2.bf16.msra.mxu0 0
        %750 = vmatprep.subr.bf16.mxu0 0
        %751 = vmatpush2.bf16.msra.mxu0 0
        %752 = vmatprep.subr.bf16.mxu0 0
        %753 = vmatpush2.bf16.msra.mxu0 0
        %754 = vmatprep.subr.bf16.mxu0 0
        %755 = vmatpush2.bf16.msra.mxu0 0
        %756 = vmatprep.subr.bf16.mxu0 0
        %757 = vmatpush2.bf16.msra.mxu0 0
        %758 = vmatprep.mubr.bf16.mxu0 0
        %759 = vmatmul.mubr.bf16.gmra.mxu0 %v724
        %v760 = vpop.f32.mrf.mxu0
        %v761 = vadd.f32 0.0, %v760
        %v762 = vpop.f32.mrf.mxu0
        %v763 = vpop.f32.mrf.mxu0
        %v764 = vadd.f32 0.0, %v763
        %v765 = vpop.f32.mrf.mxu0
        %766 = vdwg.mxu0
        %v767 = vadd.f32 %v681, %v761
        %v768 = vadd.f32 %v682, %v764
        %s769 = sadd.s32 %s217, 2
        %s770 = smul.u32 %s769, 3
        %s771 = smul.addr %s770, 4
        %s772 = scalar_lea.vmem %s203, %s771
        %v773 = vld [vmem:[%s772] sm:$0xf]
        %v774 = vld [vmem:[%s772 + $0x4] sm:$0xf]
        %s775 = scalar_lea.vmem %s1, 192
        %v776 = vld [vmem:[%s775] sm:$0xf]
        %v777 = vld [vmem:[%s775 + $0x4] sm:$0xf]
        %v778 = vld [vmem:[%s775 + $0x8] sm:$0xf]
        %v779 = vld [vmem:[%s775 + $0xc] sm:$0xf]
        %v780 = vld [vmem:[%s775 + $0x10] sm:$0xf]
        %v781 = vld [vmem:[%s775 + $0x14] sm:$0xf]
        %v782 = vld [vmem:[%s775 + $0x18] sm:$0xf]
        %v783 = vld [vmem:[%s775 + $0x1c] sm:$0xf]
        %v786 = vunpack.c.l.b16 %v773
        %v787 = vunpack.c.l.b16 %v774
        %v788 = vpack.c.b16 %v787, %v786
        %v797 = vunpack.c.l.b16 %v776
        %v798 = vunpack.c.l.b16 %v777
        %v799 = vunpack.c.l.b16 %v778
        %v800 = vunpack.c.l.b16 %v779
        %v801 = vunpack.c.l.b16 %v780
        %v802 = vunpack.c.l.b16 %v781
        %v803 = vunpack.c.l.b16 %v782
        %v804 = vunpack.c.l.b16 %v783
        %v805 = vpack.c.b16 %v798, %v797
        %v806 = vpack.c.b16 %v800, %v799
        %v807 = vpack.c.b16 %v802, %v801
        %v808 = vpack.c.b16 %v804, %v803
        %v814 = vsel %vm292, %v788, 0
        %816 = vmatprep.subr.bf16.mxu0 0
        %817 = vmatpush1.bf16.msra.mxu0 0
        %818 = vmatprep.subr.bf16.mxu0 0
        %819 = vmatpush1.bf16.msra.mxu0 0
        %820 = vmatprep.subr.bf16.mxu0 0
        %821 = vmatpush1.bf16.msra.mxu0 0
        %822 = vmatprep.subr.bf16.mxu0 0
        %823 = vmatpush1.bf16.msra.mxu0 0
        %824 = vmatprep.subr.bf16.mxu0 0
        %825 = vmatpush1.bf16.msra.mxu0 %v808
        %826 = vmatprep.subr.bf16.mxu0 0
        %827 = vmatpush1.bf16.msra.mxu0 %v807
        %828 = vmatprep.subr.bf16.mxu0 0
        %829 = vmatpush1.bf16.msra.mxu0 %v806
        %830 = vmatprep.subr.bf16.mxu0 0
        %831 = vmatpush1.bf16.msra.mxu0 %v805
        %832 = vmatprep.subr.bf16.mxu0 0
        %833 = vmatpush2.bf16.msra.mxu0 0
        %834 = vmatprep.subr.bf16.mxu0 0
        %835 = vmatpush2.bf16.msra.mxu0 0
        %836 = vmatprep.subr.bf16.mxu0 0
        %837 = vmatpush2.bf16.msra.mxu0 0
        %838 = vmatprep.subr.bf16.mxu0 0
        %839 = vmatpush2.bf16.msra.mxu0 0
        %840 = vmatprep.subr.bf16.mxu0 0
        %841 = vmatpush2.bf16.msra.mxu0 0
        %842 = vmatprep.subr.bf16.mxu0 0
        %843 = vmatpush2.bf16.msra.mxu0 0
        %844 = vmatprep.subr.bf16.mxu0 0
        %845 = vmatpush2.bf16.msra.mxu0 0
        %846 = vmatprep.subr.bf16.mxu0 0
        %847 = vmatpush2.bf16.msra.mxu0 0
        %848 = vmatprep.mubr.bf16.mxu0 0
        %849 = vmatmul.mubr.bf16.gmra.mxu0 %v814
        %v850 = vpop.f32.mrf.mxu0
        %v851 = vadd.f32 0.0, %v850
        %v852 = vpop.f32.mrf.mxu0
        %v853 = vpop.f32.mrf.mxu0
        %v854 = vadd.f32 0.0, %v853
        %v855 = vpop.f32.mrf.mxu0
        %856 = vdwg.mxu0
        %v857 = vadd.f32 %v767, %v851
        %v858 = vadd.f32 %v768, %v854
        %v859 = vld [vmem:[%s772] sm:$0xf]
        %v860 = vld [vmem:[%s772 + $0x4] sm:$0xf]
        %v861 = vld [vmem:[%s772 + $0x8] sm:$0x1]
        %s862 = scalar_lea.vmem %s1, 224
        %v863 = vld [vmem:[%s862] sm:$0xf]
        %v864 = vld [vmem:[%s862 + $0x4] sm:$0xf]
        %v865 = vld [vmem:[%s862 + $0x8] sm:$0xf]
        %v866 = vld [vmem:[%s862 + $0xc] sm:$0xf]
        %v867 = vld [vmem:[%s862 + $0x10] sm:$0xf]
        %v868 = vld [vmem:[%s862 + $0x14] sm:$0xf]
        %v869 = vld [vmem:[%s862 + $0x18] sm:$0xf]
        %v870 = vld [vmem:[%s862 + $0x1c] sm:$0xf]
        %v874 = vunpack.c.l.b16 %v859
        %v875 = vunpack.c.l.b16 %v860
        %v876 = vunpack.c.l.b16 %v861
        %v877 = vpack.c.b16 %v875, %v874
        %v878 = vpack.c.b16 %v876, %v876
        %v880 = vshrl.u32 %v877, 16
        %v882 = vshll.u32 %v877, 16
        %v884 = vrot.slane %v882, 1
        %v885 = vor.u32 %v880, %v884
        %v887 = vshll.u32 %v878, 16
        %v889 = vrot.slane %v887, 1
        %v890 = vsel %vm255, %v885, %v889
        %v899 = vunpack.c.l.b16 %v863
        %v900 = vunpack.c.l.b16 %v864
        %v901 = vunpack.c.l.b16 %v865
        %v902 = vunpack.c.l.b16 %v866
        %v903 = vunpack.c.l.b16 %v867
        %v904 = vunpack.c.l.b16 %v868
        %v905 = vunpack.c.l.b16 %v869
        %v906 = vunpack.c.l.b16 %v870
        %v907 = vpack.c.b16 %v900, %v899
        %v908 = vpack.c.b16 %v902, %v901
        %v909 = vpack.c.b16 %v904, %v903
        %v910 = vpack.c.b16 %v906, %v905
        %v916 = vsel %vm292, %v890, 0
        %918 = vmatprep.subr.bf16.mxu0 0
        %919 = vmatpush1.bf16.msra.mxu0 0
        %920 = vmatprep.subr.bf16.mxu0 0
        %921 = vmatpush1.bf16.msra.mxu0 0
        %922 = vmatprep.subr.bf16.mxu0 0
        %923 = vmatpush1.bf16.msra.mxu0 0
        %924 = vmatprep.subr.bf16.mxu0 0
        %925 = vmatpush1.bf16.msra.mxu0 0
        %926 = vmatprep.subr.bf16.mxu0 0
        %927 = vmatpush1.bf16.msra.mxu0 %v910
        %928 = vmatprep.subr.bf16.mxu0 0
        %929 = vmatpush1.bf16.msra.mxu0 %v909
        %930 = vmatprep.subr.bf16.mxu0 0
        %931 = vmatpush1.bf16.msra.mxu0 %v908
        %932 = vmatprep.subr.bf16.mxu0 0
        %933 = vmatpush1.bf16.msra.mxu0 %v907
        %934 = vmatprep.subr.bf16.mxu0 0
        %935 = vmatpush2.bf16.msra.mxu0 0
        %936 = vmatprep.subr.bf16.mxu0 0
        %937 = vmatpush2.bf16.msra.mxu0 0
        %938 = vmatprep.subr.bf16.mxu0 0
        %939 = vmatpush2.bf16.msra.mxu0 0
        %940 = vmatprep.subr.bf16.mxu0 0
        %941 = vmatpush2.bf16.msra.mxu0 0
        %942 = vmatprep.subr.bf16.mxu0 0
        %943 = vmatpush2.bf16.msra.mxu0 0
        %944 = vmatprep.subr.bf16.mxu0 0
        %945 = vmatpush2.bf16.msra.mxu0 0
        %946 = vmatprep.subr.bf16.mxu0 0
        %947 = vmatpush2.bf16.msra.mxu0 0
        %948 = vmatprep.subr.bf16.mxu0 0
        %949 = vmatpush2.bf16.msra.mxu0 0
        %950 = vmatprep.mubr.bf16.mxu0 0
        %951 = vmatmul.mubr.bf16.gmra.mxu0 %v916
        %v952 = vpop.f32.mrf.mxu0
        %v953 = vadd.f32 0.0, %v952
        %v954 = vpop.f32.mrf.mxu0
        %v955 = vpop.f32.mrf.mxu0
        %v956 = vadd.f32 0.0, %v955
        %v957 = vpop.f32.mrf.mxu0
        %958 = vdwg.mxu0
        %v959 = vadd.f32 %v857, %v953
        %v960 = vadd.f32 %v858, %v956
        %v961 = vld [vmem:[%s772] sm:$0xe]
        %s962 = scalar_lea.vmem %s1, 256
        %v963 = vld [vmem:[%s962] sm:$0xf]
        %v964 = vld [vmem:[%s962 + $0x4] sm:$0xf]
        %v965 = vld [vmem:[%s962 + $0x8] sm:$0xf]
        %v966 = vld [vmem:[%s962 + $0xc] sm:$0xf]
        %v967 = vld [vmem:[%s962 + $0x10] sm:$0xf]
        %v968 = vld [vmem:[%s962 + $0x14] sm:$0xf]
        %v969 = vld [vmem:[%s962 + $0x18] sm:$0xf]
        %v970 = vld [vmem:[%s962 + $0x1c] sm:$0xf]
        %v972 = vunpack.c.l.b16 %v961
        %v973 = vpack.c.b16 %v875, %v972
        %v974 = vrot.slane %v973, 1
        %v975 = vrot.slane %v878, 1
        %v976 = vsel %vm417, %v974, %v975
        %v985 = vunpack.c.l.b16 %v963
        %v986 = vunpack.c.l.b16 %v964
        %v987 = vunpack.c.l.b16 %v965
        %v988 = vunpack.c.l.b16 %v966
        %v989 = vunpack.c.l.b16 %v967
        %v990 = vunpack.c.l.b16 %v968
        %v991 = vunpack.c.l.b16 %v969
        %v992 = vunpack.c.l.b16 %v970
        %v993 = vpack.c.b16 %v986, %v985
        %v994 = vpack.c.b16 %v988, %v987
        %v995 = vpack.c.b16 %v990, %v989
        %v996 = vpack.c.b16 %v992, %v991
        %v1002 = vsel %vm292, %v976, 0
        %1004 = vmatprep.subr.bf16.mxu0 0
        %1005 = vmatpush1.bf16.msra.mxu0 0
        %1006 = vmatprep.subr.bf16.mxu0 0
        %1007 = vmatpush1.bf16.msra.mxu0 0
        %1008 = vmatprep.subr.bf16.mxu0 0
        %1009 = vmatpush1.bf16.msra.mxu0 0
        %1010 = vmatprep.subr.bf16.mxu0 0
        %1011 = vmatpush1.bf16.msra.mxu0 0
        %1012 = vmatprep.subr.bf16.mxu0 0
        %1013 = vmatpush1.bf16.msra.mxu0 %v996
        %1014 = vmatprep.subr.bf16.mxu0 0
        %1015 = vmatpush1.bf16.msra.mxu0 %v995
        %1016 = vmatprep.subr.bf16.mxu0 0
        %1017 = vmatpush1.bf16.msra.mxu0 %v994
        %1018 = vmatprep.subr.bf16.mxu0 0
        %1019 = vmatpush1.bf16.msra.mxu0 %v993
        %1020 = vmatprep.subr.bf16.mxu0 0
        %1021 = vmatpush2.bf16.msra.mxu0 0
        %1022 = vmatprep.subr.bf16.mxu0 0
        %1023 = vmatpush2.bf16.msra.mxu0 0
        %1024 = vmatprep.subr.bf16.mxu0 0
        %1025 = vmatpush2.bf16.msra.mxu0 0
        %1026 = vmatprep.subr.bf16.mxu0 0
        %1027 = vmatpush2.bf16.msra.mxu0 0
        %1028 = vmatprep.subr.bf16.mxu0 0
        %1029 = vmatpush2.bf16.msra.mxu0 0
        %1030 = vmatprep.subr.bf16.mxu0 0
        %1031 = vmatpush2.bf16.msra.mxu0 0
        %1032 = vmatprep.subr.bf16.mxu0 0
        %1033 = vmatpush2.bf16.msra.mxu0 0
        %1034 = vmatprep.subr.bf16.mxu0 0
        %1035 = vmatpush2.bf16.msra.mxu0 0
        %1036 = vmatprep.mubr.bf16.mxu0 0
        %1037 = vmatmul.mubr.bf16.gmra.mxu0 %v1002
        %v1038 = vpop.f32.mrf.mxu0
        %v1039 = vadd.f32 0.0, %v1038
        %v1040 = vpop.f32.mrf.mxu0
        %v1041 = vpop.f32.mrf.mxu0
        %v1042 = vadd.f32 0.0, %v1041
        %v1043 = vpop.f32.mrf.mxu0
        %1044 = vdwg.mxu0
        %v1045 = vadd.f32 %v959, %v1039
        %v1046 = vadd.f32 %v960, %v1042
        %s1047 = smul.u32 %s217, 16
        %s1048 = scalar_lea.vmem %s208, %s1047
        %1049 = vst [vmem:[%s1048] sm:$0xff] %v1045
        %1050 = vst [vmem:[%s1048 + $0x8] sm:$0xff] %v1046
        %v1051 = vadd.f32 %v1045, %v1046
        %v1052 = vrot.slane %v1051, 4
        %v1053 = vadd.f32 %v1051, %v1052
        %v1054 = vrot.slane %v1053, 2
        %v1055 = vadd.f32 %v1053, %v1054
        %v1056 = vrot.slane %v1055, 1
        %v1057 = vadd.f32 %v1055, %v1056
        %v1058 = vadd.f32 %v222, %v1057
        %v1059 = vmul.f32 %v1045, %v1045
        %v1060 = vmul.f32 %v1046, %v1046
        %v1061 = vadd.f32 %v1059, %v1060
        %v1062 = vrot.slane %v1061, 4
        %v1063 = vadd.f32 %v1061, %v1062
        %v1064 = vrot.slane %v1063, 2
        %v1065 = vadd.f32 %v1063, %v1064
        %v1066 = vrot.slane %v1065, 1
        %v1067 = vadd.f32 %v1065, %v1066
        %v1068 = vadd.f32 %v223, %v1067
      $region33: #{convblock_forward.3} parent=27 // loop_footer
        %s221 = sadd.s32 1, %s217
      $region34: #{convblock_forward.3} parent=27 // loop_footer_branch
        %216 = sbr.rel target = $region30
      $region35: #{convblock_forward.3} parent=27 // loop_exit
        _
      %1069 = vst [vmem:[%s211] sm:$0x1] %v222
      %1070 = vst [vmem:[%s214] sm:$0x1] %v223
      %p1071 = scmp.lt.s32.totalorder %s16, 1
      %s1072 = scalar_select %p1071, %s16, 1
      %s1073 = smul.addr %s1072, 32
      %s1074 = smul.addr %s1073, 8
      %s1075 = scalar_lea.vmem %s2, %s1074
      %p1076 = scmp.lt.s32.totalorder %s16, 1
      %s1077 = scalar_select %p1076, %s16, 1
      %s1078 = scalar_lea.vmem %s3, %s1077
      %p1079 = scmp.lt.s32.totalorder %s16, 1
      %s1080 = scalar_select %p1079, %s16, 1
      %s1081 = scalar_lea.vmem %s4, %s1080
      // Predicated region
      $region36: #{convblock_forward.3} parent=27 // pred_check
        %p1082 = pneg %p81
      $region37: #{convblock_forward.3} parent=27 // pred_check_branch
        %1084 = sbr.rel (%p1082) target = $region39
      $region38: #{convblock_forward.3} parent=27 // pred_region
        _
      $region39: #{convblock_forward.3} parent=27 // pred_fallthru
        _
      // Predicated region
      $region40: #{convblock_forward.3} parent=27 // pred_check
        %p1085 = pneg %p107
      $region41: #{convblock_forward.3} parent=27 // pred_check_branch
        %1087 = sbr.rel (%p1085) target = $region43
      $region42: #{convblock_forward.3} parent=27 // pred_region
        _
      $region43: #{convblock_forward.3} parent=27 // pred_fallthru
        _
      // Predicated region
      $region44: #{convblock_forward.3} parent=27 // pred_check
        %p1088 = pneg %p133
      $region45: #{convblock_forward.3} parent=27 // pred_check_branch
        %1090 = sbr.rel (%p1088) target = $region47
      $region46: #{convblock_forward.3} parent=27 // pred_region
        _
      $region47: #{convblock_forward.3} parent=27 // pred_fallthru
        _
    $region28: #{convblock_forward.3} parent=5 // pred_fallthru
      _
    %p1091 = scmp.le.s32.totalorder 2, %s11
    // Predicated region
    $region48: #{convblock_forward.3} parent=5 // pred_check
      %p1092 = pneg %p1091
    $region49: #{convblock_forward.3} parent=5 // pred_check_branch
      %1094 = sbr.rel (%p1092) target = $region51
    $region50: #{convblock_forward.3} parent=5 // pred_region
      %s1095 = ssub.s32 %s11, 2
      // Predicated region
      $region52: #{convblock_forward.3} parent=50 // pred_check
        %p1096 = pneg %p87
      $region53: #{convblock_forward.3} parent=50 // pred_check_branch
        %1098 = sbr.rel (%p1096) target = $region55
      $region54: #{convblock_forward.3} parent=50 // pred_region
        %p1099 = scmp.lt.s32.totalorder %s17, 1
        %s1100 = scalar_select %p1099, %s17, 1
        %s1101 = smul.addr %s1100, 32
        %s1102 = smul.addr %s1101, 8
        %s1103 = scalar_lea.vmem %s2, %s1102
      $region55: #{convblock_forward.3} parent=50 // pred_fallthru
        _
      // Predicated region
      $region56: #{convblock_forward.3} parent=50 // pred_check
        %p1104 = pneg %p113
      $region57: #{convblock_forward.3} parent=50 // pred_check_branch
        %1106 = sbr.rel (%p1104) target = $region59
      $region58: #{convblock_forward.3} parent=50 // pred_region
        %p1107 = scmp.lt.s32.totalorder %s17, 1
        %s1108 = scalar_select %p1107, %s17, 1
        %s1109 = scalar_lea.vmem %s3, %s1108
      $region59: #{convblock_forward.3} parent=50 // pred_fallthru
        _
      // Predicated region
      $region60: #{convblock_forward.3} parent=50 // pred_check
        %p1110 = pneg %p139
      $region61: #{convblock_forward.3} parent=50 // pred_check_branch
        %1112 = sbr.rel (%p1110) target = $region63
      $region62: #{convblock_forward.3} parent=50 // pred_region
        %p1113 = scmp.lt.s32.totalorder %s17, 1
        %s1114 = scalar_select %p1113, %s17, 1
        %s1115 = scalar_lea.vmem %s4, %s1114
      $region63: #{convblock_forward.3} parent=50 // pred_fallthru
        _
    $region51: #{convblock_forward.3} parent=5 // pred_fallthru
      _
  $region6: #{convblock_forward.3} parent=0 // loop_footer
    %s15 = sadd.s32 1, %s11
  $region7: #{convblock_forward.3} parent=0 // loop_footer_branch
    %10 = sbr.rel target = $region3
  $region8: #{convblock_forward.3} parent=0 // loop_exit
    _

// kernel: tile.18
$region0: #{tile.18}
  #allocation0 [shape = 's32[1]{0}', space=sflag, size = 0x4, scoped, tag = 'scoped memory for tile.18']
  %s0 = inlined_call_operand.vmem [shape: f32[8], index: 0, kind: input, shape index: {}]
  %s1 = inlined_call_operand.vmem [shape: f32[16,1,1,8], index: 1, kind: output, shape index: {}]
  // Predicated region
  $region2: #{tile.18} parent=0 // pred_check
    _
  $region3: #{tile.18} parent=0 // pred_check_branch
    %3 = sbr.rel (0) target = $region5
  $region4: #{tile.18} parent=0 // pred_region
    _
  $region5: #{tile.18} parent=0 // pred_fallthru
    _
  %v4 = vld [vmem:[%s0] ss:$0 sm:$0xff]
  %5 = vst [vmem:[%s1] sm:$0xff] %v4
  %s6 = scalar_lea.vmem %s1, 8
  %7 = vst [vmem:[%s6] sm:$0xff] %v4

// kernel: tile.19
$region0: #{tile.19}
  %s0 = inlined_call_operand.vmem [shape: f32[16,1,1,8], index: 0, kind: input, shape index: {}]
  %s1 = inlined_call_operand.vmem [shape: f32[1,128], index: 1, kind: output, shape index: {}]
  $region1: #{tile.19} parent=0
    #allocation0 [shape = 'u8[4096]{0}', space=vmem, size = 0x1000, scoped, tag = 'scoped mem for output reshape']
    %v2 = vld [vmem:[%s0] sm:$0x1]
    %vm3 = vcmask 64512
    %4 = vst.msk [vmem:[#allocation0] sm:$0x1] %vm3, %v2
    %s5 = scalar_lea.vmem %s0, 15
    %v6 = vld [vmem:[%s5] sm:$0x1]
    %7 = vrot.lane.b32.xlu0 %v6, 120
    %v8 = vpop.permute.xlu0 %7
    %vm9 = vcmask 1048512
    %10 = vst.msk [vmem:[#allocation0] sm:$0x1] %vm9, %v8
    %s11 = scalar_lea.vmem %s0, 14
    %v12 = vld [vmem:[%s11] sm:$0x1]
    %13 = vrot.lane.b32.xlu0 %v12, 112
    %v14 = vpop.permute.xlu0 %13
    %vm15 = vcmask 982912
    %16 = vst.msk [vmem:[#allocation0] sm:$0x1] %vm15, %v14
    %s17 = scalar_lea.vmem %s0, 13
    %v18 = vld [vmem:[%s17] sm:$0x1]
    %19 = vrot.lane.b32.xlu0 %v18, 104
    %v20 = vpop.permute.xlu0 %19
    %vm21 = vcmask 917312
    %22 = vst.msk [vmem:[#allocation0] sm:$0x1] %vm21, %v20
    %s23 = scalar_lea.vmem %s0, 12
    %v24 = vld [vmem:[%s23] sm:$0x1]
    %25 = vrot.lane.b32.xlu0 %v24, 96
    %v26 = vpop.permute.xlu0 %25
    %vm27 = vcmask 851712
    %28 = vst.msk [vmem:[#allocation0] sm:$0x1] %vm27, %v26
    %s29 = scalar_lea.vmem %s0, 11
    %v30 = vld [vmem:[%s29] sm:$0x1]
    %31 = vrot.lane.b32.xlu0 %v30, 88
    %v32 = vpop.permute.xlu0 %31
    %vm33 = vcmask 786112
    %34 = vst.msk [vmem:[#allocation0] sm:$0x1] %vm33, %v32
    %s35 = scalar_lea.vmem %s0, 10
    %v36 = vld [vmem:[%s35] sm:$0x1]
    %37 = vrot.lane.b32.xlu0 %v36, 80
    %v38 = vpop.permute.xlu0 %37
    %vm39 = vcmask 720512
    %40 = vst.msk [vmem:[#allocation0] sm:$0x1] %vm39, %v38
    %s41 = scalar_lea.vmem %s0, 9
    %v42 = vld [vmem:[%s41] sm:$0x1]
    %43 = vrot.lane.b32.xlu0 %v42, 72
    %v44 = vpop.permute.xlu0 %43
    %vm45 = vcmask 654912
    %46 = vst.msk [vmem:[#allocation0] sm:$0x1] %vm45, %v44
    %s47 = scalar_lea.vmem %s0, 8
    %v48 = vld [vmem:[%s47] sm:$0x1]
    %49 = vrot.lane.b32.xlu0 %v48, 64
    %v50 = vpop.permute.xlu0 %49
    %vm51 = vcmask 589312
    %52 = vst.msk [vmem:[#allocation0] sm:$0x1] %vm51, %v50
    %s53 = scalar_lea.vmem %s0, 7
    %v54 = vld [vmem:[%s53] sm:$0x1]
    %55 = vrot.lane.b32.xlu0 %v54, 56
    %v56 = vpop.permute.xlu0 %55
    %vm57 = vcmask 523712
    %58 = vst.msk [vmem:[#allocation0] sm:$0x1] %vm57, %v56
    %s59 = scalar_lea.vmem %s0, 6
    %v60 = vld [vmem:[%s59] sm:$0x1]
    %61 = vrot.lane.b32.xlu0 %v60, 48
    %v62 = vpop.permute.xlu0 %61
    %vm63 = vcmask 458112
    %64 = vst.msk [vmem:[#allocation0] sm:$0x1] %vm63, %v62
    %s65 = scalar_lea.vmem %s0, 5
    %v66 = vld [vmem:[%s65] sm:$0x1]
    %67 = vrot.lane.b32.xlu0 %v66, 40
    %v68 = vpop.permute.xlu0 %67
    %vm69 = vcmask 392512
    %70 = vst.msk [vmem:[#allocation0] sm:$0x1] %vm69, %v68
    %s71 = scalar_lea.vmem %s0, 4
    %v72 = vld [vmem:[%s71] sm:$0x1]
    %73 = vrot.lane.b32.xlu0 %v72, 32
    %v74 = vpop.permute.xlu0 %73
    %vm75 = vcmask 326912
    %76 = vst.msk [vmem:[#allocation0] sm:$0x1] %vm75, %v74
    %s77 = scalar_lea.vmem %s0, 3
    %v78 = vld [vmem:[%s77] sm:$0x1]
    %79 = vrot.lane.b32.xlu0 %v78, 24
    %v80 = vpop.permute.xlu0 %79
    %vm81 = vcmask 261312
    %82 = vst.msk [vmem:[#allocation0] sm:$0x1] %vm81, %v80
    %s83 = scalar_lea.vmem %s0, 2
    %v84 = vld [vmem:[%s83] sm:$0x1]
    %85 = vrot.lane.b32.xlu0 %v84, 16
    %v86 = vpop.permute.xlu0 %85
    %vm87 = vcmask 195712
    %88 = vst.msk [vmem:[#allocation0] sm:$0x1] %vm87, %v86
    %s89 = scalar_lea.vmem %s0, 1
    %v90 = vld [vmem:[%s89] sm:$0x1]
    %91 = vrot.lane.b32.xlu0 %v90, 8
    %v92 = vpop.permute.xlu0 %91
    %vm93 = vcmask 130112
    %94 = vst.msk [vmem:[#allocation0] sm:$0x1] %vm93, %v92
    %s96 = sshll.u32 1, 1
    %s97 = ssub.s32 %s96, 1
    %v99 = vld [vmem:[#allocation0] sm:%s97]
    %s100 = sshll.u32 1, 1
    %s101 = ssub.s32 %s100, 1
    %102 = vst [vmem:[%s1] sm:%s101] %v99

// kernel: convblock_forward.4
$region0: #{convblock_forward.4}
  #allocation0 [shape = 'u32[]', space=smem, size = 0x4, offset = 0x4, fixed_abs, tag = 'smem constant byte address 0x4 - core index']
  #allocation1 [shape = 'u32[144,128]{1,0:T(1,128)}', space=vmem, size = 0x12000, scoped, tag = 'internal scratch']
  #allocation2 [shape = 'f32[18,18,128]{2,1,0:T(8,128)}', space=vmem, size = 0x36000, scoped, tag = 'scratch operand']
  #allocation3 [shape = 'f32[1,1]{1,0:T(1,128)S(1)}', space=vmem, size = 0x200, scoped, tag = 'scoped memory for convblock_forward.4']
  %s0 = inlined_call_operand.vmem [shape: f32[2,16,16,128], index: 0, kind: input, shape index: {}]
  %s1 = inlined_call_operand.vmem [shape: bf16[3,3,128,128], index: 1, kind: input, shape index: {}]
  %s2 = inlined_call_operand.vmem [shape: f32[1,128], index: 2, kind: input, shape index: {}]
  %s3 = inlined_call_operand.vmem [shape: f32[1,128], index: 3, kind: input, shape index: {}]
  %s4 = inlined_call_operand.<no memory space> [shape: f32[1,1], index: 4, kind: input, shape index: {}]
  %s5 = inlined_call_operand.vmem [shape: f32[2,16,16,128], index: 5, kind: output, shape index: {0}]
  %s6 = inlined_call_operand.vmem [shape: f32[2,1,128], index: 6, kind: output, shape index: {1}]
  %s7 = inlined_call_operand.vmem [shape: f32[2,1,128], index: 7, kind: output, shape index: {2}]
  %8 = xla_tuple %s5, %s6, %s7
  %s9 = sld [smem:[#allocation0]]
  $region83: #{convblock_forward.4} parent=0
    _
  %s11 = ssub.s32 1, %s9
  %s12 = scalar_select 0, %s11, %s9
  %v13 = vstv %s4
  %14 = vst [vmem:[#allocation3] sm:$0x1] %v13
  loop: start=0, step=1, limit=4
  $region2: #{convblock_forward.4} parent=0 // loop_pre_header
    _
  $region3: #{convblock_forward.4} parent=0 // loop_header
    %s16 = sphi 0, %s20
    %p17 = scmp.ge.s32.totalorder %s16, 4
    %s26 = sphi 0, %s28
    %s29 = sphi 0, %s26
    %s30 = sphi 0, %s29
    %s46 = sphi 0, %s30
    %s50 = sphi 0, %s50
    %s52 = sphi 0, %s50
    %s53 = sphi 0, %s52
    %s67 = sphi 0, %s53
    %s71 = sphi 0, %s71
    %s73 = sphi 0, %s71
    %s74 = sphi 0, %s73
    %s88 = sphi 0, %s74
    %s92 = sphi 0, %s92
    %s94 = sphi 0, %s92
    %s95 = sphi 0, %s94
    %s109 = sphi 0, %s95
    %s113 = sphi 0, %s113
    %s115 = sphi 0, %s113
    %s116 = sphi 0, %s115
    %s130 = sphi 0, %s116
    %s136 = sphi 0, %s138
    %s139 = sphi 0, %s136
    %s140 = sphi 0, %s139
    %s156 = sphi 0, %s140
    %s162 = sphi 0, %s164
    %s165 = sphi 0, %s162
    %s166 = sphi 0, %s165
    %s182 = sphi 0, %s166
    %s188 = sphi 0, %s190
    %s191 = sphi 0, %s188
    %s192 = sphi 0, %s191
    %s208 = sphi 0, %s192
  $region4: #{convblock_forward.4} parent=0 // loop_header_branch
    %19 = sbr.rel (%p17) target = $region8
  $region5: #{convblock_forward.4} parent=0 // loop_body
    %s21 = ssub.s32 %s16, 1
    %s22 = ssub.s32 %s16, 2
    %s23 = sadd.s32 %s16, 1
    %s24 = ssub.s32 %s16, %s23
    %p25 = scmp.eq.s32.totalorder %s24, 0
    %s27 = sadd.s32 %s26, 1
    %s28 = scalar_select %p25, %s26, %s27
    %p31 = pneg %p25
    %p32 = scmp.eq.s32.totalorder %s16, 1
    %p33 = por %p31, %p32
    %p34 = scmp.ne.s32.totalorder %s26, %s29
    %p35 = scmp.eq.s32.totalorder %s16, 0
    %p36 = por %p34, %p35
    %p37 = scmp.ne.s32.totalorder %s26, %s29
    %p38 = scmp.eq.s32.totalorder %s21, 1
    %p39 = por %p37, %p38
    %p40 = scmp.ne.s32.totalorder %s29, %s30
    %p41 = scmp.eq.s32.totalorder %s21, 0
    %p42 = por %p40, %p41
    %p43 = scmp.ne.s32.totalorder %s29, %s30
    %p44 = scmp.eq.s32.totalorder %s22, 1
    %p45 = por %p43, %p44
    %p47 = scmp.ne.s32.totalorder %s30, %s46
    %p48 = scmp.eq.s32.totalorder %s22, 0
    %p49 = por %p47, %p48
    %s51 = sadd.s32 %s50, 1
    %p54 = scmp.eq.s32.totalorder %s16, 1
    %p55 = scmp.ne.s32.totalorder %s50, %s52
    %p56 = scmp.eq.s32.totalorder %s16, 0
    %p57 = por %p55, %p56
    %p58 = scmp.ne.s32.totalorder %s50, %s52
    %p59 = scmp.eq.s32.totalorder %s21, 1
    %p60 = por %p58, %p59
    %p61 = scmp.ne.s32.totalorder %s52, %s53
    %p62 = scmp.eq.s32.totalorder %s21, 0
    %p63 = por %p61, %p62
    %p64 = scmp.ne.s32.totalorder %s52, %s53
    %p65 = scmp.eq.s32.totalorder %s22, 1
    %p66 = por %p64, %p65
    %p68 = scmp.ne.s32.totalorder %s53, %s67
    %p69 = scmp.eq.s32.totalorder %s22, 0
    %p70 = por %p68, %p69
    %s72 = sadd.s32 %s71, 1
    %p75 = scmp.eq.s32.totalorder %s16, 1
    %p76 = scmp.ne.s32.totalorder %s71, %s73
    %p77 = scmp.eq.s32.totalorder %s16, 0
    %p78 = por %p76, %p77
    %p79 = scmp.ne.s32.totalorder %s71, %s73
    %p80 = scmp.eq.s32.totalorder %s21, 1
    %p81 = por %p79, %p80
    %p82 = scmp.ne.s32.totalorder %s73, %s74
    %p83 = scmp.eq.s32.totalorder %s21, 0
    %p84 = por %p82, %p83
    %p85 = scmp.ne.s32.totalorder %s73, %s74
    %p86 = scmp.eq.s32.totalorder %s22, 1
    %p87 = por %p85, %p86
    %p89 = scmp.ne.s32.totalorder %s74, %s88
    %p90 = scmp.eq.s32.totalorder %s22, 0
    %p91 = por %p89, %p90
    %s93 = sadd.s32 %s92, 1
    %p96 = scmp.eq.s32.totalorder %s16, 1
    %p97 = scmp.ne.s32.totalorder %s92, %s94
    %p98 = scmp.eq.s32.totalorder %s16, 0
    %p99 = por %p97, %p98
    %p100 = scmp.ne.s32.totalorder %s92, %s94
    %p101 = scmp.eq.s32.totalorder %s21, 1
    %p102 = por %p100, %p101
    %p103 = scmp.ne.s32.totalorder %s94, %s95
    %p104 = scmp.eq.s32.totalorder %s21, 0
    %p105 = por %p103, %p104
    %p106 = scmp.ne.s32.totalorder %s94, %s95
    %p107 = scmp.eq.s32.totalorder %s22, 1
    %p108 = por %p106, %p107
    %p110 = scmp.ne.s32.totalorder %s95, %s109
    %p111 = scmp.eq.s32.totalorder %s22, 0
    %p112 = por %p110, %p111
    %s114 = sadd.s32 %s113, 1
    %p117 = scmp.eq.s32.totalorder %s16, 1
    %p118 = scmp.ne.s32.totalorder %s113, %s115
    %p119 = scmp.eq.s32.totalorder %s16, 0
    %p120 = por %p118, %p119
    %p121 = scmp.ne.s32.totalorder %s113, %s115
    %p122 = scmp.eq.s32.totalorder %s21, 1
    %p123 = por %p121, %p122
    %p124 = scmp.ne.s32.totalorder %s115, %s116
    %p125 = scmp.eq.s32.totalorder %s21, 0
    %p126 = por %p124, %p125
    %p127 = scmp.ne.s32.totalorder %s115, %s116
    %p128 = scmp.eq.s32.totalorder %s22, 1
    %p129 = por %p127, %p128
    %p131 = scmp.ne.s32.totalorder %s116, %s130
    %p132 = scmp.eq.s32.totalorder %s22, 0
    %p133 = por %p131, %p132
    %s134 = ssub.s32 %s16, %s23
    %p135 = scmp.eq.s32.totalorder %s134, 0
    %s137 = sadd.s32 %s136, 1
    %s138 = scalar_select %p135, %s136, %s137
    %p141 = pneg %p135
    %p142 = scmp.eq.s32.totalorder %s16, 1
    %p143 = por %p141, %p142
    %p144 = scmp.ne.s32.totalorder %s136, %s139
    %p145 = scmp.eq.s32.totalorder %s16, 0
    %p146 = por %p144, %p145
    %p147 = scmp.ne.s32.totalorder %s136, %s139
    %p148 = scmp.eq.s32.totalorder %s21, 1
    %p149 = por %p147, %p148
    %p150 = scmp.ne.s32.totalorder %s139, %s140
    %p151 = scmp.eq.s32.totalorder %s21, 0
    %p152 = por %p150, %p151
    %p153 = scmp.ne.s32.totalorder %s139, %s140
    %p154 = scmp.eq.s32.totalorder %s22, 1
    %p155 = por %p153, %p154
    %p157 = scmp.ne.s32.totalorder %s140, %s156
    %p158 = scmp.eq.s32.totalorder %s22, 0
    %p159 = por %p157, %p158
    %s160 = ssub.s32 %s16, %s23
    %p161 = scmp.eq.s32.totalorder %s160, 0
    %s163 = sadd.s32 %s162, 1
    %s164 = scalar_select %p161, %s162, %s163
    %p167 = pneg %p161
    %p168 = scmp.eq.s32.totalorder %s16, 1
    %p169 = por %p167, %p168
    %p170 = scmp.ne.s32.totalorder %s162, %s165
    %p171 = scmp.eq.s32.totalorder %s16, 0
    %p172 = por %p170, %p171
    %p173 = scmp.ne.s32.totalorder %s162, %s165
    %p174 = scmp.eq.s32.totalorder %s21, 1
    %p175 = por %p173, %p174
    %p176 = scmp.ne.s32.totalorder %s165, %s166
    %p177 = scmp.eq.s32.totalorder %s21, 0
    %p178 = por %p176, %p177
    %p179 = scmp.ne.s32.totalorder %s165, %s166
    %p180 = scmp.eq.s32.totalorder %s22, 1
    %p181 = por %p179, %p180
    %p183 = scmp.ne.s32.totalorder %s166, %s182
    %p184 = scmp.eq.s32.totalorder %s22, 0
    %p185 = por %p183, %p184
    %s186 = ssub.s32 %s16, %s23
    %p187 = scmp.eq.s32.totalorder %s186, 0
    %s189 = sadd.s32 %s188, 1
    %s190 = scalar_select %p187, %s188, %s189
    %p193 = pneg %p187
    %p194 = scmp.eq.s32.totalorder %s16, 1
    %p195 = por %p193, %p194
    %p196 = scmp.ne.s32.totalorder %s188, %s191
    %p197 = scmp.eq.s32.totalorder %s16, 0
    %p198 = por %p196, %p197
    %p199 = scmp.ne.s32.totalorder %s188, %s191
    %p200 = scmp.eq.s32.totalorder %s21, 1
    %p201 = por %p199, %p200
    %p202 = scmp.ne.s32.totalorder %s191, %s192
    %p203 = scmp.eq.s32.totalorder %s21, 0
    %p204 = por %p202, %p203
    %p205 = scmp.ne.s32.totalorder %s191, %s192
    %p206 = scmp.eq.s32.totalorder %s22, 1
    %p207 = por %p205, %p206
    %p209 = scmp.ne.s32.totalorder %s192, %s208
    %p210 = scmp.eq.s32.totalorder %s22, 0
    %p211 = por %p209, %p210
    %p212 = scmp.le.s32.totalorder 1, %s16
    %p213 = scmp.lt.s32.totalorder %s16, 3
    %p214 = pnand %p212, %p213
    %p215 = pneg %p214
    // Predicated region
    $region9: #{convblock_forward.4} parent=5 // pred_check
      _
    $region10: #{convblock_forward.4} parent=5 // pred_check_branch
      %217 = sbr.rel (%p214) target = $region12
    $region11: #{convblock_forward.4} parent=5 // pred_region
      %s218 = ssub.s32 %s16, 1
      // Predicated region
      $region13: #{convblock_forward.4} parent=11 // pred_check
        %p219 = pneg %p63
      $region14: #{convblock_forward.4} parent=11 // pred_check_branch
        %221 = sbr.rel (%p219) target = $region16
      $region15: #{convblock_forward.4} parent=11 // pred_region
        _
      $region16: #{convblock_forward.4} parent=11 // pred_fallthru
        _
      // Predicated region
      $region17: #{convblock_forward.4} parent=11 // pred_check
        %p222 = pneg %p84
      $region18: #{convblock_forward.4} parent=11 // pred_check_branch
        %224 = sbr.rel (%p222) target = $region20
      $region19: #{convblock_forward.4} parent=11 // pred_region
        _
      $region20: #{convblock_forward.4} parent=11 // pred_fallthru
        _
      // Predicated region
      $region21: #{convblock_forward.4} parent=11 // pred_check
        %p225 = pneg %p105
      $region22: #{convblock_forward.4} parent=11 // pred_check_branch
        %227 = sbr.rel (%p225) target = $region24
      $region23: #{convblock_forward.4} parent=11 // pred_region
        _
      $region24: #{convblock_forward.4} parent=11 // pred_fallthru
        _
      // Predicated region
      $region25: #{convblock_forward.4} parent=11 // pred_check
        %p228 = pneg %p126
      $region26: #{convblock_forward.4} parent=11 // pred_check_branch
        %230 = sbr.rel (%p228) target = $region28
      $region27: #{convblock_forward.4} parent=11 // pred_region
        _
      $region28: #{convblock_forward.4} parent=11 // pred_fallthru
        _
    $region12: #{convblock_forward.4} parent=5 // pred_fallthru
      _
    %p231 = scmp.lt.s32.totalorder %s16, 2
    // Predicated region
    $region29: #{convblock_forward.4} parent=5 // pred_check
      %p232 = pneg %p231
    $region30: #{convblock_forward.4} parent=5 // pred_check_branch
      %234 = sbr.rel (%p232) target = $region32
    $region31: #{convblock_forward.4} parent=5 // pred_region
      // Predicated region
      $region33: #{convblock_forward.4} parent=31 // pred_check
        %p235 = pneg %p36
      $region34: #{convblock_forward.4} parent=31 // pred_check_branch
        %237 = sbr.rel (%p235) target = $region36
      $region35: #{convblock_forward.4} parent=31 // pred_region
        %p238 = scmp.lt.s32.totalorder %s16, 1
        %s239 = scalar_select %p238, %s16, 1
        %s240 = smul.addr %s239, 32
        %s241 = smul.addr %s240, 8
        %s242 = scalar_lea.vmem %s0, %s241
      $region36: #{convblock_forward.4} parent=31 // pred_fallthru
        _
    $region32: #{convblock_forward.4} parent=5 // pred_fallthru
      _
    %p243 = scmp.le.s32.totalorder 1, %s16
    %p244 = scmp.lt.s32.totalorder %s16, 3
    %p245 = pnand %p243, %p244
    %p246 = pneg %p245
    // Predicated region
    $region37: #{convblock_forward.4} parent=5 // pred_check
      _
    $region38: #{convblock_forward.4} parent=5 // pred_check_branch
      %248 = sbr.rel (%p245) target = $region40
    $region39: #{convblock_forward.4} parent=5 // pred_region
      %s249 = ssub.s32 %s16, 1
      %p250 = scmp.lt.s32.totalorder %s21, 1
      %s251 = scalar_select %p250, %s21, 1
      %s252 = smul.addr %s251, 32
      %s253 = smul.addr %s252, 8
      %s254 = scalar_lea.vmem %s0, %s253
      %p255 = pneg %p42
      %p256 = pneg %p39
      %p257 = pneg %p63
      %p258 = pneg %p60
      %p259 = pneg %p84
      %p260 = pneg %p81
      %p261 = pneg %p105
      %p262 = pneg %p102
      %p263 = pneg %p126
      %p264 = pneg %p123
      %p265 = pneg %p152
      %p266 = pneg %p149
      %p267 = scmp.lt.s32.totalorder %s21, 1
      %s268 = scalar_select %p267, %s21, 1
      %s269 = smul.addr %s268, 32
      %s270 = smul.addr %s269, 8
      %s271 = scalar_lea.vmem %s5, %s270
      %p272 = pneg %p178
      %p273 = pneg %p175
      %p274 = scmp.lt.s32.totalorder %s21, 1
      %s275 = scalar_select %p274, %s21, 1
      %s276 = scalar_lea.vmem %s6, %s275
      %p277 = pneg %p204
      %p278 = pneg %p201
      %p279 = scmp.lt.s32.totalorder %s21, 1
      %s280 = scalar_select %p279, %s21, 1
      %s281 = scalar_lea.vmem %s7, %s280
      %p282 = scmp.lt.s32.totalorder %s21, 1
      %s283 = scalar_select %p282, %s21, 1
      %s284 = smul.addr %s283, 32
      %s285 = smul.addr %s284, 8
      %s286 = scalar_lea.vmem %s0, %s285
      %p287 = scmp.lt.s32.totalorder %s21, 1
      %s288 = scalar_select %p287, %s21, 1
      %s289 = smul.addr %s288, 32
      %s290 = smul.addr %s289, 8
      %s291 = scalar_lea.vmem %s5, %s290
      %p292 = scmp.lt.s32.totalorder %s21, 1
      %s293 = scalar_select %p292, %s21, 1
      %s294 = scalar_lea.vmem %s6, %s293
      %p295 = scmp.lt.s32.totalorder %s21, 1
      %s296 = scalar_select %p295, %s21, 1
      %s297 = scalar_lea.vmem %s7, %s296
      %v299 = vld [vmem:[%s2] sm:$0x1]
      %v300 = vld [vmem:[%s3] sm:$0x1]
      %v301 = vld [vmem:[#allocation3] sm:$0x1]
      %s302 = vtos %v301
      %303 = vst [vmem:[#allocation2] sm:$0xff] 0.0
      %304 = vst [vmem:[#allocation2 + $0x8] sm:$0xff] 0.0
      %305 = vst [vmem:[#allocation2 + $0x10] sm:$0x3] 0.0
      %s306 = scalar_lea.vmem [#allocation2], 408
      %307 = vst [vmem:[%s306] sm:$0xff] 0.0
      %308 = vst [vmem:[%s306 + $0x8] sm:$0xff] 0.0
      %309 = vst [vmem:[%s306 + $0x10] sm:$0x3] 0.0
      loop: start=0, step=1, limit=16
      $region41: #{convblock_forward.4} parent=39 // loop_pre_header
        _
      $region42: #{convblock_forward.4} parent=39 // loop_header
        %s311 = sphi 0, %s315
        %p312 = scmp.ge.s32.totalorder %s311, 16
      $region43: #{convblock_forward.4} parent=39 // loop_header_branch
        %314 = sbr.rel (%p312) target = $region47
      $region44: #{convblock_forward.4} parent=39 // loop_body
        %s316 = smul.u32 %s311, 16
        %s317 = scalar_lea.vmem %s286, %s316
        %v318 = vld [vmem:[%s317] sm:$0xff]
        %v319 = vld [vmem:[%s317 + $0x8] sm:$0xff]
        %v321 = vlaneseq
        %v322 = vshrl.u32 %v321, 7
        %v323 = vsub.s32 0, %v322
        %v324 = vrot.slane %v299, %v323
        %v326 = vmul.f32 %v318, %v324
        %v327 = vmul.f32 %v319, %v324
        %v329 = vlaneseq
        %v330 = vshrl.u32 %v329, 7
        %v331 = vsub.s32 0, %v330
        %v332 = vrot.slane %v300, %v331
        %v334 = vadd.f32 %v326, %v332
        %v335 = vadd.f32 %v327, %v332
        %vm336 = vcmp.ge.f32.partialorder %v334, 0.0
        %vm337 = vcmp.ge.f32.partialorder %v335, 0.0
        %v338 = vstv %s302
        %v339 = vmul.f32 %v338, %v334
        %v340 = vmul.f32 %v338, %v335
        %v341 = vsel %vm336, %v334, %v339
        %v342 = vsel %vm337, %v335, %v340
        %s343 = sadd.s32 %s311, 1
        %s344 = smul.u32 %s343, 24
        %s345 = scalar_lea.vmem [#allocation2], %s344
        %346 = vst [vmem:[%s345] sm:$0x1] 0.0
        %347 = vst [vmem:[%s345 + $0x1] sm:$0xff] %v341
        %348 = vst [vmem:[%s345 + $0x9] sm:$0xff] %v342
        %349 = vst [vmem:[%s345 + $0x11] sm:$0x1] 0.0
      $region45: #{convblock_forward.4} parent=39 // loop_footer
        %s315 = sadd.s32 1, %s311
      $region46: #{convblock_forward.4} parent=39 // loop_footer_branch
        %310 = sbr.rel target = $region42
      $region47: #{convblock_forward.4} parent=39 // loop_exit
        _
      loop: start=0, step=1, limit=16
      $region48: #{convblock_forward.4} parent=39 // loop_pre_header
        _
      $region49: #{convblock_forward.4} parent=39 // loop_header
        %s351 = sphi 0, %s355
        %p352 = scmp.ge.s32.totalorder %s351, 16
        %v356 = vphi 0.0, %v1371
        %v357 = vphi 0.0, %v1381
      $region50: #{convblock_forward.4} parent=39 // loop_header_branch
        %354 = sbr.rel (%p352) target = $region54
      $region51: #{convblock_forward.4} parent=39 // loop_body
        %s358 = smul.u32 %s351, 24
        %s359 = scalar_lea.vmem [#allocation2], %s358
        %v360 = vld [vmem:[%s359] sm:$0xff]
        %v361 = vld [vmem:[%s359 + $0x8] sm:$0xff]
        %v362 = vpack.c.bf16 %v361, %v360
        %v363 = vld [vmem:[%s1] sm:$0xf]
        %v364 = vld [vmem:[%s1 + $0x4] sm:$0xf]
        %v365 = vld [vmem:[%s1 + $0x8] sm:$0xf]
        %v366 = vld [vmem:[%s1 + $0xc] sm:$0xf]
        %v367 = vld [vmem:[%s1 + $0x10] sm:$0xf]
        %v368 = vld [vmem:[%s1 + $0x14] sm:$0xf]
        %v369 = vld [vmem:[%s1 + $0x18] sm:$0xf]
        %v370 = vld [vmem:[%s1 + $0x1c] sm:$0xf]
        %v371 = vld [vmem:[%s1 + $0x20] sm:$0xf]
        %v372 = vld [vmem:[%s1 + $0x24] sm:$0xf]
        %v373 = vld [vmem:[%s1 + $0x28] sm:$0xf]
        %v374 = vld [vmem:[%s1 + $0x2c] sm:$0xf]
        %v375 = vld [vmem:[%s1 + $0x30] sm:$0xf]
        %v376 = vld [vmem:[%s1 + $0x34] sm:$0xf]
        %v377 = vld [vmem:[%s1 + $0x38] sm:$0xf]
        %v378 = vld [vmem:[%s1 + $0x3c] sm:$0xf]
        %v379 = vld [vmem:[%s359 + $0x1] sm:$0xff]
        %v380 = vld [vmem:[%s359 + $0x9] sm:$0xff]
        %v381 = vpack.c.bf16 %v380, %v379
        %s382 = scalar_lea.vmem %s1, 64
        %v383 = vld [vmem:[%s382] sm:$0xf]
        %v384 = vld [vmem:[%s382 + $0x4] sm:$0xf]
        %v385 = vld [vmem:[%s382 + $0x8] sm:$0xf]
        %v386 = vld [vmem:[%s382 + $0xc] sm:$0xf]
        %v387 = vld [vmem:[%s382 + $0x10] sm:$0xf]
        %v388 = vld [vmem:[%s382 + $0x14] sm:$0xf]
        %v389 = vld [vmem:[%s382 + $0x18] sm:$0xf]
        %v390 = vld [vmem:[%s382 + $0x1c] sm:$0xf]
        %v391 = vld [vmem:[%s382 + $0x20] sm:$0xf]
        %v392 = vld [vmem:[%s382 + $0x24] sm:$0xf]
        %v393 = vld [vmem:[%s382 + $0x28] sm:$0xf]
        %v394 = vld [vmem:[%s382 + $0x2c] sm:$0xf]
        %v395 = vld [vmem:[%s382 + $0x30] sm:$0xf]
        %v396 = vld [vmem:[%s382 + $0x34] sm:$0xf]
        %v397 = vld [vmem:[%s382 + $0x38] sm:$0xf]
        %v398 = vld [vmem:[%s382 + $0x3c] sm:$0xf]
        %v415 = vunpack.c.l.b16 %v383
        %v416 = vunpack.c.l.b16 %v384
        %v417 = vunpack.c.l.b16 %v385
        %v418 = vunpack.c.l.b16 %v386
        %v419 = vunpack.c.l.b16 %v387
        %v420 = vunpack.c.l.b16 %v388
        %v421 = vunpack.c.l.b16 %v389
        %v422 = vunpack.c.l.b16 %v390
        %v423 = vunpack.c.l.b16 %v391
        %v424 = vunpack.c.l.b16 %v392
        %v425 = vunpack.c.l.b16 %v393
        %v426 = vunpack.c.l.b16 %v394
        %v427 = vunpack.c.l.b16 %v395
        %v428 = vunpack.c.l.b16 %v396
        %v429 = vunpack.c.l.b16 %v397
        %v430 = vunpack.c.l.b16 %v398
        %v431 = vpack.c.b16 %v416, %v415
        %v432 = vpack.c.b16 %v418, %v417
        %v433 = vpack.c.b16 %v420, %v419
        %v434 = vpack.c.b16 %v422, %v421
        %v435 = vpack.c.b16 %v424, %v423
        %v436 = vpack.c.b16 %v426, %v425
        %v437 = vpack.c.b16 %v428, %v427
        %v438 = vpack.c.b16 %v430, %v429
        %447 = vmatprep.subr.bf16.mxu0 0
        %448 = vmatpush1.bf16.msra.mxu0 %v438
        %449 = vmatprep.subr.bf16.mxu0 0
        %450 = vmatpush1.bf16.msra.mxu0 %v437
        %451 = vmatprep.subr.bf16.mxu0 0
        %452 = vmatpush1.bf16.msra.mxu0 %v436
        %453 = vmatprep.subr.bf16.mxu0 0
        %454 = vmatpush1.bf16.msra.mxu0 %v435
        %455 = vmatprep.subr.bf16.mxu0 0
        %456 = vmatpush1.bf16.msra.mxu0 %v434
        %457 = vmatprep.subr.bf16.mxu0 0
        %458 = vmatpush1.bf16.msra.mxu0 %v433
        %459 = vmatprep.subr.bf16.mxu0 0
        %460 = vmatpush1.bf16.msra.mxu0 %v432
        %461 = vmatprep.subr.bf16.mxu0 0
        %462 = vmatpush1.bf16.msra.mxu0 %v431
        %463 = vmatprep.subr.bf16.mxu0 0
        %464 = vmatpush2.bf16.msra.mxu0 0
        %465 = vmatprep.subr.bf16.mxu0 0
        %466 = vmatpush2.bf16.msra.mxu0 0
        %467 = vmatprep.subr.bf16.mxu0 0
        %468 = vmatpush2.bf16.msra.mxu0 0
        %469 = vmatprep.subr.bf16.mxu0 0
        %470 = vmatpush2.bf16.msra.mxu0 0
        %471 = vmatprep.subr.bf16.mxu0 0
        %472 = vmatpush2.bf16.msra.mxu0 0
        %473 = vmatprep.subr.bf16.mxu0 0
        %474 = vmatpush2.bf16.msra.mxu0 0
        %475 = vmatprep.subr.bf16.mxu0 0
        %476 = vmatpush2.bf16.msra.mxu0 0
        %477 = vmatprep.subr.bf16.mxu0 0
        %478 = vmatpush2.bf16.msra.mxu0 0
        %479 = vmatprep.mubr.bf16.mxu0 0
        %480 = vmatmul.mubr.bf16.gmra.mxu0 %v381
        %v481 = vpop.f32.mrf.mxu0
        %v482 = vadd.f32 0.0, %v481
        %v483 = vpop.f32.mrf.mxu0
        %v484 = vpop.f32.mrf.mxu0
        %v485 = vadd.f32 0.0, %v484
        %v486 = vpop.f32.mrf.mxu0
        %487 = vdwg.mxu0
        %v504 = vunpack.c.l.b16 %v363
        %v505 = vunpack.c.l.b16 %v364
        %v506 = vunpack.c.l.b16 %v365
        %v507 = vunpack.c.l.b16 %v366
        %v508 = vunpack.c.l.b16 %v367
        %v509 = vunpack.c.l.b16 %v368
        %v510 = vunpack.c.l.b16 %v369
        %v511 = vunpack.c.l.b16 %v370
        %v512 = vunpack.c.l.b16 %v371
        %v513 = vunpack.c.l.b16 %v372
        %v514 = vunpack.c.l.b16 %v373
        %v515 = vunpack.c.l.b16 %v374
        %v516 = vunpack.c.l.b16 %v375
        %v517 = vunpack.c.l.b16 %v376
        %v518 = vunpack.c.l.b16 %v377
        %v519 = vunpack.c.l.b16 %v378
        %v520 = vpack.c.b16 %v505, %v504
        %v521 = vpack.c.b16 %v507, %v506
        %v522 = vpack.c.b16 %v509, %v508
        %v523 = vpack.c.b16 %v511, %v510
        %v524 = vpack.c.b16 %v513, %v512
        %v525 = vpack.c.b16 %v515, %v514
        %v526 = vpack.c.b16 %v517, %v516
        %v527 = vpack.c.b16 %v519, %v518
        %536 = vmatprep.subr.bf16.mxu0 0
        %537 = vmatpush1.bf16.msra.mxu0 %v527
        %538 = vmatprep.subr.bf16.mxu0 0
        %539 = vmatpush1.bf16.msra.mxu0 %v526
        %540 = vmatprep.subr.bf16.mxu0 0
        %541 = vmatpush1.bf16.msra.mxu0 %v525
        %542 = vmatprep.subr.bf16.mxu0 0
        %543 = vmatpush1.bf16.msra.mxu0 %v524
        %544 = vmatprep.subr.bf16.mxu0 0
        %545 = vmatpush1.bf16.msra.mxu0 %v523
        %546 = vmatprep.subr.bf16.mxu0 0
        %547 = vmatpush1.bf16.msra.mxu0 %v522
        %548 = vmatprep.subr.bf16.mxu0 0
        %549 = vmatpush1.bf16.msra.mxu0 %v521
        %550 = vmatprep.subr.bf16.mxu0 0
        %551 = vmatpush1.bf16.msra.mxu0 %v520
        %552 = vmatprep.subr.bf16.mxu0 0
        %553 = vmatpush2.bf16.msra.mxu0 0
        %554 = vmatprep.subr.bf16.mxu0 0
        %555 = vmatpush2.bf16.msra.mxu0 0
        %556 = vmatprep.subr.bf16.mxu0 0
        %557 = vmatpush2.bf16.msra.mxu0 0
        %558 = vmatprep.subr.bf16.mxu0 0
        %559 = vmatpush2.bf16.msra.mxu0 0
        %560 = vmatprep.subr.bf16.mxu0 0
        %561 = vmatpush2.bf16.msra.mxu0 0
        %562 = vmatprep.subr.bf16.mxu0 0
        %563 = vmatpush2.bf16.msra.mxu0 0
        %564 = vmatprep.subr.bf16.mxu0 0
        %565 = vmatpush2.bf16.msra.mxu0 0
        %566 = vmatprep.subr.bf16.mxu0 0
        %567 = vmatpush2.bf16.msra.mxu0 0
        %568 = vmatprep.mubr.bf16.mxu0 0
        %569 = vmatmul.mubr.bf16.gmra.mxu0 %v362
        %v570 = vpop.f32.mrf.mxu0
        %v571 = vadd.f32 %v482, %v570
        %v572 = vpop.f32.mrf.mxu0
        %v573 = vpop.f32.mrf.mxu0
        %v574 = vadd.f32 %v485, %v573
        %v575 = vpop.f32.mrf.mxu0
        %576 = vdwg.mxu0
        %v577 = vld [vmem:[%s359 + $0x2] sm:$0xff]
        %v578 = vld [vmem:[%s359 + $0xa] sm:$0xff]
        %v579 = vpack.c.bf16 %v578, %v577
        %s580 = scalar_lea.vmem %s1, 128
        %v581 = vld [vmem:[%s580] sm:$0xf]
        %v582 = vld [vmem:[%s580 + $0x4] sm:$0xf]
        %v583 = vld [vmem:[%s580 + $0x8] sm:$0xf]
        %v584 = vld [vmem:[%s580 + $0xc] sm:$0xf]
        %v585 = vld [vmem:[%s580 + $0x10] sm:$0xf]
        %v586 = vld [vmem:[%s580 + $0x14] sm:$0xf]
        %v587 = vld [vmem:[%s580 + $0x18] sm:$0xf]
        %v588 = vld [vmem:[%s580 + $0x1c] sm:$0xf]
        %v589 = vld [vmem:[%s580 + $0x20] sm:$0xf]
        %v590 = vld [vmem:[%s580 + $0x24] sm:$0xf]
        %v591 = vld [vmem:[%s580 + $0x28] sm:$0xf]
        %v592 = vld [vmem:[%s580 + $0x2c] sm:$0xf]
        %v593 = vld [vmem:[%s580 + $0x30] sm:$0xf]
        %v594 = vld [vmem:[%s580 + $0x34] sm:$0xf]
        %v595 = vld [vmem:[%s580 + $0x38] sm:$0xf]
        %v596 = vld [vmem:[%s580 + $0x3c] sm:$0xf]
        %v613 = vunpack.c.l.b16 %v581
        %v614 = vunpack.c.l.b16 %v582
        %v615 = vunpack.c.l.b16 %v583
        %v616 = vunpack.c.l.b16 %v584
        %v617 = vunpack.c.l.b16 %v585
        %v618 = vunpack.c.l.b16 %v586
        %v619 = vunpack.c.l.b16 %v587
        %v620 = vunpack.c.l.b16 %v588
        %v621 = vunpack.c.l.b16 %v589
        %v622 = vunpack.c.l.b16 %v590
        %v623 = vunpack.c.l.b16 %v591
        %v624 = vunpack.c.l.b16 %v592
        %v625 = vunpack.c.l.b16 %v593
        %v626 = vunpack.c.l.b16 %v594
        %v627 = vunpack.c.l.b16 %v595
        %v628 = vunpack.c.l.b16 %v596
        %v629 = vpack.c.b16 %v614, %v613
        %v630 = vpack.c.b16 %v616, %v615
        %v631 = vpack.c.b16 %v618, %v617
        %v632 = vpack.c.b16 %v620, %v619
        %v633 = vpack.c.b16 %v622, %v621
        %v634 = vpack.c.b16 %v624, %v623
        %v635 = vpack.c.b16 %v626, %v625
        %v636 = vpack.c.b16 %v628, %v627
        %645 = vmatprep.subr.bf16.mxu0 0
        %646 = vmatpush1.bf16.msra.mxu0 %v636
        %647 = vmatprep.subr.bf16.mxu0 0
        %648 = vmatpush1.bf16.msra.mxu0 %v635
        %649 = vmatprep.subr.bf16.mxu0 0
        %650 = vmatpush1.bf16.msra.mxu0 %v634
        %651 = vmatprep.subr.bf16.mxu0 0
        %652 = vmatpush1.bf16.msra.mxu0 %v633
        %653 = vmatprep.subr.bf16.mxu0 0
        %654 = vmatpush1.bf16.msra.mxu0 %v632
        %655 = vmatprep.subr.bf16.mxu0 0
        %656 = vmatpush1.bf16.msra.mxu0 %v631
        %657 = vmatprep.subr.bf16.mxu0 0
        %658 = vmatpush1.bf16.msra.mxu0 %v630
        %659 = vmatprep.subr.bf16.mxu0 0
        %660 = vmatpush1.bf16.msra.mxu0 %v629
        %661 = vmatprep.subr.bf16.mxu0 0
        %662 = vmatpush2.bf16.msra.mxu0 0
        %663 = vmatprep.subr.bf16.mxu0 0
        %664 = vmatpush2.bf16.msra.mxu0 0
        %665 = vmatprep.subr.bf16.mxu0 0
        %666 = vmatpush2.bf16.msra.mxu0 0
        %667 = vmatprep.subr.bf16.mxu0 0
        %668 = vmatpush2.bf16.msra.mxu0 0
        %669 = vmatprep.subr.bf16.mxu0 0
        %670 = vmatpush2.bf16.msra.mxu0 0
        %671 = vmatprep.subr.bf16.mxu0 0
        %672 = vmatpush2.bf16.msra.mxu0 0
        %673 = vmatprep.subr.bf16.mxu0 0
        %674 = vmatpush2.bf16.msra.mxu0 0
        %675 = vmatprep.subr.bf16.mxu0 0
        %676 = vmatpush2.bf16.msra.mxu0 0
        %677 = vmatprep.mubr.bf16.mxu0 0
        %678 = vmatmul.mubr.bf16.gmra.mxu0 %v579
        %v679 = vpop.f32.mrf.mxu0
        %v680 = vadd.f32 0.0, %v679
        %v681 = vpop.f32.mrf.mxu0
        %v682 = vpop.f32.mrf.mxu0
        %v683 = vadd.f32 0.0, %v682
        %v684 = vpop.f32.mrf.mxu0
        %685 = vdwg.mxu0
        %v686 = vadd.f32 %v571, %v680
        %v687 = vadd.f32 %v574, %v683
        %s688 = sadd.s32 %s351, 1
        %s689 = smul.u32 %s688, 24
        %s690 = scalar_lea.vmem [#allocation2], %s689
        %v691 = vld [vmem:[%s690] sm:$0xff]
        %v692 = vld [vmem:[%s690 + $0x8] sm:$0xff]
        %v693 = vpack.c.bf16 %v692, %v691
        %s694 = scalar_lea.vmem %s1, 192
        %v695 = vld [vmem:[%s694] sm:$0xf]
        %v696 = vld [vmem:[%s694 + $0x4] sm:$0xf]
        %v697 = vld [vmem:[%s694 + $0x8] sm:$0xf]
        %v698 = vld [vmem:[%s694 + $0xc] sm:$0xf]
        %v699 = vld [vmem:[%s694 + $0x10] sm:$0xf]
        %v700 = vld [vmem:[%s694 + $0x14] sm:$0xf]
        %v701 = vld [vmem:[%s694 + $0x18] sm:$0xf]
        %v702 = vld [vmem:[%s694 + $0x1c] sm:$0xf]
        %v703 = vld [vmem:[%s694 + $0x20] sm:$0xf]
        %v704 = vld [vmem:[%s694 + $0x24] sm:$0xf]
        %v705 = vld [vmem:[%s694 + $0x28] sm:$0xf]
        %v706 = vld [vmem:[%s694 + $0x2c] sm:$0xf]
        %v707 = vld [vmem:[%s694 + $0x30] sm:$0xf]
        %v708 = vld [vmem:[%s694 + $0x34] sm:$0xf]
        %v709 = vld [vmem:[%s694 + $0x38] sm:$0xf]
        %v710 = vld [vmem:[%s694 + $0x3c] sm:$0xf]
        %v727 = vunpack.c.l.b16 %v695
        %v728 = vunpack.c.l.b16 %v696
        %v729 = vunpack.c.l.b16 %v697
        %v730 = vunpack.c.l.b16 %v698
        %v731 = vunpack.c.l.b16 %v699
        %v732 = vunpack.c.l.b16 %v700
        %v733 = vunpack.c.l.b16 %v701
        %v734 = vunpack.c.l.b16 %v702
        %v735 = vunpack.c.l.b16 %v703
        %v736 = vunpack.c.l.b16 %v704
        %v737 = vunpack.c.l.b16 %v705
        %v738 = vunpack.c.l.b16 %v706
        %v739 = vunpack.c.l.b16 %v707
        %v740 = vunpack.c.l.b16 %v708
        %v741 = vunpack.c.l.b16 %v709
        %v742 = vunpack.c.l.b16 %v710
        %v743 = vpack.c.b16 %v728, %v727
        %v744 = vpack.c.b16 %v730, %v729
        %v745 = vpack.c.b16 %v732, %v731
        %v746 = vpack.c.b16 %v734, %v733
        %v747 = vpack.c.b16 %v736, %v735
        %v748 = vpack.c.b16 %v738, %v737
        %v749 = vpack.c.b16 %v740, %v739
        %v750 = vpack.c.b16 %v742, %v741
        %759 = vmatprep.subr.bf16.mxu0 0
        %760 = vmatpush1.bf16.msra.mxu0 %v750
        %761 = vmatprep.subr.bf16.mxu0 0
        %762 = vmatpush1.bf16.msra.mxu0 %v749
        %763 = vmatprep.subr.bf16.mxu0 0
        %764 = vmatpush1.bf16.msra.mxu0 %v748
        %765 = vmatprep.subr.bf16.mxu0 0
        %766 = vmatpush1.bf16.msra.mxu0 %v747
        %767 = vmatprep.subr.bf16.mxu0 0
        %768 = vmatpush1.bf16.msra.mxu0 %v746
        %769 = vmatprep.subr.bf16.mxu0 0
        %770 = vmatpush1.bf16.msra.mxu0 %v745
        %771 = vmatprep.subr.bf16.mxu0 0
        %772 = vmatpush1.bf16.msra.mxu0 %v744
        %773 = vmatprep.subr.bf16.mxu0 0
        %774 = vmatpush1.bf16.msra.mxu0 %v743
        %775 = vmatprep.subr.bf16.mxu0 0
        %776 = vmatpush2.bf16.msra.mxu0 0
        %777 = vmatprep.subr.bf16.mxu0 0
        %778 = vmatpush2.bf16.msra.mxu0 0
        %779 = vmatprep.subr.bf16.mxu0 0
        %780 = vmatpush2.bf16.msra.mxu0 0
        %781 = vmatprep.subr.bf16.mxu0 0
        %782 = vmatpush2.bf16.msra.mxu0 0
        %783 = vmatprep.subr.bf16.mxu0 0
        %784 = vmatpush2.bf16.msra.mxu0 0
        %785 = vmatprep.subr.bf16.mxu0 0
        %786 = vmatpush2.bf16.msra.mxu0 0
        %787 = vmatprep.subr.bf16.mxu0 0
        %788 = vmatpush2.bf16.msra.mxu0 0
        %789 = vmatprep.subr.bf16.mxu0 0
        %790 = vmatpush2.bf16.msra.mxu0 0
        %791 = vmatprep.mubr.bf16.mxu0 0
        %792 = vmatmul.mubr.bf16.gmra.mxu0 %v693
        %v793 = vpop.f32.mrf.mxu0
        %v794 = vadd.f32 0.0, %v793
        %v795 = vpop.f32.mrf.mxu0
        %v796 = vpop.f32.mrf.mxu0
        %v797 = vadd.f32 0.0, %v796
        %v798 = vpop.f32.mrf.mxu0
        %799 = vdwg.mxu0
        %v800 = vadd.f32 %v686, %v794
        %v801 = vadd.f32 %v687, %v797
        %v802 = vld [vmem:[%s690 + $0x1] sm:$0xff]
        %v803 = vld [vmem:[%s690 + $0x9] sm:$0xff]
        %v804 = vpack.c.bf16 %v803, %v802
        %s805 = scalar_lea.vmem %s1, 256
        %v806 = vld [vmem:[%s805] sm:$0xf]
        %v807 = vld [vmem:[%s805 + $0x4] sm:$0xf]
        %v808 = vld [vmem:[%s805 + $0x8] sm:$0xf]
        %v809 = vld [vmem:[%s805 + $0xc] sm:$0xf]
        %v810 = vld [vmem:[%s805 + $0x10] sm:$0xf]
        %v811 = vld [vmem:[%s805 + $0x14] sm:$0xf]
        %v812 = vld [vmem:[%s805 + $0x18] sm:$0xf]
        %v813 = vld [vmem:[%s805 + $0x1c] sm:$0xf]
        %v814 = vld [vmem:[%s805 + $0x20] sm:$0xf]
        %v815 = vld [vmem:[%s805 + $0x24] sm:$0xf]
        %v816 = vld [vmem:[%s805 + $0x28] sm:$0xf]
        %v817 = vld [vmem:[%s805 + $0x2c] sm:$0xf]
        %v818 = vld [vmem:[%s805 + $0x30] sm:$0xf]
        %v819 = vld [vmem:[%s805 + $0x34] sm:$0xf]
        %v820 = vld [vmem:[%s805 + $0x38] sm:$0xf]
        %v821 = vld [vmem:[%s805 + $0x3c] sm:$0xf]
        %v838 = vunpack.c.l.b16 %v806
        %v839 = vunpack.c.l.b16 %v807
        %v840 = vunpack.c.l.b16 %v808
        %v841 = vunpack.c.l.b16 %v809
        %v842 = vunpack.c.l.b16 %v810
        %v843 = vunpack.c.l.b16 %v811
        %v844 = vunpack.c.l.b16 %v812
        %v845 = vunpack.c.l.b16 %v813
        %v846 = vunpack.c.l.b16 %v814
        %v847 = vunpack.c.l.b16 %v815
        %v848 = vunpack.c.l.b16 %v816
        %v849 = vunpack.c.l.b16 %v817
        %v850 = vunpack.c.l.b16 %v818
        %v851 = vunpack.c.l.b16 %v819
        %v852 = vunpack.c.l.b16 %v820
        %v853 = vunpack.c.l.b16 %v821
        %v854 = vpack.c.b16 %v839, %v838
        %v855 = vpack.c.b16 %v841, %v840
        %v856 = vpack.c.b16 %v843, %v842
        %v857 = vpack.c.b16 %v845, %v844
        %v858 = vpack.c.b16 %v847, %v846
        %v859 = vpack.c.b16 %v849, %v848
        %v860 = vpack.c.b16 %v851, %v850
        %v861 = vpack.c.b16 %v853, %v852
        %870 = vmatprep.subr.bf16.mxu0 0
        %871 = vmatpush1.bf16.msra.mxu0 %v861
        %872 = vmatprep.subr.bf16.mxu0 0
        %873 = vmatpush1.bf16.msra.mxu0 %v860
        %874 = vmatprep.subr.bf16.mxu0 0
        %875 = vmatpush1.bf16.msra.mxu0 %v859
        %876 = vmatprep.subr.bf16.mxu0 0
        %877 = vmatpush1.bf16.msra.mxu0 %v858
        %878 = vmatprep.subr.bf16.mxu0 0
        %879 = vmatpush1.bf16.msra.mxu0 %v857
        %880 = vmatprep.subr.bf16.mxu0 0
        %881 = vmatpush1.bf16.msra.mxu0 %v856
        %882 = vmatprep.subr.bf16.mxu0 0
        %883 = vmatpush1.bf16.msra.mxu0 %v855
        %884 = vmatprep.subr.bf16.mxu0 0
        %885 = vmatpush1.bf16.msra.mxu0 %v854
        %886 = vmatprep.subr.bf16.mxu0 0
        %887 = vmatpush2.bf16.msra.mxu0 0
        %888 = vmatprep.subr.bf16.mxu0 0
        %889 = vmatpush2.bf16.msra.mxu0 0
        %890 = vmatprep.subr.bf16.mxu0 0
        %891 = vmatpush2.bf16.msra.mxu0 0
        %892 = vmatprep.subr.bf16.mxu0 0
        %893 = vmatpush2.bf16.msra.mxu0 0
        %894 = vmatprep.subr.bf16.mxu0 0
        %895 = vmatpush2.bf16.msra.mxu0 0
        %896 = vmatprep.subr.bf16.mxu0 0
        %897 = vmatpush2.bf16.msra.mxu0 0
        %898 = vmatprep.subr.bf16.mxu0 0
        %899 = vmatpush2.bf16.msra.mxu0 0
        %900 = vmatprep.subr.bf16.mxu0 0
        %901 = vmatpush2.bf16.msra.mxu0 0
        %902 = vmatprep.mubr.bf16.mxu0 0
        %903 = vmatmul.mubr.bf16.gmra.mxu0 %v804
        %v904 = vpop.f32.mrf.mxu0
        %v905 = vadd.f32 0.0, %v904
        %v906 = vpop.f32.mrf.mxu0
        %v907 = vpop.f32.mrf.mxu0
        %v908 = vadd.f32 0.0, %v907
        %v909 = vpop.f32.mrf.mxu0
        %910 = vdwg.mxu0
        %v911 = vadd.f32 %v800, %v905
        %v912 = vadd.f32 %v801, %v908
        %v913 = vld [vmem:[%s690 + $0x2] sm:$0xff]
        %v914 = vld [vmem:[%s690 + $0xa] sm:$0xff]
        %v915 = vpack.c.bf16 %v914, %v913
        %s916 = scalar_lea.vmem %s1, 320
        %v917 = vld [vmem:[%s916] sm:$0xf]
        %v918 = vld [vmem:[%s916 + $0x4] sm:$0xf]
        %v919 = vld [vmem:[%s916 + $0x8] sm:$0xf]
        %v920 = vld [vmem:[%s916 + $0xc] sm:$0xf]
        %v921 = vld [vmem:[%s916 + $0x10] sm:$0xf]
        %v922 = vld [vmem:[%s916 + $0x14] sm:$0xf]
        %v923 = vld [vmem:[%s916 + $0x18] sm:$0xf]
        %v924 = vld [vmem:[%s916 + $0x1c] sm:$0xf]
        %v925 = vld [vmem:[%s916 + $0x20] sm:$0xf]
        %v926 = vld [vmem:[%s916 + $0x24] sm:$0xf]
        %v927 = vld [vmem:[%s916 + $0x28] sm:$0xf]
        %v928 = vld [vmem:[%s916 + $0x2c] sm:$0xf]
        %v929 = vld [vmem:[%s916 + $0x30] sm:$0xf]
        %v930 = vld [vmem:[%s916 + $0x34] sm:$0xf]
        %v931 = vld [vmem:[%s916 + $0x38] sm:$0xf]
        %v932 = vld [vmem:[%s916 + $0x3c] sm:$0xf]
        %v949 = vunpack.c.l.b16 %v917
        %v950 = vunpack.c.l.b16 %v918
        %v951 = vunpack.c.l.b16 %v919
        %v952 = vunpack.c.l.b16 %v920
        %v953 = vunpack.c.l.b16 %v921
        %v954 = vunpack.c.l.b16 %v922
        %v955 = vunpack.c.l.b16 %v923
        %v956 = vunpack.c.l.b16 %v924
        %v957 = vunpack.c.l.b16 %v925
        %v958 = vunpack.c.l.b16 %v926
        %v959 = vunpack.c.l.b16 %v927
        %v960 = vunpack.c.l.b16 %v928
        %v961 = vunpack.c.l.b16 %v929
        %v962 = vunpack.c.l.b16 %v930
        %v963 = vunpack.c.l.b16 %v931
        %v964 = vunpack.c.l.b16 %v932
        %v965 = vpack.c.b16 %v950, %v949
        %v966 = vpack.c.b16 %v952, %v951
        %v967 = vpack.c.b16 %v954, %v953
        %v968 = vpack.c.b16 %v956, %v955
        %v969 = vpack.c.b16 %v958, %v957
        %v970 = vpack.c.b16 %v960, %v959
        %v971 = vpack.c.b16 %v962, %v961
        %v972 = vpack.c.b16 %v964, %v963
        %981 = vmatprep.subr.bf16.mxu0 0
        %982 = vmatpush1.bf16.msra.mxu0 %v972
        %983 = vmatprep.subr.bf16.mxu0 0
        %984 = vmatpush1.bf16.msra.mxu0 %v971
        %985 = vmatprep.subr.bf16.mxu0 0
        %986 = vmatpush1.bf16.msra.mxu0 %v970
        %987 = vmatprep.subr.bf16.mxu0 0
        %988 = vmatpush1.bf16.msra.mxu0 %v969
        %989 = vmatprep.subr.bf16.mxu0 0
        %990 = vmatpush1.bf16.msra.mxu0 %v968
        %991 = vmatprep.subr.bf16.mxu0 0
        %992 = vmatpush1.bf16.msra.mxu0 %v967
        %993 = vmatprep.subr.bf16.mxu0 0
        %994 = vmatpush1.bf16.msra.mxu0 %v966
        %995 = vmatprep.subr.bf16.mxu0 0
        %996 = vmatpush1.bf16.msra.mxu0 %v965
        %997 = vmatprep.subr.bf16.mxu0 0
        %998 = vmatpush2.bf16.msra.mxu0 0
        %999 = vmatprep.subr.bf16.mxu0 0
        %1000 = vmatpush2.bf16.msra.mxu0 0
        %1001 = vmatprep.subr.bf16.mxu0 0
        %1002 = vmatpush2.bf16.msra.mxu0 0
        %1003 = vmatprep.subr.bf16.mxu0 0
        %1004 = vmatpush2.bf16.msra.mxu0 0
        %1005 = vmatprep.subr.bf16.mxu0 0
        %1006 = vmatpush2.bf16.msra.mxu0 0
        %1007 = vmatprep.subr.bf16.mxu0 0
        %1008 = vmatpush2.bf16.msra.mxu0 0
        %1009 = vmatprep.subr.bf16.mxu0 0
        %1010 = vmatpush2.bf16.msra.mxu0 0
        %1011 = vmatprep.subr.bf16.mxu0 0
        %1012 = vmatpush2.bf16.msra.mxu0 0
        %1013 = vmatprep.mubr.bf16.mxu0 0
        %1014 = vmatmul.mubr.bf16.gmra.mxu0 %v915
        %v1015 = vpop.f32.mrf.mxu0
        %v1016 = vadd.f32 0.0, %v1015
        %v1017 = vpop.f32.mrf.mxu0
        %v1018 = vpop.f32.mrf.mxu0
        %v1019 = vadd.f32 0.0, %v1018
        %v1020 = vpop.f32.mrf.mxu0
        %1021 = vdwg.mxu0
        %v1022 = vadd.f32 %v911, %v1016
        %v1023 = vadd.f32 %v912, %v1019
        %s1024 = sadd.s32 %s351, 2
        %s1025 = smul.u32 %s1024, 24
        %s1026 = scalar_lea.vmem [#allocation2], %s1025
        %v1027 = vld [vmem:[%s1026] sm:$0xff]
        %v1028 = vld [vmem:[%s1026 + $0x8] sm:$0xff]
        %v1029 = vpack.c.bf16 %v1028, %v1027
        %s1030 = scalar_lea.vmem %s1, 384
        %v1031 = vld [vmem:[%s1030] sm:$0xf]
        %v1032 = vld [vmem:[%s1030 + $0x4] sm:$0xf]
        %v1033 = vld [vmem:[%s1030 + $0x8] sm:$0xf]
        %v1034 = vld [vmem:[%s1030 + $0xc] sm:$0xf]
        %v1035 = vld [vmem:[%s1030 + $0x10] sm:$0xf]
        %v1036 = vld [vmem:[%s1030 + $0x14] sm:$0xf]
        %v1037 = vld [vmem:[%s1030 + $0x18] sm:$0xf]
        %v1038 = vld [vmem:[%s1030 + $0x1c] sm:$0xf]
        %v1039 = vld [vmem:[%s1030 + $0x20] sm:$0xf]
        %v1040 = vld [vmem:[%s1030 + $0x24] sm:$0xf]
        %v1041 = vld [vmem:[%s1030 + $0x28] sm:$0xf]
        %v1042 = vld [vmem:[%s1030 + $0x2c] sm:$0xf]
        %v1043 = vld [vmem:[%s1030 + $0x30] sm:$0xf]
        %v1044 = vld [vmem:[%s1030 + $0x34] sm:$0xf]
        %v1045 = vld [vmem:[%s1030 + $0x38] sm:$0xf]
        %v1046 = vld [vmem:[%s1030 + $0x3c] sm:$0xf]
        %v1063 = vunpack.c.l.b16 %v1031
        %v1064 = vunpack.c.l.b16 %v1032
        %v1065 = vunpack.c.l.b16 %v1033
        %v1066 = vunpack.c.l.b16 %v1034
        %v1067 = vunpack.c.l.b16 %v1035
        %v1068 = vunpack.c.l.b16 %v1036
        %v1069 = vunpack.c.l.b16 %v1037
        %v1070 = vunpack.c.l.b16 %v1038
        %v1071 = vunpack.c.l.b16 %v1039
        %v1072 = vunpack.c.l.b16 %v1040
        %v1073 = vunpack.c.l.b16 %v1041
        %v1074 = vunpack.c.l.b16 %v1042
        %v1075 = vunpack.c.l.b16 %v1043
        %v1076 = vunpack.c.l.b16 %v1044
        %v1077 = vunpack.c.l.b16 %v1045
        %v1078 = vunpack.c.l.b16 %v1046
        %v1079 = vpack.c.b16 %v1064, %v1063
        %v1080 = vpack.c.b16 %v1066, %v1065
        %v1081 = vpack.c.b16 %v1068, %v1067
        %v1082 = vpack.c.b16 %v1070, %v1069
        %v1083 = vpack.c.b16 %v1072, %v1071
        %v1084 = vpack.c.b16 %v1074, %v1073
        %v1085 = vpack.c.b16 %v1076, %v1075
        %v1086 = vpack.c.b16 %v1078, %v1077
        %1095 = vmatprep.subr.bf16.mxu0 0
        %1096 = vmatpush1.bf16.msra.mxu0 %v1086
        %1097 = vmatprep.subr.bf16.mxu0 0
        %1098 = vmatpush1.bf16.msra.mxu0 %v1085
        %1099 = vmatprep.subr.bf16.mxu0 0
        %1100 = vmatpush1.bf16.msra.mxu0 %v1084
        %1101 = vmatprep.subr.bf16.mxu0 0
        %1102 = vmatpush1.bf16.msra.mxu0 %v1083
        %1103 = vmatprep.subr.bf16.mxu0 0
        %1104 = vmatpush1.bf16.msra.mxu0 %v1082
        %1105 = vmatprep.subr.bf16.mxu0 0
        %1106 = vmatpush1.bf16.msra.mxu0 %v1081
        %1107 = vmatprep.subr.bf16.mxu0 0
        %1108 = vmatpush1.bf16.msra.mxu0 %v1080
        %1109 = vmatprep.subr.bf16.mxu0 0
        %1110 = vmatpush1.bf16.msra.mxu0 %v1079
        %1111 = vmatprep.subr.bf16.mxu0 0
        %1112 = vmatpush2.bf16.msra.mxu0 0
        %1113 = vmatprep.subr.bf16.mxu0 0
        %1114 = vmatpush2.bf16.msra.mxu0 0
        %1115 = vmatprep.subr.bf16.mxu0 0
        %1116 = vmatpush2.bf16.msra.mxu0 0
        %1117 = vmatprep.subr.bf16.mxu0 0
        %1118 = vmatpush2.bf16.msra.mxu0 0
        %1119 = vmatprep.subr.bf16.mxu0 0
        %1120 = vmatpush2.bf16.msra.mxu0 0
        %1121 = vmatprep.subr.bf16.mxu0 0
        %1122 = vmatpush2.bf16.msra.mxu0 0
        %1123 = vmatprep.subr.bf16.mxu0 0
        %1124 = vmatpush2.bf16.msra.mxu0 0
        %1125 = vmatprep.subr.bf16.mxu0 0
        %1126 = vmatpush2.bf16.msra.mxu0 0
        %1127 = vmatprep.mubr.bf16.mxu0 0
        %1128 = vmatmul.mubr.bf16.gmra.mxu0 %v1029
        %v1129 = vpop.f32.mrf.mxu0
        %v1130 = vadd.f32 0.0, %v1129
        %v1131 = vpop.f32.mrf.mxu0
        %v1132 = vpop.f32.mrf.mxu0
        %v1133 = vadd.f32 0.0, %v1132
        %v1134 = vpop.f32.mrf.mxu0
        %1135 = vdwg.mxu0
        %v1136 = vadd.f32 %v1022, %v1130
        %v1137 = vadd.f32 %v1023, %v1133
        %v1138 = vld [vmem:[%s1026 + $0x1] sm:$0xff]
        %v1139 = vld [vmem:[%s1026 + $0x9] sm:$0xff]
        %v1140 = vpack.c.bf16 %v1139, %v1138
        %s1141 = scalar_lea.vmem %s1, 448
        %v1142 = vld [vmem:[%s1141] sm:$0xf]
        %v1143 = vld [vmem:[%s1141 + $0x4] sm:$0xf]
        %v1144 = vld [vmem:[%s1141 + $0x8] sm:$0xf]
        %v1145 = vld [vmem:[%s1141 + $0xc] sm:$0xf]
        %v1146 = vld [vmem:[%s1141 + $0x10] sm:$0xf]
        %v1147 = vld [vmem:[%s1141 + $0x14] sm:$0xf]
        %v1148 = vld [vmem:[%s1141 + $0x18] sm:$0xf]
        %v1149 = vld [vmem:[%s1141 + $0x1c] sm:$0xf]
        %v1150 = vld [vmem:[%s1141 + $0x20] sm:$0xf]
        %v1151 = vld [vmem:[%s1141 + $0x24] sm:$0xf]
        %v1152 = vld [vmem:[%s1141 + $0x28] sm:$0xf]
        %v1153 = vld [vmem:[%s1141 + $0x2c] sm:$0xf]
        %v1154 = vld [vmem:[%s1141 + $0x30] sm:$0xf]
        %v1155 = vld [vmem:[%s1141 + $0x34] sm:$0xf]
        %v1156 = vld [vmem:[%s1141 + $0x38] sm:$0xf]
        %v1157 = vld [vmem:[%s1141 + $0x3c] sm:$0xf]
        %v1174 = vunpack.c.l.b16 %v1142
        %v1175 = vunpack.c.l.b16 %v1143
        %v1176 = vunpack.c.l.b16 %v1144
        %v1177 = vunpack.c.l.b16 %v1145
        %v1178 = vunpack.c.l.b16 %v1146
        %v1179 = vunpack.c.l.b16 %v1147
        %v1180 = vunpack.c.l.b16 %v1148
        %v1181 = vunpack.c.l.b16 %v1149
        %v1182 = vunpack.c.l.b16 %v1150
        %v1183 = vunpack.c.l.b16 %v1151
        %v1184 = vunpack.c.l.b16 %v1152
        %v1185 = vunpack.c.l.b16 %v1153
        %v1186 = vunpack.c.l.b16 %v1154
        %v1187 = vunpack.c.l.b16 %v1155
        %v1188 = vunpack.c.l.b16 %v1156
        %v1189 = vunpack.c.l.b16 %v1157
        %v1190 = vpack.c.b16 %v1175, %v1174
        %v1191 = vpack.c.b16 %v1177, %v1176
        %v1192 = vpack.c.b16 %v1179, %v1178
        %v1193 = vpack.c.b16 %v1181, %v1180
        %v1194 = vpack.c.b16 %v1183, %v1182
        %v1195 = vpack.c.b16 %v1185, %v1184
        %v1196 = vpack.c.b16 %v1187, %v1186
        %v1197 = vpack.c.b16 %v1189, %v1188
        %1206 = vmatprep.subr.bf16.mxu0 0
        %1207 = vmatpush1.bf16.msra.mxu0 %v1197
        %1208 = vmatprep.subr.bf16.mxu0 0
        %1209 = vmatpush1.bf16.msra.mxu0 %v1196
        %1210 = vmatprep.subr.bf16.mxu0 0
        %1211 = vmatpush1.bf16.msra.mxu0 %v1195
        %1212 = vmatprep.subr.bf16.mxu0 0
        %1213 = vmatpush1.bf16.msra.mxu0 %v1194
        %1214 = vmatprep.subr.bf16.mxu0 0
        %1215 = vmatpush1.bf16.msra.mxu0 %v1193
        %1216 = vmatprep.subr.bf16.mxu0 0
        %1217 = vmatpush1.bf16.msra.mxu0 %v1192
        %1218 = vmatprep.subr.bf16.mxu0 0
        %1219 = vmatpush1.bf16.msra.mxu0 %v1191
        %1220 = vmatprep.subr.bf16.mxu0 0
        %1221 = vmatpush1.bf16.msra.mxu0 %v1190
        %1222 = vmatprep.subr.bf16.mxu0 0
        %1223 = vmatpush2.bf16.msra.mxu0 0
        %1224 = vmatprep.subr.bf16.mxu0 0
        %1225 = vmatpush2.bf16.msra.mxu0 0
        %1226 = vmatprep.subr.bf16.mxu0 0
        %1227 = vmatpush2.bf16.msra.mxu0 0
        %1228 = vmatprep.subr.bf16.mxu0 0
        %1229 = vmatpush2.bf16.msra.mxu0 0
        %1230 = vmatprep.subr.bf16.mxu0 0
        %1231 = vmatpush2.bf16.msra.mxu0 0
        %1232 = vmatprep.subr.bf16.mxu0 0
        %1233 = vmatpush2.bf16.msra.mxu0 0
        %1234 = vmatprep.subr.bf16.mxu0 0
        %1235 = vmatpush2.bf16.msra.mxu0 0
        %1236 = vmatprep.subr.bf16.mxu0 0
        %1237 = vmatpush2.bf16.msra.mxu0 0
        %1238 = vmatprep.mubr.bf16.mxu0 0
        %1239 = vmatmul.mubr.bf16.gmra.mxu0 %v1140
        %v1240 = vpop.f32.mrf.mxu0
        %v1241 = vadd.f32 0.0, %v1240
        %v1242 = vpop.f32.mrf.mxu0
        %v1243 = vpop.f32.mrf.mxu0
        %v1244 = vadd.f32 0.0, %v1243
        %v1245 = vpop.f32.mrf.mxu0
        %1246 = vdwg.mxu0
        %v1247 = vadd.f32 %v1136, %v1241
        %v1248 = vadd.f32 %v1137, %v1244
        %v1249 = vld [vmem:[%s1026 + $0x2] sm:$0xff]
        %v1250 = vld [vmem:[%s1026 + $0xa] sm:$0xff]
        %v1251 = vpack.c.bf16 %v1250, %v1249
        %s1252 = scalar_lea.vmem %s1, 512
        %v1253 = vld [vmem:[%s1252] sm:$0xf]
        %v1254 = vld [vmem:[%s1252 + $0x4] sm:$0xf]
        %v1255 = vld [vmem:[%s1252 + $0x8] sm:$0xf]
        %v1256 = vld [vmem:[%s1252 + $0xc] sm:$0xf]
        %v1257 = vld [vmem:[%s1252 + $0x10] sm:$0xf]
        %v1258 = vld [vmem:[%s1252 + $0x14] sm:$0xf]
        %v1259 = vld [vmem:[%s1252 + $0x18] sm:$0xf]
        %v1260 = vld [vmem:[%s1252 + $0x1c] sm:$0xf]
        %v1261 = vld [vmem:[%s1252 + $0x20] sm:$0xf]
        %v1262 = vld [vmem:[%s1252 + $0x24] sm:$0xf]
        %v1263 = vld [vmem:[%s1252 + $0x28] sm:$0xf]
        %v1264 = vld [vmem:[%s1252 + $0x2c] sm:$0xf]
        %v1265 = vld [vmem:[%s1252 + $0x30] sm:$0xf]
        %v1266 = vld [vmem:[%s1252 + $0x34] sm:$0xf]
        %v1267 = vld [vmem:[%s1252 + $0x38] sm:$0xf]
        %v1268 = vld [vmem:[%s1252 + $0x3c] sm:$0xf]
        %v1285 = vunpack.c.l.b16 %v1253
        %v1286 = vunpack.c.l.b16 %v1254
        %v1287 = vunpack.c.l.b16 %v1255
        %v1288 = vunpack.c.l.b16 %v1256
        %v1289 = vunpack.c.l.b16 %v1257
        %v1290 = vunpack.c.l.b16 %v1258
        %v1291 = vunpack.c.l.b16 %v1259
        %v1292 = vunpack.c.l.b16 %v1260
        %v1293 = vunpack.c.l.b16 %v1261
        %v1294 = vunpack.c.l.b16 %v1262
        %v1295 = vunpack.c.l.b16 %v1263
        %v1296 = vunpack.c.l.b16 %v1264
        %v1297 = vunpack.c.l.b16 %v1265
        %v1298 = vunpack.c.l.b16 %v1266
        %v1299 = vunpack.c.l.b16 %v1267
        %v1300 = vunpack.c.l.b16 %v1268
        %v1301 = vpack.c.b16 %v1286, %v1285
        %v1302 = vpack.c.b16 %v1288, %v1287
        %v1303 = vpack.c.b16 %v1290, %v1289
        %v1304 = vpack.c.b16 %v1292, %v1291
        %v1305 = vpack.c.b16 %v1294, %v1293
        %v1306 = vpack.c.b16 %v1296, %v1295
        %v1307 = vpack.c.b16 %v1298, %v1297
        %v1308 = vpack.c.b16 %v1300, %v1299
        %1317 = vmatprep.subr.bf16.mxu0 0
        %1318 = vmatpush1.bf16.msra.mxu0 %v1308
        %1319 = vmatprep.subr.bf16.mxu0 0
        %1320 = vmatpush1.bf16.msra.mxu0 %v1307
        %1321 = vmatprep.subr.bf16.mxu0 0
        %1322 = vmatpush1.bf16.msra.mxu0 %v1306
        %1323 = vmatprep.subr.bf16.mxu0 0
        %1324 = vmatpush1.bf16.msra.mxu0 %v1305
        %1325 = vmatprep.subr.bf16.mxu0 0
        %1326 = vmatpush1.bf16.msra.mxu0 %v1304
        %1327 = vmatprep.subr.bf16.mxu0 0
        %1328 = vmatpush1.bf16.msra.mxu0 %v1303
        %1329 = vmatprep.subr.bf16.mxu0 0
        %1330 = vmatpush1.bf16.msra.mxu0 %v1302
        %1331 = vmatprep.subr.bf16.mxu0 0
        %1332 = vmatpush1.bf16.msra.mxu0 %v1301
        %1333 = vmatprep.subr.bf16.mxu0 0
        %1334 = vmatpush2.bf16.msra.mxu0 0
        %1335 = vmatprep.subr.bf16.mxu0 0
        %1336 = vmatpush2.bf16.msra.mxu0 0
        %1337 = vmatprep.subr.bf16.mxu0 0
        %1338 = vmatpush2.bf16.msra.mxu0 0
        %1339 = vmatprep.subr.bf16.mxu0 0
        %1340 = vmatpush2.bf16.msra.mxu0 0
        %1341 = vmatprep.subr.bf16.mxu0 0
        %1342 = vmatpush2.bf16.msra.mxu0 0
        %1343 = vmatprep.subr.bf16.mxu0 0
        %1344 = vmatpush2.bf16.msra.mxu0 0
        %1345 = vmatprep.subr.bf16.mxu0 0
        %1346 = vmatpush2.bf16.msra.mxu0 0
        %1347 = vmatprep.subr.bf16.mxu0 0
        %1348 = vmatpush2.bf16.msra.mxu0 0
        %1349 = vmatprep.mubr.bf16.mxu0 0
        %1350 = vmatmul.mubr.bf16.gmra.mxu0 %v1251
        %v1351 = vpop.f32.mrf.mxu0
        %v1352 = vadd.f32 0.0, %v1351
        %v1353 = vpop.f32.mrf.mxu0
        %v1354 = vpop.f32.mrf.mxu0
        %v1355 = vadd.f32 0.0, %v1354
        %v1356 = vpop.f32.mrf.mxu0
        %1357 = vdwg.mxu0
        %v1358 = vadd.f32 %v1247, %v1352
        %v1359 = vadd.f32 %v1248, %v1355
        %s1360 = smul.u32 %s351, 16
        %s1361 = scalar_lea.vmem %s291, %s1360
        %1362 = vst [vmem:[%s1361] sm:$0xff] %v1358
        %1363 = vst [vmem:[%s1361 + $0x8] sm:$0xff] %v1359
        %v1364 = vadd.f32 %v1358, %v1359
        %v1365 = vrot.slane %v1364, 4
        %v1366 = vadd.f32 %v1364, %v1365
        %v1367 = vrot.slane %v1366, 2
        %v1368 = vadd.f32 %v1366, %v1367
        %v1369 = vrot.slane %v1368, 1
        %v1370 = vadd.f32 %v1368, %v1369
        %v1371 = vadd.f32 %v356, %v1370
        %v1372 = vmul.f32 %v1358, %v1358
        %v1373 = vmul.f32 %v1359, %v1359
        %v1374 = vadd.f32 %v1372, %v1373
        %v1375 = vrot.slane %v1374, 4
        %v1376 = vadd.f32 %v1374, %v1375
        %v1377 = vrot.slane %v1376, 2
        %v1378 = vadd.f32 %v1376, %v1377
        %v1379 = vrot.slane %v1378, 1
        %v1380 = vadd.f32 %v1378, %v1379
        %v1381 = vadd.f32 %v357, %v1380
      $region52: #{convblock_forward.4} parent=39 // loop_footer
        %s355 = sadd.s32 1, %s351
      $region53: #{convblock_forward.4} parent=39 // loop_footer_branch
        %350 = sbr.rel target = $region49
      $region54: #{convblock_forward.4} parent=39 // loop_exit
        _
      %1382 = vst [vmem:[%s294] sm:$0x1] %v356
      %1383 = vst [vmem:[%s297] sm:$0x1] %v357
      %p1384 = scmp.lt.s32.totalorder %s21, 1
      %s1385 = scalar_select %p1384, %s21, 1
      %s1386 = smul.addr %s1385, 32
      %s1387 = smul.addr %s1386, 8
      %s1388 = scalar_lea.vmem %s5, %s1387
      %p1389 = scmp.lt.s32.totalorder %s21, 1
      %s1390 = scalar_select %p1389, %s21, 1
      %s1391 = scalar_lea.vmem %s6, %s1390
      %p1392 = scmp.lt.s32.totalorder %s21, 1
      %s1393 = scalar_select %p1392, %s21, 1
      %s1394 = scalar_lea.vmem %s7, %s1393
      // Predicated region
      $region55: #{convblock_forward.4} parent=39 // pred_check
        %p1395 = pneg %p149
      $region56: #{convblock_forward.4} parent=39 // pred_check_branch
        %1397 = sbr.rel (%p1395) target = $region58
      $region57: #{convblock_forward.4} parent=39 // pred_region
        _
      $region58: #{convblock_forward.4} parent=39 // pred_fallthru
        _
      // Predicated region
      $region59: #{convblock_forward.4} parent=39 // pred_check
        %p1398 = pneg %p175
      $region60: #{convblock_forward.4} parent=39 // pred_check_branch
        %1400 = sbr.rel (%p1398) target = $region62
      $region61: #{convblock_forward.4} parent=39 // pred_region
        _
      $region62: #{convblock_forward.4} parent=39 // pred_fallthru
        _
      // Predicated region
      $region63: #{convblock_forward.4} parent=39 // pred_check
        %p1401 = pneg %p201
      $region64: #{convblock_forward.4} parent=39 // pred_check_branch
        %1403 = sbr.rel (%p1401) target = $region66
      $region65: #{convblock_forward.4} parent=39 // pred_region
        _
      $region66: #{convblock_forward.4} parent=39 // pred_fallthru
        _
    $region40: #{convblock_forward.4} parent=5 // pred_fallthru
      _
    %p1404 = scmp.le.s32.totalorder 2, %s16
    // Predicated region
    $region67: #{convblock_forward.4} parent=5 // pred_check
      %p1405 = pneg %p1404
    $region68: #{convblock_forward.4} parent=5 // pred_check_branch
      %1407 = sbr.rel (%p1405) target = $region70
    $region69: #{convblock_forward.4} parent=5 // pred_region
      %s1408 = ssub.s32 %s16, 2
      // Predicated region
      $region71: #{convblock_forward.4} parent=69 // pred_check
        %p1409 = pneg %p155
      $region72: #{convblock_forward.4} parent=69 // pred_check_branch
        %1411 = sbr.rel (%p1409) target = $region74
      $region73: #{convblock_forward.4} parent=69 // pred_region
        %p1412 = scmp.lt.s32.totalorder %s22, 1
        %s1413 = scalar_select %p1412, %s22, 1
        %s1414 = smul.addr %s1413, 32
        %s1415 = smul.addr %s1414, 8
        %s1416 = scalar_lea.vmem %s5, %s1415
      $region74: #{convblock_forward.4} parent=69 // pred_fallthru
        _
      // Predicated region
      $region75: #{convblock_forward.4} parent=69 // pred_check
        %p1417 = pneg %p181
      $region76: #{convblock_forward.4} parent=69 // pred_check_branch
        %1419 = sbr.rel (%p1417) target = $region78
      $region77: #{convblock_forward.4} parent=69 // pred_region
        %p1420 = scmp.lt.s32.totalorder %s22, 1
        %s1421 = scalar_select %p1420, %s22, 1
        %s1422 = scalar_lea.vmem %s6, %s1421
      $region78: #{convblock_forward.4} parent=69 // pred_fallthru
        _
      // Predicated region
      $region79: #{convblock_forward.4} parent=69 // pred_check
        %p1423 = pneg %p207
      $region80: #{convblock_forward.4} parent=69 // pred_check_branch
        %1425 = sbr.rel (%p1423) target = $region82
      $region81: #{convblock_forward.4} parent=69 // pred_region
        %p1426 = scmp.lt.s32.totalorder %s22, 1
        %s1427 = scalar_select %p1426, %s22, 1
        %s1428 = scalar_lea.vmem %s7, %s1427
      $region82: #{convblock_forward.4} parent=69 // pred_fallthru
        _
    $region70: #{convblock_forward.4} parent=5 // pred_fallthru
      _
  $region6: #{convblock_forward.4} parent=0 // loop_footer
    %s20 = sadd.s32 1, %s16
  $region7: #{convblock_forward.4} parent=0 // loop_footer_branch
    %15 = sbr.rel target = $region3
  $region8: #{convblock_forward.4} parent=0 // loop_exit
    _

// kernel: convblock_forward.5
$region0: #{convblock_forward.5}
  #allocation0 [shape = 'u32[]', space=smem, size = 0x4, offset = 0x4, fixed_abs, tag = 'smem constant byte address 0x4 - core index']
  #allocation1 [shape = 'u32[144,128]{1,0:T(1,128)}', space=vmem, size = 0x12000, scoped, tag = 'internal scratch']
  #allocation2 [shape = 'f32[1,1]{1,0:T(1,128)S(1)}', space=vmem, size = 0x200, scoped, tag = 'scoped memory for convblock_forward.5']
  %s0 = inlined_call_operand.vmem [shape: f32[2,16,16,128], index: 0, kind: input, shape index: {}]
  %s1 = inlined_call_operand.vmem [shape: f32[1,128], index: 1, kind: input, shape index: {}]
  %s2 = inlined_call_operand.vmem [shape: f32[1,128], index: 2, kind: input, shape index: {}]
  %s3 = inlined_call_operand.<no memory space> [shape: f32[1,1], index: 3, kind: input, shape index: {}]
  %s4 = inlined_call_operand.vmem [shape: f32[2,16,16,128], index: 4, kind: output, shape index: {}]
  %s5 = sld [smem:[#allocation0]]
  $region56: #{convblock_forward.5} parent=0
    _
  %s7 = ssub.s32 1, %s5
  %s8 = scalar_select 0, %s7, %s5
  %v9 = vstv %s3
  %10 = vst [vmem:[#allocation2] sm:$0x1] %v9
  loop: start=0, step=1, limit=4
  $region2: #{convblock_forward.5} parent=0 // loop_pre_header
    _
  $region3: #{convblock_forward.5} parent=0 // loop_header
    %s12 = sphi 0, %s16
    %p13 = scmp.ge.s32.totalorder %s12, 4
    %s22 = sphi 0, %s24
    %s25 = sphi 0, %s22
    %s26 = sphi 0, %s25
    %s42 = sphi 0, %s26
    %s46 = sphi 0, %s46
    %s48 = sphi 0, %s46
    %s49 = sphi 0, %s48
    %s63 = sphi 0, %s49
    %s67 = sphi 0, %s67
    %s69 = sphi 0, %s67
    %s70 = sphi 0, %s69
    %s84 = sphi 0, %s70
    %s88 = sphi 0, %s88
    %s90 = sphi 0, %s88
    %s91 = sphi 0, %s90
    %s105 = sphi 0, %s91
    %s111 = sphi 0, %s113
    %s114 = sphi 0, %s111
    %s115 = sphi 0, %s114
    %s131 = sphi 0, %s115
  $region4: #{convblock_forward.5} parent=0 // loop_header_branch
    %15 = sbr.rel (%p13) target = $region8
  $region5: #{convblock_forward.5} parent=0 // loop_body
    %s17 = ssub.s32 %s12, 1
    %s18 = ssub.s32 %s12, 2
    %s19 = sadd.s32 %s12, 1
    %s20 = ssub.s32 %s12, %s19
    %p21 = scmp.eq.s32.totalorder %s20, 0
    %s23 = sadd.s32 %s22, 1
    %s24 = scalar_select %p21, %s22, %s23
    %p27 = pneg %p21
    %p28 = scmp.eq.s32.totalorder %s12, 1
    %p29 = por %p27, %p28
    %p30 = scmp.ne.s32.totalorder %s22, %s25
    %p31 = scmp.eq.s32.totalorder %s12, 0
    %p32 = por %p30, %p31
    %p33 = scmp.ne.s32.totalorder %s22, %s25
    %p34 = scmp.eq.s32.totalorder %s17, 1
    %p35 = por %p33, %p34
    %p36 = scmp.ne.s32.totalorder %s25, %s26
    %p37 = scmp.eq.s32.totalorder %s17, 0
    %p38 = por %p36, %p37
    %p39 = scmp.ne.s32.totalorder %s25, %s26
    %p40 = scmp.eq.s32.totalorder %s18, 1
    %p41 = por %p39, %p40
    %p43 = scmp.ne.s32.totalorder %s26, %s42
    %p44 = scmp.eq.s32.totalorder %s18, 0
    %p45 = por %p43, %p44
    %s47 = sadd.s32 %s46, 1
    %p50 = scmp.eq.s32.totalorder %s12, 1
    %p51 = scmp.ne.s32.totalorder %s46, %s48
    %p52 = scmp.eq.s32.totalorder %s12, 0
    %p53 = por %p51, %p52
    %p54 = scmp.ne.s32.totalorder %s46, %s48
    %p55 = scmp.eq.s32.totalorder %s17, 1
    %p56 = por %p54, %p55
    %p57 = scmp.ne.s32.totalorder %s48, %s49
    %p58 = scmp.eq.s32.totalorder %s17, 0
    %p59 = por %p57, %p58
    %p60 = scmp.ne.s32.totalorder %s48, %s49
    %p61 = scmp.eq.s32.totalorder %s18, 1
    %p62 = por %p60, %p61
    %p64 = scmp.ne.s32.totalorder %s49, %s63
    %p65 = scmp.eq.s32.totalorder %s18, 0
    %p66 = por %p64, %p65
    %s68 = sadd.s32 %s67, 1
    %p71 = scmp.eq.s32.totalorder %s12, 1
    %p72 = scmp.ne.s32.totalorder %s67, %s69
    %p73 = scmp.eq.s32.totalorder %s12, 0
    %p74 = por %p72, %p73
    %p75 = scmp.ne.s32.totalorder %s67, %s69
    %p76 = scmp.eq.s32.totalorder %s17, 1
    %p77 = por %p75, %p76
    %p78 = scmp.ne.s32.totalorder %s69, %s70
    %p79 = scmp.eq.s32.totalorder %s17, 0
    %p80 = por %p78, %p79
    %p81 = scmp.ne.s32.totalorder %s69, %s70
    %p82 = scmp.eq.s32.totalorder %s18, 1
    %p83 = por %p81, %p82
    %p85 = scmp.ne.s32.totalorder %s70, %s84
    %p86 = scmp.eq.s32.totalorder %s18, 0
    %p87 = por %p85, %p86
    %s89 = sadd.s32 %s88, 1
    %p92 = scmp.eq.s32.totalorder %s12, 1
    %p93 = scmp.ne.s32.totalorder %s88, %s90
    %p94 = scmp.eq.s32.totalorder %s12, 0
    %p95 = por %p93, %p94
    %p96 = scmp.ne.s32.totalorder %s88, %s90
    %p97 = scmp.eq.s32.totalorder %s17, 1
    %p98 = por %p96, %p97
    %p99 = scmp.ne.s32.totalorder %s90, %s91
    %p100 = scmp.eq.s32.totalorder %s17, 0
    %p101 = por %p99, %p100
    %p102 = scmp.ne.s32.totalorder %s90, %s91
    %p103 = scmp.eq.s32.totalorder %s18, 1
    %p104 = por %p102, %p103
    %p106 = scmp.ne.s32.totalorder %s91, %s105
    %p107 = scmp.eq.s32.totalorder %s18, 0
    %p108 = por %p106, %p107
    %s109 = ssub.s32 %s12, %s19
    %p110 = scmp.eq.s32.totalorder %s109, 0
    %s112 = sadd.s32 %s111, 1
    %s113 = scalar_select %p110, %s111, %s112
    %p116 = pneg %p110
    %p117 = scmp.eq.s32.totalorder %s12, 1
    %p118 = por %p116, %p117
    %p119 = scmp.ne.s32.totalorder %s111, %s114
    %p120 = scmp.eq.s32.totalorder %s12, 0
    %p121 = por %p119, %p120
    %p122 = scmp.ne.s32.totalorder %s111, %s114
    %p123 = scmp.eq.s32.totalorder %s17, 1
    %p124 = por %p122, %p123
    %p125 = scmp.ne.s32.totalorder %s114, %s115
    %p126 = scmp.eq.s32.totalorder %s17, 0
    %p127 = por %p125, %p126
    %p128 = scmp.ne.s32.totalorder %s114, %s115
    %p129 = scmp.eq.s32.totalorder %s18, 1
    %p130 = por %p128, %p129
    %p132 = scmp.ne.s32.totalorder %s115, %s131
    %p133 = scmp.eq.s32.totalorder %s18, 0
    %p134 = por %p132, %p133
    %p135 = scmp.le.s32.totalorder 1, %s12
    %p136 = scmp.lt.s32.totalorder %s12, 3
    %p137 = pnand %p135, %p136
    %p138 = pneg %p137
    // Predicated region
    $region9: #{convblock_forward.5} parent=5 // pred_check
      _
    $region10: #{convblock_forward.5} parent=5 // pred_check_branch
      %140 = sbr.rel (%p137) target = $region12
    $region11: #{convblock_forward.5} parent=5 // pred_region
      %s141 = ssub.s32 %s12, 1
      // Predicated region
      $region13: #{convblock_forward.5} parent=11 // pred_check
        %p142 = pneg %p59
      $region14: #{convblock_forward.5} parent=11 // pred_check_branch
        %144 = sbr.rel (%p142) target = $region16
      $region15: #{convblock_forward.5} parent=11 // pred_region
        _
      $region16: #{convblock_forward.5} parent=11 // pred_fallthru
        _
      // Predicated region
      $region17: #{convblock_forward.5} parent=11 // pred_check
        %p145 = pneg %p80
      $region18: #{convblock_forward.5} parent=11 // pred_check_branch
        %147 = sbr.rel (%p145) target = $region20
      $region19: #{convblock_forward.5} parent=11 // pred_region
        _
      $region20: #{convblock_forward.5} parent=11 // pred_fallthru
        _
      // Predicated region
      $region21: #{convblock_forward.5} parent=11 // pred_check
        %p148 = pneg %p101
      $region22: #{convblock_forward.5} parent=11 // pred_check_branch
        %150 = sbr.rel (%p148) target = $region24
      $region23: #{convblock_forward.5} parent=11 // pred_region
        _
      $region24: #{convblock_forward.5} parent=11 // pred_fallthru
        _
    $region12: #{convblock_forward.5} parent=5 // pred_fallthru
      _
    %p151 = scmp.lt.s32.totalorder %s12, 2
    // Predicated region
    $region25: #{convblock_forward.5} parent=5 // pred_check
      %p152 = pneg %p151
    $region26: #{convblock_forward.5} parent=5 // pred_check_branch
      %154 = sbr.rel (%p152) target = $region28
    $region27: #{convblock_forward.5} parent=5 // pred_region
      // Predicated region
      $region29: #{convblock_forward.5} parent=27 // pred_check
        %p155 = pneg %p32
      $region30: #{convblock_forward.5} parent=27 // pred_check_branch
        %157 = sbr.rel (%p155) target = $region32
      $region31: #{convblock_forward.5} parent=27 // pred_region
        %p158 = scmp.lt.s32.totalorder %s12, 1
        %s159 = scalar_select %p158, %s12, 1
        %s160 = smul.addr %s159, 32
        %s161 = smul.addr %s160, 8
        %s162 = scalar_lea.vmem %s0, %s161
      $region32: #{convblock_forward.5} parent=27 // pred_fallthru
        _
    $region28: #{convblock_forward.5} parent=5 // pred_fallthru
      _
    %p163 = scmp.le.s32.totalorder 1, %s12
    %p164 = scmp.lt.s32.totalorder %s12, 3
    %p165 = pnand %p163, %p164
    %p166 = pneg %p165
    // Predicated region
    $region33: #{convblock_forward.5} parent=5 // pred_check
      _
    $region34: #{convblock_forward.5} parent=5 // pred_check_branch
      %168 = sbr.rel (%p165) target = $region36
    $region35: #{convblock_forward.5} parent=5 // pred_region
      %s169 = ssub.s32 %s12, 1
      %p170 = scmp.lt.s32.totalorder %s17, 1
      %s171 = scalar_select %p170, %s17, 1
      %s172 = smul.addr %s171, 32
      %s173 = smul.addr %s172, 8
      %s174 = scalar_lea.vmem %s0, %s173
      %p175 = pneg %p38
      %p176 = pneg %p35
      %p177 = pneg %p59
      %p178 = pneg %p56
      %p179 = pneg %p80
      %p180 = pneg %p77
      %p181 = pneg %p101
      %p182 = pneg %p98
      %p183 = pneg %p127
      %p184 = pneg %p124
      %p185 = scmp.lt.s32.totalorder %s17, 1
      %s186 = scalar_select %p185, %s17, 1
      %s187 = smul.addr %s186, 32
      %s188 = smul.addr %s187, 8
      %s189 = scalar_lea.vmem %s4, %s188
      %p190 = scmp.lt.s32.totalorder %s17, 1
      %s191 = scalar_select %p190, %s17, 1
      %s192 = smul.addr %s191, 32
      %s193 = smul.addr %s192, 8
      %s194 = scalar_lea.vmem %s0, %s193
      %p195 = scmp.lt.s32.totalorder %s17, 1
      %s196 = scalar_select %p195, %s17, 1
      %s197 = smul.addr %s196, 32
      %s198 = smul.addr %s197, 8
      %s199 = scalar_lea.vmem %s4, %s198
      %v200 = vld [vmem:[%s1] sm:$0x1]
      %v201 = vld [vmem:[%s2] sm:$0x1]
      %v202 = vld [vmem:[#allocation2] sm:$0x1]
      %s203 = vtos %v202
      loop: start=0, step=1, limit=16
      $region37: #{convblock_forward.5} parent=35 // loop_pre_header
        _
      $region38: #{convblock_forward.5} parent=35 // loop_header
        %s205 = sphi 0, %s209
        %p206 = scmp.ge.s32.totalorder %s205, 16
      $region39: #{convblock_forward.5} parent=35 // loop_header_branch
        %208 = sbr.rel (%p206) target = $region43
      $region40: #{convblock_forward.5} parent=35 // loop_body
        %s210 = smul.u32 %s205, 16
        %s211 = scalar_lea.vmem %s194, %s210
        %v212 = vld [vmem:[%s211] sm:$0xff]
        %v213 = vld [vmem:[%s211 + $0x8] sm:$0xff]
        %v215 = vlaneseq
        %v216 = vshrl.u32 %v215, 7
        %v217 = vsub.s32 0, %v216
        %v218 = vrot.slane %v200, %v217
        %v220 = vmul.f32 %v212, %v218
        %v221 = vmul.f32 %v213, %v218
        %v223 = vlaneseq
        %v224 = vshrl.u32 %v223, 7
        %v225 = vsub.s32 0, %v224
        %v226 = vrot.slane %v201, %v225
        %v228 = vadd.f32 %v220, %v226
        %v229 = vadd.f32 %v221, %v226
        %vm230 = vcmp.ge.f32.partialorder %v228, 0.0
        %vm231 = vcmp.ge.f32.partialorder %v229, 0.0
        %v232 = vstv %s203
        %v233 = vmul.f32 %v232, %v228
        %v234 = vmul.f32 %v232, %v229
        %v235 = vsel %vm230, %v228, %v233
        %v236 = vsel %vm231, %v229, %v234
        %s237 = scalar_lea.vmem %s199, %s210
        %238 = vst [vmem:[%s237] sm:$0xff] %v235
        %239 = vst [vmem:[%s237 + $0x8] sm:$0xff] %v236
      $region41: #{convblock_forward.5} parent=35 // loop_footer
        %s209 = sadd.s32 1, %s205
      $region42: #{convblock_forward.5} parent=35 // loop_footer_branch
        %204 = sbr.rel target = $region38
      $region43: #{convblock_forward.5} parent=35 // loop_exit
        _
      %p240 = scmp.lt.s32.totalorder %s17, 1
      %s241 = scalar_select %p240, %s17, 1
      %s242 = smul.addr %s241, 32
      %s243 = smul.addr %s242, 8
      %s244 = scalar_lea.vmem %s4, %s243
      // Predicated region
      $region44: #{convblock_forward.5} parent=35 // pred_check
        %p245 = pneg %p124
      $region45: #{convblock_forward.5} parent=35 // pred_check_branch
        %247 = sbr.rel (%p245) target = $region47
      $region46: #{convblock_forward.5} parent=35 // pred_region
        _
      $region47: #{convblock_forward.5} parent=35 // pred_fallthru
        _
    $region36: #{convblock_forward.5} parent=5 // pred_fallthru
      _
    %p248 = scmp.le.s32.totalorder 2, %s12
    // Predicated region
    $region48: #{convblock_forward.5} parent=5 // pred_check
      %p249 = pneg %p248
    $region49: #{convblock_forward.5} parent=5 // pred_check_branch
      %251 = sbr.rel (%p249) target = $region51
    $region50: #{convblock_forward.5} parent=5 // pred_region
      %s252 = ssub.s32 %s12, 2
      // Predicated region
      $region52: #{convblock_forward.5} parent=50 // pred_check
        %p253 = pneg %p130
      $region53: #{convblock_forward.5} parent=50 // pred_check_branch
        %255 = sbr.rel (%p253) target = $region55
      $region54: #{convblock_forward.5} parent=50 // pred_region
        %p256 = scmp.lt.s32.totalorder %s18, 1
        %s257 = scalar_select %p256, %s18, 1
        %s258 = smul.addr %s257, 32
        %s259 = smul.addr %s258, 8
        %s260 = scalar_lea.vmem %s4, %s259
      $region55: #{convblock_forward.5} parent=50 // pred_fallthru
        _
    $region51: #{convblock_forward.5} parent=5 // pred_fallthru
      _
  $region6: #{convblock_forward.5} parent=0 // loop_footer
    %s16 = sadd.s32 1, %s12
  $region7: #{convblock_forward.5} parent=0 // loop_footer_branch
    %11 = sbr.rel target = $region3
  $region8: #{convblock_forward.5} parent=0 // loop_exit
    _

</llo_original>
